<compile_context>
chip_gen: v7x
topology: tpu7x:2x2x1
jax: 0.10.0
libtpu: 0.0.40
codegen_flags: <defaults>
</compile_context>

<pallas_src>
import jax
import jax.numpy as jnp
import numpy as np
from jax import lax
from jax.experimental import pallas as pl
from jax.experimental.pallas import tpu as pltpu


def _round_up(v, m):
    return ((v + m - 1) // m) * m


def _resident_spec(shape, index_map):
    """BlockSpec for operands whose block is identical at every grid step.

    Single-buffered (pl.Buffered(1)) so the pipeline does not allocate a dead
    second VMEM copy; falls back to a plain (double-buffered) spec if this JAX
    version's BlockSpec has no `pipeline_mode`.
    """
    try:
        return pl.BlockSpec(shape, index_map,
                            pipeline_mode=pl.Buffered(buffer_count=1))
    except (TypeError, AttributeError):
        return pl.BlockSpec(shape, index_map)


def _vmem_limit_bytes(fraction=0.6):
    # ~60% of physical VMEM: 38 MiB on v7x (64 MiB), ~77 MiB on v5e/v6e (128 MiB).
    try:
        cap = pltpu.get_tpu_info().vmem_capacity_bytes
    except Exception:
        cap = 128 * 1024 * 1024
    return max(int(cap * fraction), 32 * 1024 * 1024)


def _conv3x3(a, w_ref, b_ref, left_edge, right_edge, H, W):
    """3x3 'same' conv + bias on a flat (H*W, C) slab with an implicit zero halo.

    a          : (H*W, Cin)   activations in compute dtype.
    w_ref      : (3, 3*Cin, Cout) weights, ky-major, (kx, ci) merged on K.
    b_ref      : (1, Cout)    f32 bias.
    left_edge  : (H*W, 1)     bool, True where column j == 0.
    right_edge : (H*W, 1)     bool, True where column j == W-1.
    Returns (H*W, Cout) f32.
    """
    HW, Cin = a.shape

    # Column (W-axis) taps built in-register; lane-aligned concat along K so
    # the dx accumulation runs in the MXU's systolic K instead of on the VPU.
    zrow = jnp.zeros((1, Cin), a.dtype)
    aL = jnp.concatenate([zrow, a[:-1]], axis=0)          # a[r-1]  (kx = 0)
    aR = jnp.concatenate([a[1:], zrow], axis=0)           # a[r+1]  (kx = 2)
    aL = jnp.where(left_edge, jnp.zeros_like(aL), aL)
    aR = jnp.where(right_edge, jnp.zeros_like(aR), aR)
    a_cat = jnp.concatenate([aL, a, aR], axis=1)          # (HW, 3*Cin)

    # One K=3*Cin dot per kernel row ky (f32 accumulation).
    p0 = jnp.dot(a_cat, w_ref[0], preferred_element_type=jnp.float32)  # ky=0
    p1 = jnp.dot(a_cat, w_ref[1], preferred_element_type=jnp.float32)  # ky=1
    p2 = jnp.dot(a_cat, w_ref[2], preferred_element_type=jnp.float32)  # ky=2

    # Row (H-axis) shifts become value-level shifted adds -> single result,
    # no read-modify-write passes over a VMEM accumulator.
    Cout = p1.shape[1]
    zW = jnp.zeros((W, Cout), jnp.float32)
    out = (p1
           + jnp.concatenate([zW, p0[:HW - W]], axis=0)   # row i gets ky=0 from row i-1
           + jnp.concatenate([p2[W:], zW], axis=0))       # row i gets ky=2 from row i+1
    return out + b_ref[...]


def _resblock_kernel(x_ref, w1_ref, b1_ref, w2_ref, b2_ref, o_ref):
    # x_ref/o_ref: (1, H, W, C)   w*: (3, 3*C, C)   b*: (1, C)
    H, W, C = o_ref.shape[1], o_ref.shape[2], o_ref.shape[3]
    HW = H * W
    x = x_ref[0].reshape(HW, C)   # layout-preserving flatten (W % 8 == 0, C % 128 == 0)

    # Column-edge masks: computed once, shared by both convs.
    col = lax.broadcasted_iota(jnp.int32, (HW, 1), 0) % W
    left_edge = col == 0
    right_edge = col == W - 1

    y = _conv3x3(x, w1_ref, b1_ref, left_edge, right_edge, H, W)      # conv1 + b1
    y = jnp.maximum(y, 0.0)                                           # ReLU (f32)
    y = _conv3x3(y.astype(x.dtype), w2_ref, b2_ref, left_edge, right_edge, H, W)

    out = x.astype(jnp.float32) + y                                   # residual add
    o_ref[0] = out.reshape(H, W, C).astype(o_ref.dtype)               # single store


def resblock_pallas_nhwc(x_nhwc, w1, b1, w2, b2, *,
                         compute_dtype=jnp.float32, out_dtype=None):
    """ResBlock forward on NHWC activations (preferred entry point).

    x_nhwc : (N, H, W, C);  w : (Cout, Cin, 3, 3) PyTorch OIHW;  b : (C,).
    compute_dtype=jnp.bfloat16 is recommended on all TPU generations (v5e
    included): the MXU is bf16-native and activation/weight DMA halves, while
    accumulation and the bias/ReLU/residual epilogue stay f32.  Note the skip
    connection then uses the bf16-rounded x; keep compute_dtype=float32 if the
    exact f32 residual is required.  out_dtype defaults to x.dtype; pass
    jnp.bfloat16 together with bf16 compute to halve output HBM writeback.
    """
    N, H, W, C = x_nhwc.shape
    assert W % 8 == 0, "W must be a multiple of 8 (sublane-aligned flatten)"
    Cp = _round_up(C, 128)                 # lane-dense channels
    out_dtype = x_nhwc.dtype if out_dtype is None else out_dtype

    x = x_nhwc
    if Cp != C:
        x = jnp.pad(x, ((0, 0), (0, 0), (0, 0), (0, Cp - C)))
    x = x.astype(compute_dtype)

    def prep_w(w):
        # OIHW -> HWIO, pad channels, merge (kx, ci) -> K so that the kernel's
        # a_cat = [aL | a | aR] (kx-major, ci-minor) matches the K layout.
        wh = jnp.transpose(w, (2, 3, 1, 0))
        if Cp != C:
            wh = jnp.pad(wh, ((0, 0), (0, 0), (0, Cp - C), (0, Cp - C)))
        return wh.reshape(3, 3 * Cp, Cp).astype(compute_dtype)

    def prep_b(b):
        bb = b.reshape(1, C).astype(jnp.float32)
        return jnp.pad(bb, ((0, 0), (0, Cp - C))) if Cp != C else bb

    w1p, w2p = prep_w(w1), prep_w(w2)
    b1p, b2p = prep_b(b1), prep_b(b2)

    in_itemsize = jnp.dtype(compute_dtype).itemsize
    out_itemsize = jnp.dtype(out_dtype).itemsize
    flops = 2 * 2 * 9 * N * H * W * Cp * Cp
    bytes_accessed = (N * H * W * Cp * (in_itemsize + out_itemsize)   # act in + out
                      + 2 * 9 * Cp * Cp * in_itemsize                 # both weights
                      + 2 * Cp * 4)                                   # biases
    cost = pl.CostEstimate(flops=int(flops), transcendentals=0,
                           bytes_accessed=int(bytes_accessed))

    out = pl.pallas_call(
        _resblock_kernel,
        out_shape=jax.ShapeDtypeStruct((N, H, W, Cp), out_dtype),
        grid_spec=pltpu.PrefetchScalarGridSpec(
            num_scalar_prefetch=0,
            grid=(N,),
            in_specs=[
                pl.BlockSpec((1, H, W, Cp), lambda n: (n, 0, 0, 0)),
                _resident_spec((3, 3 * Cp, Cp), lambda n: (0, 0, 0)),
                _resident_spec((1, Cp), lambda n: (0, 0)),
                _resident_spec((3, 3 * Cp, Cp), lambda n: (0, 0, 0)),
                _resident_spec((1, Cp), lambda n: (0, 0)),
            ],
            out_specs=pl.BlockSpec((1, H, W, Cp), lambda n: (n, 0, 0, 0)),
        ),
        compiler_params=pltpu.CompilerParams(
            dimension_semantics=("parallel",),
            vmem_limit_bytes=_vmem_limit_bytes()),
        cost_estimate=cost,
    )(x, w1p, b1p, w2p, b2p)

    return out[..., :C] if Cp != C else out


def resblock_pallas(x_nchw, w1, b1, w2, b2, *,
                    compute_dtype=jnp.float32, out_dtype=None):
    """NCHW convenience wrapper matching the PyTorch module's layout.

    Prefer resblock_pallas_nhwc end-to-end in a real model: the two transposes
    here each re-stream the full activation tensor through HBM.
    """
    x_nhwc = jnp.transpose(x_nchw, (0, 2, 3, 1))
    y = resblock_pallas_nhwc(x_nhwc, w1, b1, w2, b2,
                             compute_dtype=compute_dtype, out_dtype=out_dtype)
    return jnp.transpose(y, (0, 3, 1, 2))


def _reference(x_nchw, w1, b1, w2, b2):
    """Pure-JAX reference: Conv2d(3x3, pad=1) -> ReLU -> Conv2d(3x3, pad=1) + x."""
    dn = ('NCHW', 'OIHW', 'NCHW')
    prec = lax.Precision.HIGHEST
    y = lax.conv_general_dilated(x_nchw, w1, (1, 1), [(1, 1), (1, 1)],
                                 dimension_numbers=dn, precision=prec)
    y = jnp.maximum(y + b1.reshape(1, -1, 1, 1), 0.0)
    y = lax.conv_general_dilated(y, w2, (1, 1), [(1, 1), (1, 1)],
                                 dimension_numbers=dn, precision=prec)
    return x_nchw + y + b2.reshape(1, -1, 1, 1)


if __name__ == "__main__":
    key = jax.random.PRNGKey(0)
    N, C, H, W = 2, 4, 16, 16
    k_x, k_w1, k_b1, k_w2, k_b2 = jax.random.split(key, 5)

    x = jax.random.normal(k_x, (N, C, H, W), dtype=jnp.float32)
    w1 = 0.1 * jax.random.normal(k_w1, (C, C, 3, 3), dtype=jnp.float32)
    b1 = 0.1 * jax.random.normal(k_b1, (C,), dtype=jnp.float32)
    w2 = 0.1 * jax.random.normal(k_w2, (C, C, 3, 3), dtype=jnp.float32)
    b2 = 0.1 * jax.random.normal(k_b2, (C,), dtype=jnp.float32)

    ref = _reference(x, w1, b1, w2, b2)

    # f32 compute path.  Tolerance allows for the MXU's multi-pass emulation of
    # f32 matmuls (the reference conv runs at HIGHEST precision).
    out = resblock_pallas(x, w1, b1, w2, b2)
    jax.block_until_ready(out)
    np.testing.assert_allclose(np.asarray(out), np.asarray(ref),
                               rtol=2e-2, atol=2e-2)

    # bf16 MXU inputs + bf16 output (f32 accumulation / epilogue inside).
    out_bf16 = resblock_pallas(x, w1, b1, w2, b2,
                               compute_dtype=jnp.bfloat16,
                               out_dtype=jnp.bfloat16)
    jax.block_until_ready(out_bf16)
    np.testing.assert_allclose(np.asarray(out_bf16.astype(jnp.float32)),
                               np.asarray(ref), rtol=5e-2, atol=5e-2)

    print("KERNEL_OK")
</pallas_src>

<mosaic_0001>
module attributes {stable_mosaic.version = 11 : i64} {
  func.func @_resblock_kernel(%arg0: i32, %arg1: memref<1x16x16x128xf32, #tpu.memory_space<vmem>>, %arg2: memref<3x384x128xf32, #tpu.memory_space<vmem>>, %arg3: memref<1x128xf32, #tpu.memory_space<vmem>>, %arg4: memref<3x384x128xf32, #tpu.memory_space<vmem>>, %arg5: memref<1x128xf32, #tpu.memory_space<vmem>>, %arg6: memref<1x16x16x128xf32, #tpu.memory_space<vmem>>) attributes {dimension_semantics = [#tpu.dimension_semantics<parallel>], iteration_bounds = array<i64: 2>, scalar_prefetch = 0 : i64, scratch_operands = 0 : i64, tpu.core_type = #tpu.core_type<tc>, window_params = [{transform_indices = @transform_0, window_bounds = array<i64: 1, 16, 16, 128>}, {pipeline_mode = #tpu.pipeline_mode<synchronous>, transform_indices = @transform_1, window_bounds = array<i64: 3, 384, 128>}, {pipeline_mode = #tpu.pipeline_mode<synchronous>, transform_indices = @transform_2, window_bounds = array<i64: 1, 128>}, {pipeline_mode = #tpu.pipeline_mode<synchronous>, transform_indices = @transform_3, window_bounds = array<i64: 3, 384, 128>}, {pipeline_mode = #tpu.pipeline_mode<synchronous>, transform_indices = @transform_4, window_bounds = array<i64: 1, 128>}, {transform_indices = @transform_5, window_bounds = array<i64: 1, 16, 16, 128>}]} {
    %c0 = arith.constant 0 : index
    %c0_0 = arith.constant 0 : index
    %c0_1 = arith.constant 0 : index
    %c0_2 = arith.constant 0 : index
    %0 = vector.load %arg1[%c0, %c0_0, %c0_1, %c0_2] : memref<1x16x16x128xf32, #tpu.memory_space<vmem>>, vector<1x16x16x128xf32>
    %1 = vector.shape_cast %0 : vector<1x16x16x128xf32> to vector<16x16x128xf32>
    %2 = vector.shape_cast %1 : vector<16x16x128xf32> to vector<256x128xf32>
    %3 = tpu.iota {dimensions = array<i32: 0>} : vector<256x1xi32>
    %c16_i32 = arith.constant 16 : i32
    %c0_i32 = arith.constant 0 : i32
    %4 = arith.cmpi eq, %c16_i32, %c0_i32 : i32
    %c1_i32 = arith.constant 1 : i32
    %5 = arith.select %4, %c1_i32, %c16_i32 : i32
    %6 = vector.broadcast %5 : i32 to vector<256x1xi32>
    %7 = arith.remsi %3, %6 : vector<256x1xi32>
    %c0_i32_3 = arith.constant 0 : i32
    %8 = vector.broadcast %c0_i32_3 : i32 to vector<256x1xi32>
    %9 = arith.cmpi ne, %7, %8 : vector<256x1xi32>
    %c0_i32_4 = arith.constant 0 : i32
    %10 = vector.broadcast %c0_i32_4 : i32 to vector<256x1xi32>
    %11 = arith.cmpi slt, %7, %10 : vector<256x1xi32>
    %c0_i32_5 = arith.constant 0 : i32
    %12 = arith.cmpi slt, %5, %c0_i32_5 : i32
    %13 = vector.broadcast %12 : i1 to vector<256x1xi1>
    %14 = vector.broadcast %13 : vector<256x1xi1> to vector<256x1xi1>
    %15 = arith.xori %11, %14 : vector<256x1xi1>
    %16 = arith.andi %15, %9 : vector<256x1xi1>
    %17 = vector.broadcast %5 : i32 to vector<256x1xi32>
    %18 = arith.addi %7, %17 : vector<256x1xi32>
    %19 = arith.select %16, %18, %7 : vector<256x1xi1>, vector<256x1xi32>
    %c0_i32_6 = arith.constant 0 : i32
    %20 = vector.broadcast %c0_i32_6 : i32 to vector<256x1xi32>
    %21 = arith.cmpi eq, %19, %20 : vector<256x1xi32>
    %c15_i32 = arith.constant 15 : i32
    %22 = vector.broadcast %c15_i32 : i32 to vector<256x1xi32>
    %23 = arith.cmpi eq, %19, %22 : vector<256x1xi32>
    %cst = arith.constant 0.000000e+00 : f32
    %24 = vector.broadcast %cst : f32 to vector<1x128xf32>
    %25 = vector.extract_strided_slice %2 {offsets = [0, 0], sizes = [255, 128], strides = [1, 1]} : vector<256x128xf32> to vector<255x128xf32>
    %26 = tpu.concatenate %24, %25 in 0 : vector<1x128xf32>, vector<255x128xf32> -> vector<256x128xf32>
    %27 = vector.extract_strided_slice %2 {offsets = [1, 0], sizes = [255, 128], strides = [1, 1]} : vector<256x128xf32> to vector<255x128xf32>
    %28 = tpu.concatenate %27, %24 in 0 : vector<255x128xf32>, vector<1x128xf32> -> vector<256x128xf32>
    %cst_7 = arith.constant 0.000000e+00 : f32
    %29 = vector.broadcast %cst_7 : f32 to vector<256x128xf32>
    %30 = vector.shape_cast %21 : vector<256x1xi1> to vector<256x1xi1>
    %31 = vector.broadcast %30 : vector<256x1xi1> to vector<256x128xi1>
    %32 = arith.select %31, %29, %26 : vector<256x128xi1>, vector<256x128xf32>
    %cst_8 = arith.constant 0.000000e+00 : f32
    %33 = vector.broadcast %cst_8 : f32 to vector<256x128xf32>
    %34 = vector.shape_cast %23 : vector<256x1xi1> to vector<256x1xi1>
    %35 = vector.broadcast %34 : vector<256x1xi1> to vector<256x128xi1>
    %36 = arith.select %35, %33, %28 : vector<256x128xi1>, vector<256x128xf32>
    %37 = tpu.concatenate %32, %2, %36 in 1 : vector<256x128xf32>, vector<256x128xf32>, vector<256x128xf32> -> vector<256x384xf32>
    %c0_9 = arith.constant 0 : index
    %c0_10 = arith.constant 0 : index
    %c0_11 = arith.constant 0 : index
    %38 = vector.load %arg2[%c0_9, %c0_10, %c0_11] : memref<3x384x128xf32, #tpu.memory_space<vmem>>, vector<1x384x128xf32>
    %39 = vector.shape_cast %38 : vector<1x384x128xf32> to vector<384x128xf32>
    %cst_12 = arith.constant dense<0.000000e+00> : vector<256x128xf32>
    %40 = tpu.matmul %37, %39, %cst_12 {dimension_numbers = #tpu.dot_dimension_numbers<[1], [0], [0], [1], [0, 0, 1, 1], [], []>} : vector<256x384xf32>, vector<384x128xf32>, vector<256x128xf32> -> vector<256x128xf32>
    %c1 = arith.constant 1 : index
    %c0_13 = arith.constant 0 : index
    %c0_14 = arith.constant 0 : index
    %41 = vector.load %arg2[%c1, %c0_13, %c0_14] : memref<3x384x128xf32, #tpu.memory_space<vmem>>, vector<1x384x128xf32>
    %42 = vector.shape_cast %41 : vector<1x384x128xf32> to vector<384x128xf32>
    %cst_15 = arith.constant dense<0.000000e+00> : vector<256x128xf32>
    %43 = tpu.matmul %37, %42, %cst_15 {dimension_numbers = #tpu.dot_dimension_numbers<[1], [0], [0], [1], [0, 0, 1, 1], [], []>} : vector<256x384xf32>, vector<384x128xf32>, vector<256x128xf32> -> vector<256x128xf32>
    %c2 = arith.constant 2 : index
    %c0_16 = arith.constant 0 : index
    %c0_17 = arith.constant 0 : index
    %44 = vector.load %arg2[%c2, %c0_16, %c0_17] : memref<3x384x128xf32, #tpu.memory_space<vmem>>, vector<1x384x128xf32>
    %45 = vector.shape_cast %44 : vector<1x384x128xf32> to vector<384x128xf32>
    %cst_18 = arith.constant dense<0.000000e+00> : vector<256x128xf32>
    %46 = tpu.matmul %37, %45, %cst_18 {dimension_numbers = #tpu.dot_dimension_numbers<[1], [0], [0], [1], [0, 0, 1, 1], [], []>} : vector<256x384xf32>, vector<384x128xf32>, vector<256x128xf32> -> vector<256x128xf32>
    %cst_19 = arith.constant 0.000000e+00 : f32
    %47 = vector.broadcast %cst_19 : f32 to vector<16x128xf32>
    %48 = vector.extract_strided_slice %40 {offsets = [0, 0], sizes = [240, 128], strides = [1, 1]} : vector<256x128xf32> to vector<240x128xf32>
    %49 = tpu.concatenate %47, %48 in 0 : vector<16x128xf32>, vector<240x128xf32> -> vector<256x128xf32>
    %50 = arith.addf %43, %49 : vector<256x128xf32>
    %51 = vector.extract_strided_slice %46 {offsets = [16, 0], sizes = [240, 128], strides = [1, 1]} : vector<256x128xf32> to vector<240x128xf32>
    %52 = tpu.concatenate %51, %47 in 0 : vector<240x128xf32>, vector<16x128xf32> -> vector<256x128xf32>
    %53 = arith.addf %50, %52 : vector<256x128xf32>
    %c0_20 = arith.constant 0 : index
    %c0_21 = arith.constant 0 : index
    %54 = vector.load %arg3[%c0_20, %c0_21] : memref<1x128xf32, #tpu.memory_space<vmem>>, vector<1x128xf32>
    %55 = vector.broadcast %54 : vector<1x128xf32> to vector<256x128xf32>
    %56 = arith.addf %53, %55 : vector<256x128xf32>
    %cst_22 = arith.constant 0.000000e+00 : f32
    %57 = vector.broadcast %cst_22 : f32 to vector<256x128xf32>
    %58 = arith.maximumf %56, %57 : vector<256x128xf32>
    %cst_23 = arith.constant 0.000000e+00 : f32
    %59 = vector.broadcast %cst_23 : f32 to vector<1x128xf32>
    %60 = vector.extract_strided_slice %58 {offsets = [0, 0], sizes = [255, 128], strides = [1, 1]} : vector<256x128xf32> to vector<255x128xf32>
    %61 = tpu.concatenate %59, %60 in 0 : vector<1x128xf32>, vector<255x128xf32> -> vector<256x128xf32>
    %62 = vector.extract_strided_slice %58 {offsets = [1, 0], sizes = [255, 128], strides = [1, 1]} : vector<256x128xf32> to vector<255x128xf32>
    %63 = tpu.concatenate %62, %59 in 0 : vector<255x128xf32>, vector<1x128xf32> -> vector<256x128xf32>
    %cst_24 = arith.constant 0.000000e+00 : f32
    %64 = vector.broadcast %cst_24 : f32 to vector<256x128xf32>
    %65 = vector.shape_cast %21 : vector<256x1xi1> to vector<256x1xi1>
    %66 = vector.broadcast %65 : vector<256x1xi1> to vector<256x128xi1>
    %67 = arith.select %66, %64, %61 : vector<256x128xi1>, vector<256x128xf32>
    %cst_25 = arith.constant 0.000000e+00 : f32
    %68 = vector.broadcast %cst_25 : f32 to vector<256x128xf32>
    %69 = vector.shape_cast %23 : vector<256x1xi1> to vector<256x1xi1>
    %70 = vector.broadcast %69 : vector<256x1xi1> to vector<256x128xi1>
    %71 = arith.select %70, %68, %63 : vector<256x128xi1>, vector<256x128xf32>
    %72 = tpu.concatenate %67, %58, %71 in 1 : vector<256x128xf32>, vector<256x128xf32>, vector<256x128xf32> -> vector<256x384xf32>
    %c0_26 = arith.constant 0 : index
    %c0_27 = arith.constant 0 : index
    %c0_28 = arith.constant 0 : index
    %73 = vector.load %arg4[%c0_26, %c0_27, %c0_28] : memref<3x384x128xf32, #tpu.memory_space<vmem>>, vector<1x384x128xf32>
    %74 = vector.shape_cast %73 : vector<1x384x128xf32> to vector<384x128xf32>
    %cst_29 = arith.constant dense<0.000000e+00> : vector<256x128xf32>
    %75 = tpu.matmul %72, %74, %cst_29 {dimension_numbers = #tpu.dot_dimension_numbers<[1], [0], [0], [1], [0, 0, 1, 1], [], []>} : vector<256x384xf32>, vector<384x128xf32>, vector<256x128xf32> -> vector<256x128xf32>
    %c1_30 = arith.constant 1 : index
    %c0_31 = arith.constant 0 : index
    %c0_32 = arith.constant 0 : index
    %76 = vector.load %arg4[%c1_30, %c0_31, %c0_32] : memref<3x384x128xf32, #tpu.memory_space<vmem>>, vector<1x384x128xf32>
    %77 = vector.shape_cast %76 : vector<1x384x128xf32> to vector<384x128xf32>
    %cst_33 = arith.constant dense<0.000000e+00> : vector<256x128xf32>
    %78 = tpu.matmul %72, %77, %cst_33 {dimension_numbers = #tpu.dot_dimension_numbers<[1], [0], [0], [1], [0, 0, 1, 1], [], []>} : vector<256x384xf32>, vector<384x128xf32>, vector<256x128xf32> -> vector<256x128xf32>
    %c2_34 = arith.constant 2 : index
    %c0_35 = arith.constant 0 : index
    %c0_36 = arith.constant 0 : index
    %79 = vector.load %arg4[%c2_34, %c0_35, %c0_36] : memref<3x384x128xf32, #tpu.memory_space<vmem>>, vector<1x384x128xf32>
    %80 = vector.shape_cast %79 : vector<1x384x128xf32> to vector<384x128xf32>
    %cst_37 = arith.constant dense<0.000000e+00> : vector<256x128xf32>
    %81 = tpu.matmul %72, %80, %cst_37 {dimension_numbers = #tpu.dot_dimension_numbers<[1], [0], [0], [1], [0, 0, 1, 1], [], []>} : vector<256x384xf32>, vector<384x128xf32>, vector<256x128xf32> -> vector<256x128xf32>
    %cst_38 = arith.constant 0.000000e+00 : f32
    %82 = vector.broadcast %cst_38 : f32 to vector<16x128xf32>
    %83 = vector.extract_strided_slice %75 {offsets = [0, 0], sizes = [240, 128], strides = [1, 1]} : vector<256x128xf32> to vector<240x128xf32>
    %84 = tpu.concatenate %82, %83 in 0 : vector<16x128xf32>, vector<240x128xf32> -> vector<256x128xf32>
    %85 = arith.addf %78, %84 : vector<256x128xf32>
    %86 = vector.extract_strided_slice %81 {offsets = [16, 0], sizes = [240, 128], strides = [1, 1]} : vector<256x128xf32> to vector<240x128xf32>
    %87 = tpu.concatenate %86, %82 in 0 : vector<240x128xf32>, vector<16x128xf32> -> vector<256x128xf32>
    %88 = arith.addf %85, %87 : vector<256x128xf32>
    %c0_39 = arith.constant 0 : index
    %c0_40 = arith.constant 0 : index
    %89 = vector.load %arg5[%c0_39, %c0_40] : memref<1x128xf32, #tpu.memory_space<vmem>>, vector<1x128xf32>
    %90 = vector.broadcast %89 : vector<1x128xf32> to vector<256x128xf32>
    %91 = arith.addf %88, %90 : vector<256x128xf32>
    %92 = arith.addf %2, %91 : vector<256x128xf32>
    %93 = vector.shape_cast %92 : vector<256x128xf32> to vector<16x16x128xf32>
    %c0_41 = arith.constant 0 : index
    %c0_42 = arith.constant 0 : index
    %c0_43 = arith.constant 0 : index
    %c0_44 = arith.constant 0 : index
    %94 = vector.load %arg6[%c0_41, %c0_42, %c0_43, %c0_44] : memref<1x16x16x128xf32, #tpu.memory_space<vmem>>, vector<1x16x16x128xf32>
    %95 = vector.shape_cast %94 : vector<1x16x16x128xf32> to vector<16x16x128xf32>
    %96 = vector.shape_cast %93 : vector<16x16x128xf32> to vector<1x16x16x128xf32>
    tpu.vector_store %arg6[%c0_41, %c0_42, %c0_43, %c0_44], %96 {strides = array<i32>} : memref<1x16x16x128xf32, #tpu.memory_space<vmem>>, vector<1x16x16x128xf32>,
    return
  }
  func.func @transform_0(%arg0: i32) -> (i32, i32, i32, i32) {
    %c0_i32 = arith.constant 0 : i32
    %c0_i32_0 = arith.constant 0 : i32
    %c0_i32_1 = arith.constant 0 : i32
    %c0_i32_2 = arith.constant 0 : i32
    return %arg0, %c0_i32, %c0_i32_0, %c0_i32_1 : i32, i32, i32, i32
  }
  func.func @transform_1(%arg0: i32) -> (i32, i32, i32) {
    %c0_i32 = arith.constant 0 : i32
    %c0_i32_0 = arith.constant 0 : i32
    %c0_i32_1 = arith.constant 0 : i32
    %c0_i32_2 = arith.constant 0 : i32
    return %c0_i32, %c0_i32_0, %c0_i32_1 : i32, i32, i32
  }
  func.func @transform_2(%arg0: i32) -> (i32, i32) {
    %c0_i32 = arith.constant 0 : i32
    %c0_i32_0 = arith.constant 0 : i32
    %c0_i32_1 = arith.constant 0 : i32
    return %c0_i32, %c0_i32_0 : i32, i32
  }
  func.func @transform_3(%arg0: i32) -> (i32, i32, i32) {
    %c0_i32 = arith.constant 0 : i32
    %c0_i32_0 = arith.constant 0 : i32
    %c0_i32_1 = arith.constant 0 : i32
    %c0_i32_2 = arith.constant 0 : i32
    return %c0_i32, %c0_i32_0, %c0_i32_1 : i32, i32, i32
  }
  func.func @transform_4(%arg0: i32) -> (i32, i32) {
    %c0_i32 = arith.constant 0 : i32
    %c0_i32_0 = arith.constant 0 : i32
    %c0_i32_1 = arith.constant 0 : i32
    return %c0_i32, %c0_i32_0 : i32, i32
  }
  func.func @transform_5(%arg0: i32) -> (i32, i32, i32, i32) {
    %c0_i32 = arith.constant 0 : i32
    %c0_i32_0 = arith.constant 0 : i32
    %c0_i32_1 = arith.constant 0 : i32
    %c0_i32_2 = arith.constant 0 : i32
    return %arg0, %c0_i32, %c0_i32_0, %c0_i32_1 : i32, i32, i32, i32
  }
}

</mosaic_0001>

<llo_original>
// kernel: tpu_custom_call.1
$region0: #{tpu_custom_call.1}
  #allocation0 [shape = 'u32[]', space=smem, size = 0x4, offset = 0x4, fixed_abs, tag = 'smem constant byte address 0x4 - core index']
  #allocation1 [shape = 'u32[144,128]{1,0:T(1,128)}', space=vmem, size = 0x12000, scoped, tag = 'internal scratch']
  %s0 = inlined_call_operand.hbm [shape: f32[2,16,16,128], index: 0, kind: input, shape index: {}]
  %s1 = inlined_call_operand.hbm [shape: f32[3,384,128], index: 1, kind: input, shape index: {}]
  %s2 = inlined_call_operand.hbm [shape: f32[1,128], index: 2, kind: input, shape index: {}]
  %s3 = inlined_call_operand.hbm [shape: f32[3,384,128], index: 3, kind: input, shape index: {}]
  %s4 = inlined_call_operand.hbm [shape: f32[1,128], index: 4, kind: input, shape index: {}]
  %s5 = inlined_call_operand.hbm [shape: f32[2,16,16,128], index: 5, kind: output, shape index: {}]
  %s6 = sld [smem:[#allocation0]]
  $region73: #{tpu_custom_call.1} parent=0
    _
  %s8 = ssub.s32 1, %s6
  %s9 = scalar_select 0, %s8, %s6
  $region1: #{tpu_custom_call.1} parent=0
    #allocation2 [shape = 'u8[262144]{0}', space=vmem, size = 0x40000, scoped, tag = 'input window, operand 0']
    #allocation3 [shape = 's32[2]{0}', space=sflag, size = 0x8, scoped, tag = 'scoped memory for tpu_custom_call.1']
    #allocation4 [shape = 's32[2]{0}', space=sflag, size = 0x8, scoped, tag = 'scoped memory for tpu_custom_call.1']
    #allocation5 [shape = 'u8[589824]{0}', space=vmem, size = 0x90000, scoped, tag = 'input window, operand 1, single buffered']
    #allocation6 [shape = 's32[1]{0}', space=sflag, size = 0x4, scoped, tag = 'scoped memory for tpu_custom_call.1']
    #allocation7 [shape = 'u8[512]{0}', space=vmem, size = 0x400, scoped, tag = 'input window, operand 2, single buffered']
    #allocation8 [shape = 'u8[589824]{0}', space=vmem, size = 0x90000, scoped, tag = 'input window, operand 3, single buffered']
    #allocation9 [shape = 's32[1]{0}', space=sflag, size = 0x4, scoped, tag = 'scoped memory for tpu_custom_call.1']
    #allocation10 [shape = 'u8[512]{0}', space=vmem, size = 0x400, scoped, tag = 'input window, operand 4, single buffered']
    #allocation11 [shape = 'u8[262144]{0}', space=vmem, size = 0x40000, scoped, tag = 'output window, operand 0']
    %10 = vsyncpa [#allocation3], 0
    %s11 = scalar_lea.sflag [#allocation3], 1
    %12 = vsyncpa %s11, 0
    %13 = vsyncpa [#allocation6], 0
    %14 = vsyncpa [#allocation9], 0
    %15 = vsyncpa [#allocation4], 0
    %s16 = scalar_lea.sflag [#allocation4], 1
    %17 = vsyncpa %s16, 0
    loop: start=0, step=1, limit=4
    $region2: #{tpu_custom_call.1} parent=1 // loop_pre_header
      _
    $region3: #{tpu_custom_call.1} parent=1 // loop_header
      %s19 = sphi 0, %s23
      %p20 = scmp.ge.s32.totalorder %s19, 4
      %s29 = sphi 0, %s31
      %s32 = sphi 0, %s29
      %s33 = sphi 0, %s32
      %s49 = sphi 0, %s33
      %s53 = sphi 0, %s53
      %s55 = sphi 0, %s53
      %s56 = sphi 0, %s55
      %s70 = sphi 0, %s56
      %s74 = sphi 0, %s74
      %s76 = sphi 0, %s74
      %s77 = sphi 0, %s76
      %s91 = sphi 0, %s77
      %s95 = sphi 0, %s95
      %s97 = sphi 0, %s95
      %s98 = sphi 0, %s97
      %s112 = sphi 0, %s98
      %s116 = sphi 0, %s116
      %s118 = sphi 0, %s116
      %s119 = sphi 0, %s118
      %s133 = sphi 0, %s119
      %s139 = sphi 0, %s141
      %s142 = sphi 0, %s139
      %s143 = sphi 0, %s142
      %s159 = sphi 0, %s143
    $region4: #{tpu_custom_call.1} parent=1 // loop_header_branch
      %22 = sbr.rel (%p20) target = $region8
    $region5: #{tpu_custom_call.1} parent=1 // loop_body
      %s24 = ssub.s32 %s19, 1
      %s25 = ssub.s32 %s19, 2
      %s26 = sadd.s32 %s19, 1
      %s27 = ssub.s32 %s19, %s26
      %p28 = scmp.eq.s32.totalorder %s27, 0
      %s30 = sadd.s32 %s29, 1
      %s31 = scalar_select %p28, %s29, %s30
      %p34 = pneg %p28
      %p35 = scmp.eq.s32.totalorder %s19, 1
      %p36 = por %p34, %p35
      %p37 = scmp.ne.s32.totalorder %s29, %s32
      %p38 = scmp.eq.s32.totalorder %s19, 0
      %p39 = por %p37, %p38
      %p40 = scmp.ne.s32.totalorder %s29, %s32
      %p41 = scmp.eq.s32.totalorder %s24, 1
      %p42 = por %p40, %p41
      %p43 = scmp.ne.s32.totalorder %s32, %s33
      %p44 = scmp.eq.s32.totalorder %s24, 0
      %p45 = por %p43, %p44
      %p46 = scmp.ne.s32.totalorder %s32, %s33
      %p47 = scmp.eq.s32.totalorder %s25, 1
      %p48 = por %p46, %p47
      %p50 = scmp.ne.s32.totalorder %s33, %s49
      %p51 = scmp.eq.s32.totalorder %s25, 0
      %p52 = por %p50, %p51
      %s54 = sadd.s32 %s53, 1
      %p57 = scmp.eq.s32.totalorder %s19, 1
      %p58 = scmp.ne.s32.totalorder %s53, %s55
      %p59 = scmp.eq.s32.totalorder %s19, 0
      %p60 = por %p58, %p59
      %p61 = scmp.ne.s32.totalorder %s53, %s55
      %p62 = scmp.eq.s32.totalorder %s24, 1
      %p63 = por %p61, %p62
      %p64 = scmp.ne.s32.totalorder %s55, %s56
      %p65 = scmp.eq.s32.totalorder %s24, 0
      %p66 = por %p64, %p65
      %p67 = scmp.ne.s32.totalorder %s55, %s56
      %p68 = scmp.eq.s32.totalorder %s25, 1
      %p69 = por %p67, %p68
      %p71 = scmp.ne.s32.totalorder %s56, %s70
      %p72 = scmp.eq.s32.totalorder %s25, 0
      %p73 = por %p71, %p72
      %s75 = sadd.s32 %s74, 1
      %p78 = scmp.eq.s32.totalorder %s19, 1
      %p79 = scmp.ne.s32.totalorder %s74, %s76
      %p80 = scmp.eq.s32.totalorder %s19, 0
      %p81 = por %p79, %p80
      %p82 = scmp.ne.s32.totalorder %s74, %s76
      %p83 = scmp.eq.s32.totalorder %s24, 1
      %p84 = por %p82, %p83
      %p85 = scmp.ne.s32.totalorder %s76, %s77
      %p86 = scmp.eq.s32.totalorder %s24, 0
      %p87 = por %p85, %p86
      %p88 = scmp.ne.s32.totalorder %s76, %s77
      %p89 = scmp.eq.s32.totalorder %s25, 1
      %p90 = por %p88, %p89
      %p92 = scmp.ne.s32.totalorder %s77, %s91
      %p93 = scmp.eq.s32.totalorder %s25, 0
      %p94 = por %p92, %p93
      %s96 = sadd.s32 %s95, 1
      %p99 = scmp.eq.s32.totalorder %s19, 1
      %p100 = scmp.ne.s32.totalorder %s95, %s97
      %p101 = scmp.eq.s32.totalorder %s19, 0
      %p102 = por %p100, %p101
      %p103 = scmp.ne.s32.totalorder %s95, %s97
      %p104 = scmp.eq.s32.totalorder %s24, 1
      %p105 = por %p103, %p104
      %p106 = scmp.ne.s32.totalorder %s97, %s98
      %p107 = scmp.eq.s32.totalorder %s24, 0
      %p108 = por %p106, %p107
      %p109 = scmp.ne.s32.totalorder %s97, %s98
      %p110 = scmp.eq.s32.totalorder %s25, 1
      %p111 = por %p109, %p110
      %p113 = scmp.ne.s32.totalorder %s98, %s112
      %p114 = scmp.eq.s32.totalorder %s25, 0
      %p115 = por %p113, %p114
      %s117 = sadd.s32 %s116, 1
      %p120 = scmp.eq.s32.totalorder %s19, 1
      %p121 = scmp.ne.s32.totalorder %s116, %s118
      %p122 = scmp.eq.s32.totalorder %s19, 0
      %p123 = por %p121, %p122
      %p124 = scmp.ne.s32.totalorder %s116, %s118
      %p125 = scmp.eq.s32.totalorder %s24, 1
      %p126 = por %p124, %p125
      %p127 = scmp.ne.s32.totalorder %s118, %s119
      %p128 = scmp.eq.s32.totalorder %s24, 0
      %p129 = por %p127, %p128
      %p130 = scmp.ne.s32.totalorder %s118, %s119
      %p131 = scmp.eq.s32.totalorder %s25, 1
      %p132 = por %p130, %p131
      %p134 = scmp.ne.s32.totalorder %s119, %s133
      %p135 = scmp.eq.s32.totalorder %s25, 0
      %p136 = por %p134, %p135
      %s137 = ssub.s32 %s19, %s26
      %p138 = scmp.eq.s32.totalorder %s137, 0
      %s140 = sadd.s32 %s139, 1
      %s141 = scalar_select %p138, %s139, %s140
      %p144 = pneg %p138
      %p145 = scmp.eq.s32.totalorder %s19, 1
      %p146 = por %p144, %p145
      %p147 = scmp.ne.s32.totalorder %s139, %s142
      %p148 = scmp.eq.s32.totalorder %s19, 0
      %p149 = por %p147, %p148
      %p150 = scmp.ne.s32.totalorder %s139, %s142
      %p151 = scmp.eq.s32.totalorder %s24, 1
      %p152 = por %p150, %p151
      %p153 = scmp.ne.s32.totalorder %s142, %s143
      %p154 = scmp.eq.s32.totalorder %s24, 0
      %p155 = por %p153, %p154
      %p156 = scmp.ne.s32.totalorder %s142, %s143
      %p157 = scmp.eq.s32.totalorder %s25, 1
      %p158 = por %p156, %p157
      %p160 = scmp.ne.s32.totalorder %s143, %s159
      %p161 = scmp.eq.s32.totalorder %s25, 0
      %p162 = por %p160, %p161
      %p163 = scmp.le.s32.totalorder 1, %s19
      %p164 = scmp.lt.s32.totalorder %s19, 3
      %p165 = pnand %p163, %p164
      %p166 = pneg %p165
      // Predicated region
      $region9: #{tpu_custom_call.1} parent=5 // pred_check
        _
      $region10: #{tpu_custom_call.1} parent=5 // pred_check_branch
        %168 = sbr.rel (%p165) target = $region12
      $region11: #{tpu_custom_call.1} parent=5 // pred_region
        %s169 = ssub.s32 %s19, 1
        // Predicated region
        $region13: #{tpu_custom_call.1} parent=11 // pred_check
          %p170 = pneg %p66
        $region14: #{tpu_custom_call.1} parent=11 // pred_check_branch
          %172 = sbr.rel (%p170) target = $region16
        $region15: #{tpu_custom_call.1} parent=11 // pred_region
          %s174 = ssub.s32 18432, 18432
          %175 = vsyncadd [#allocation6], %s174
          %s176 = sshll.u32 [#allocation5], 4
          %s177 = int_to_ptr.vmem [resolvable:$true] %s176
          %182 = dma.hbm_to_vmem [thread:$0]  %s1, 18432, %s177, [#allocation6], 128, 128, 8
        $region16: #{tpu_custom_call.1} parent=11 // pred_fallthru
          _
        // Predicated region
        $region17: #{tpu_custom_call.1} parent=11 // pred_check
          %p183 = pneg %p87
        $region18: #{tpu_custom_call.1} parent=11 // pred_check_branch
          %185 = sbr.rel (%p183) target = $region20
        $region19: #{tpu_custom_call.1} parent=11 // pred_region
          %s187 = ssub.s32 16, 16
          %188 = vsyncadd [#allocation6], %s187
          %s190 = sshll.u32 [#allocation7], 4
          %s191 = int_to_ptr.vmem [resolvable:$true] %s190
          %193 = dma.hbm_to_vmem [thread:$0]  %s2, 16, %s191, [#allocation6]
        $region20: #{tpu_custom_call.1} parent=11 // pred_fallthru
          _
        // Predicated region
        $region21: #{tpu_custom_call.1} parent=11 // pred_check
          %p194 = pneg %p108
        $region22: #{tpu_custom_call.1} parent=11 // pred_check_branch
          %196 = sbr.rel (%p194) target = $region24
        $region23: #{tpu_custom_call.1} parent=11 // pred_region
          %s198 = ssub.s32 18432, 18432
          %199 = vsyncadd [#allocation9], %s198
          %s200 = sshll.u32 [#allocation8], 4
          %s201 = int_to_ptr.vmem [resolvable:$true] %s200
          %206 = dma.hbm_to_vmem [thread:$0]  %s3, 18432, %s201, [#allocation9], 128, 128, 8
        $region24: #{tpu_custom_call.1} parent=11 // pred_fallthru
          _
        // Predicated region
        $region25: #{tpu_custom_call.1} parent=11 // pred_check
          %p207 = pneg %p129
        $region26: #{tpu_custom_call.1} parent=11 // pred_check_branch
          %209 = sbr.rel (%p207) target = $region28
        $region27: #{tpu_custom_call.1} parent=11 // pred_region
          %s211 = ssub.s32 16, 16
          %212 = vsyncadd [#allocation9], %s211
          %s214 = sshll.u32 [#allocation10], 4
          %s215 = int_to_ptr.vmem [resolvable:$true] %s214
          %217 = dma.hbm_to_vmem [thread:$0]  %s4, 16, %s215, [#allocation9]
        $region28: #{tpu_custom_call.1} parent=11 // pred_fallthru
          _
      $region12: #{tpu_custom_call.1} parent=5 // pred_fallthru
        _
      %p218 = scmp.lt.s32.totalorder %s19, 2
      // Predicated region
      $region29: #{tpu_custom_call.1} parent=5 // pred_check
        %p219 = pneg %p218
      $region30: #{tpu_custom_call.1} parent=5 // pred_check_branch
        %221 = sbr.rel (%p219) target = $region32
      $region31: #{tpu_custom_call.1} parent=5 // pred_region
        // Predicated region
        $region33: #{tpu_custom_call.1} parent=31 // pred_check
          %p222 = pneg %p39
        $region34: #{tpu_custom_call.1} parent=31 // pred_check_branch
          %224 = sbr.rel (%p222) target = $region36
        $region35: #{tpu_custom_call.1} parent=31 // pred_region
          %s225 = sand.u32 %s29, 1
          %s226 = scalar_lea.sflag [#allocation3], %s225
          %s227 = sand.u32 %s29, 1
          %s228 = smul.addr %s227, 256
          %s229 = scalar_lea.vmem [#allocation2], %s228
          %s231 = ssub.s32 4096, 4096
          %232 = vsyncadd %s226, %s231
          %s233 = smul.addr %s19, 32
          %s234 = smul.addr %s233, 128
          %s235 = scalar_lea.hbm %s0, %s234
          %s236 = sshll.u32 %s229, 4
          %s237 = int_to_ptr.vmem [resolvable:$true] %s236
          %242 = dma.hbm_to_vmem [thread:$0]  %s235, 4096, %s237, %s226, 128, 128, 8
        $region36: #{tpu_custom_call.1} parent=31 // pred_fallthru
          _
      $region32: #{tpu_custom_call.1} parent=5 // pred_fallthru
        _
      %p243 = scmp.le.s32.totalorder 1, %s19
      %p244 = scmp.lt.s32.totalorder %s19, 3
      %p245 = pnand %p243, %p244
      %p246 = pneg %p245
      // Predicated region
      $region37: #{tpu_custom_call.1} parent=5 // pred_check
        _
      $region38: #{tpu_custom_call.1} parent=5 // pred_check_branch
        %248 = sbr.rel (%p245) target = $region40
      $region39: #{tpu_custom_call.1} parent=5 // pred_region
        %s249 = ssub.s32 %s19, 1
        %s250 = sand.u32 %s32, 1
        %s251 = scalar_lea.sflag [#allocation3], %s250
        %s252 = sand.u32 %s32, 1
        %s253 = smul.addr %s252, 256
        %s254 = scalar_lea.vmem [#allocation2], %s253
        // Predicated region
        $region41: #{tpu_custom_call.1} parent=39 // pred_check
          %p255 = pneg %p45
        $region42: #{tpu_custom_call.1} parent=39 // pred_check_branch
          %257 = sbr.rel (%p255) target = $region44
        $region43: #{tpu_custom_call.1} parent=39 // pred_region
          %258 = dma.done %s251, 4096
        $region44: #{tpu_custom_call.1} parent=39 // pred_fallthru
          _
        // Predicated region
        $region45: #{tpu_custom_call.1} parent=39 // pred_check
          %p259 = pneg %p66
        $region46: #{tpu_custom_call.1} parent=39 // pred_check_branch
          %261 = sbr.rel (%p259) target = $region48
        $region47: #{tpu_custom_call.1} parent=39 // pred_region
          %262 = dma.done [#allocation6], 18432
        $region48: #{tpu_custom_call.1} parent=39 // pred_fallthru
          _
        // Predicated region
        $region49: #{tpu_custom_call.1} parent=39 // pred_check
          %p263 = pneg %p87
        $region50: #{tpu_custom_call.1} parent=39 // pred_check_branch
          %265 = sbr.rel (%p263) target = $region52
        $region51: #{tpu_custom_call.1} parent=39 // pred_region
          %266 = dma.done [#allocation6], 16
        $region52: #{tpu_custom_call.1} parent=39 // pred_fallthru
          _
        // Predicated region
        $region53: #{tpu_custom_call.1} parent=39 // pred_check
          %p267 = pneg %p108
        $region54: #{tpu_custom_call.1} parent=39 // pred_check_branch
          %269 = sbr.rel (%p267) target = $region56
        $region55: #{tpu_custom_call.1} parent=39 // pred_region
          %270 = dma.done [#allocation9], 18432
        $region56: #{tpu_custom_call.1} parent=39 // pred_fallthru
          _
        // Predicated region
        $region57: #{tpu_custom_call.1} parent=39 // pred_check
          %p271 = pneg %p129
        $region58: #{tpu_custom_call.1} parent=39 // pred_check_branch
          %273 = sbr.rel (%p271) target = $region60
        $region59: #{tpu_custom_call.1} parent=39 // pred_region
          %274 = dma.done [#allocation9], 16
        $region60: #{tpu_custom_call.1} parent=39 // pred_fallthru
          _
        %s275 = sand.u32 %s32, 1
        %s276 = scalar_lea.sflag [#allocation3], %s275
        %s277 = sand.u32 %s32, 1
        %s278 = smul.addr %s277, 256
        %s279 = scalar_lea.vmem [#allocation2], %s278
        %p280 = pneg %p45
        %p281 = pneg %p42
        %p282 = pneg %p66
        %p283 = pneg %p63
        %p284 = pneg %p87
        %p285 = pneg %p84
        %p286 = pneg %p108
        %p287 = pneg %p105
        %p288 = pneg %p129
        %p289 = pneg %p126
        %p290 = pneg %p155
        %p291 = pneg %p152
        %s292 = sand.u32 %s142, 1
        %s293 = scalar_lea.sflag [#allocation4], %s292
        %s294 = sand.u32 %s142, 1
        %s295 = smul.addr %s294, 256
        %s296 = scalar_lea.vmem [#allocation11], %s295
        %v297 = vld [vmem:[%s254] sm:$0xff]
        %v298 = vld [vmem:[%s254 + $0x8] sm:$0xff]
        %v299 = vld [vmem:[%s254 + $0x10] sm:$0xff]
        %v300 = vld [vmem:[%s254 + $0x18] sm:$0xff]
        %v301 = vld [vmem:[%s254 + $0x20] sm:$0xff]
        %v302 = vld [vmem:[%s254 + $0x28] sm:$0xff]
        %v303 = vld [vmem:[%s254 + $0x30] sm:$0xff]
        %v304 = vld [vmem:[%s254 + $0x38] sm:$0xff]
        %v305 = vld [vmem:[%s254 + $0x40] sm:$0xff]
        %v306 = vld [vmem:[%s254 + $0x48] sm:$0xff]
        %v307 = vld [vmem:[%s254 + $0x50] sm:$0xff]
        %v308 = vld [vmem:[%s254 + $0x58] sm:$0xff]
        %v309 = vld [vmem:[%s254 + $0x60] sm:$0xff]
        %v310 = vld [vmem:[%s254 + $0x68] sm:$0xff]
        %v311 = vld [vmem:[%s254 + $0x70] sm:$0xff]
        %v312 = vld [vmem:[%s254 + $0x78] sm:$0xff]
        %v313 = vld [vmem:[%s254 + $0x80] sm:$0xff]
        %v314 = vld [vmem:[%s254 + $0x88] sm:$0xff]
        %v315 = vld [vmem:[%s254 + $0x90] sm:$0xff]
        %v316 = vld [vmem:[%s254 + $0x98] sm:$0xff]
        %v317 = vld [vmem:[%s254 + $0xa0] sm:$0xff]
        %v318 = vld [vmem:[%s254 + $0xa8] sm:$0xff]
        %v319 = vld [vmem:[%s254 + $0xb0] sm:$0xff]
        %v320 = vld [vmem:[%s254 + $0xb8] sm:$0xff]
        %v321 = vld [vmem:[%s254 + $0xc0] sm:$0xff]
        %v322 = vld [vmem:[%s254 + $0xc8] sm:$0xff]
        %v323 = vld [vmem:[%s254 + $0xd0] sm:$0xff]
        %v324 = vld [vmem:[%s254 + $0xd8] sm:$0xff]
        %v325 = vld [vmem:[%s254 + $0xe0] sm:$0xff]
        %v326 = vld [vmem:[%s254 + $0xe8] sm:$0xff]
        %v327 = vld [vmem:[%s254 + $0xf0] sm:$0xff]
        %v328 = vld [vmem:[%s254 + $0xf8] sm:$0xff]
        %v329 = vlaneseq
        %v330 = vshrl.u32 %v329, 7
        %v331 = vadd.s32 %v330, 8
        %v332 = vadd.s32 %v330, 16
        %v333 = vadd.s32 %v330, 24
        %v334 = vadd.s32 %v330, 32
        %v335 = vadd.s32 %v330, 40
        %v336 = vadd.s32 %v330, 48
        %v337 = vadd.s32 %v330, 56
        %v338 = vadd.s32 %v330, 64
        %v339 = vadd.s32 %v330, 72
        %v340 = vadd.s32 %v330, 80
        %v341 = vadd.s32 %v330, 88
        %v342 = vadd.s32 %v330, 96
        %v343 = vadd.s32 %v330, 104
        %v344 = vadd.s32 %v330, 112
        %v345 = vadd.s32 %v330, 120
        %v346 = vadd.s32 %v330, 128
        %v347 = vadd.s32 %v330, 136
        %v348 = vadd.s32 %v330, 144
        %v349 = vadd.s32 %v330, 152
        %v350 = vadd.s32 %v330, 160
        %v351 = vadd.s32 %v330, 168
        %v352 = vadd.s32 %v330, 176
        %v353 = vadd.s32 %v330, 184
        %v354 = vadd.s32 %v330, 192
        %v355 = vadd.s32 %v330, 200
        %v356 = vadd.s32 %v330, 208
        %v357 = vadd.s32 %v330, 216
        %v358 = vadd.s32 %v330, 224
        %v359 = vadd.s32 %v330, 232
        %v360 = vadd.s32 %v330, 240
        %v361 = vadd.s32 %v330, 248
        %vm362 = vcmp.lt.s32.totalorder %v330, 0
        %v363 = vsub.s32 0, %v330
        %v364 = vsel %vm362, %v363, %v330
        %v365 = vshrl.u32 %v364, 4
        %v366 = vand.u32 %v364, 15
        %v367 = vsub.s32 0, %v366
        %v368 = vsel %vm362, %v367, %v366
        %vm369 = vcmp.lt.s32.totalorder %v331, 0
        %v370 = vsub.s32 0, %v331
        %v371 = vsel %vm369, %v370, %v331
        %v372 = vshrl.u32 %v371, 4
        %v373 = vand.u32 %v371, 15
        %v374 = vsub.s32 0, %v373
        %v375 = vsel %vm369, %v374, %v373
        %vm376 = vcmp.lt.s32.totalorder %v332, 0
        %v377 = vsub.s32 0, %v332
        %v378 = vsel %vm376, %v377, %v332
        %v379 = vshrl.u32 %v378, 4
        %v380 = vand.u32 %v378, 15
        %v381 = vsub.s32 0, %v380
        %v382 = vsel %vm376, %v381, %v380
        %vm383 = vcmp.lt.s32.totalorder %v333, 0
        %v384 = vsub.s32 0, %v333
        %v385 = vsel %vm383, %v384, %v333
        %v386 = vshrl.u32 %v385, 4
        %v387 = vand.u32 %v385, 15
        %v388 = vsub.s32 0, %v387
        %v389 = vsel %vm383, %v388, %v387
        %vm390 = vcmp.lt.s32.totalorder %v334, 0
        %v391 = vsub.s32 0, %v334
        %v392 = vsel %vm390, %v391, %v334
        %v393 = vshrl.u32 %v392, 4
        %v394 = vand.u32 %v392, 15
        %v395 = vsub.s32 0, %v394
        %v396 = vsel %vm390, %v395, %v394
        %vm397 = vcmp.lt.s32.totalorder %v335, 0
        %v398 = vsub.s32 0, %v335
        %v399 = vsel %vm397, %v398, %v335
        %v400 = vshrl.u32 %v399, 4
        %v401 = vand.u32 %v399, 15
        %v402 = vsub.s32 0, %v401
        %v403 = vsel %vm397, %v402, %v401
        %vm404 = vcmp.lt.s32.totalorder %v336, 0
        %v405 = vsub.s32 0, %v336
        %v406 = vsel %vm404, %v405, %v336
        %v407 = vshrl.u32 %v406, 4
        %v408 = vand.u32 %v406, 15
        %v409 = vsub.s32 0, %v408
        %v410 = vsel %vm404, %v409, %v408
        %vm411 = vcmp.lt.s32.totalorder %v337, 0
        %v412 = vsub.s32 0, %v337
        %v413 = vsel %vm411, %v412, %v337
        %v414 = vshrl.u32 %v413, 4
        %v415 = vand.u32 %v413, 15
        %v416 = vsub.s32 0, %v415
        %v417 = vsel %vm411, %v416, %v415
        %vm418 = vcmp.lt.s32.totalorder %v338, 0
        %v419 = vsub.s32 0, %v338
        %v420 = vsel %vm418, %v419, %v338
        %v421 = vshrl.u32 %v420, 4
        %v422 = vand.u32 %v420, 15
        %v423 = vsub.s32 0, %v422
        %v424 = vsel %vm418, %v423, %v422
        %vm425 = vcmp.lt.s32.totalorder %v339, 0
        %v426 = vsub.s32 0, %v339
        %v427 = vsel %vm425, %v426, %v339
        %v428 = vshrl.u32 %v427, 4
        %v429 = vand.u32 %v427, 15
        %v430 = vsub.s32 0, %v429
        %v431 = vsel %vm425, %v430, %v429
        %vm432 = vcmp.lt.s32.totalorder %v340, 0
        %v433 = vsub.s32 0, %v340
        %v434 = vsel %vm432, %v433, %v340
        %v435 = vshrl.u32 %v434, 4
        %v436 = vand.u32 %v434, 15
        %v437 = vsub.s32 0, %v436
        %v438 = vsel %vm432, %v437, %v436
        %vm439 = vcmp.lt.s32.totalorder %v341, 0
        %v440 = vsub.s32 0, %v341
        %v441 = vsel %vm439, %v440, %v341
        %v442 = vshrl.u32 %v441, 4
        %v443 = vand.u32 %v441, 15
        %v444 = vsub.s32 0, %v443
        %v445 = vsel %vm439, %v444, %v443
        %vm446 = vcmp.lt.s32.totalorder %v342, 0
        %v447 = vsub.s32 0, %v342
        %v448 = vsel %vm446, %v447, %v342
        %v449 = vshrl.u32 %v448, 4
        %v450 = vand.u32 %v448, 15
        %v451 = vsub.s32 0, %v450
        %v452 = vsel %vm446, %v451, %v450
        %vm453 = vcmp.lt.s32.totalorder %v343, 0
        %v454 = vsub.s32 0, %v343
        %v455 = vsel %vm453, %v454, %v343
        %v456 = vshrl.u32 %v455, 4
        %v457 = vand.u32 %v455, 15
        %v458 = vsub.s32 0, %v457
        %v459 = vsel %vm453, %v458, %v457
        %vm460 = vcmp.lt.s32.totalorder %v344, 0
        %v461 = vsub.s32 0, %v344
        %v462 = vsel %vm460, %v461, %v344
        %v463 = vshrl.u32 %v462, 4
        %v464 = vand.u32 %v462, 15
        %v465 = vsub.s32 0, %v464
        %v466 = vsel %vm460, %v465, %v464
        %vm467 = vcmp.lt.s32.totalorder %v345, 0
        %v468 = vsub.s32 0, %v345
        %v469 = vsel %vm467, %v468, %v345
        %v470 = vshrl.u32 %v469, 4
        %v471 = vand.u32 %v469, 15
        %v472 = vsub.s32 0, %v471
        %v473 = vsel %vm467, %v472, %v471
        %vm474 = vcmp.lt.s32.totalorder %v346, 0
        %v475 = vsub.s32 0, %v346
        %v476 = vsel %vm474, %v475, %v346
        %v477 = vshrl.u32 %v476, 4
        %v478 = vand.u32 %v476, 15
        %v479 = vsub.s32 0, %v478
        %v480 = vsel %vm474, %v479, %v478
        %vm481 = vcmp.lt.s32.totalorder %v347, 0
        %v482 = vsub.s32 0, %v347
        %v483 = vsel %vm481, %v482, %v347
        %v484 = vshrl.u32 %v483, 4
        %v485 = vand.u32 %v483, 15
        %v486 = vsub.s32 0, %v485
        %v487 = vsel %vm481, %v486, %v485
        %vm488 = vcmp.lt.s32.totalorder %v348, 0
        %v489 = vsub.s32 0, %v348
        %v490 = vsel %vm488, %v489, %v348
        %v491 = vshrl.u32 %v490, 4
        %v492 = vand.u32 %v490, 15
        %v493 = vsub.s32 0, %v492
        %v494 = vsel %vm488, %v493, %v492
        %vm495 = vcmp.lt.s32.totalorder %v349, 0
        %v496 = vsub.s32 0, %v349
        %v497 = vsel %vm495, %v496, %v349
        %v498 = vshrl.u32 %v497, 4
        %v499 = vand.u32 %v497, 15
        %v500 = vsub.s32 0, %v499
        %v501 = vsel %vm495, %v500, %v499
        %vm502 = vcmp.lt.s32.totalorder %v350, 0
        %v503 = vsub.s32 0, %v350
        %v504 = vsel %vm502, %v503, %v350
        %v505 = vshrl.u32 %v504, 4
        %v506 = vand.u32 %v504, 15
        %v507 = vsub.s32 0, %v506
        %v508 = vsel %vm502, %v507, %v506
        %vm509 = vcmp.lt.s32.totalorder %v351, 0
        %v510 = vsub.s32 0, %v351
        %v511 = vsel %vm509, %v510, %v351
        %v512 = vshrl.u32 %v511, 4
        %v513 = vand.u32 %v511, 15
        %v514 = vsub.s32 0, %v513
        %v515 = vsel %vm509, %v514, %v513
        %vm516 = vcmp.lt.s32.totalorder %v352, 0
        %v517 = vsub.s32 0, %v352
        %v518 = vsel %vm516, %v517, %v352
        %v519 = vshrl.u32 %v518, 4
        %v520 = vand.u32 %v518, 15
        %v521 = vsub.s32 0, %v520
        %v522 = vsel %vm516, %v521, %v520
        %vm523 = vcmp.lt.s32.totalorder %v353, 0
        %v524 = vsub.s32 0, %v353
        %v525 = vsel %vm523, %v524, %v353
        %v526 = vshrl.u32 %v525, 4
        %v527 = vand.u32 %v525, 15
        %v528 = vsub.s32 0, %v527
        %v529 = vsel %vm523, %v528, %v527
        %vm530 = vcmp.lt.s32.totalorder %v354, 0
        %v531 = vsub.s32 0, %v354
        %v532 = vsel %vm530, %v531, %v354
        %v533 = vshrl.u32 %v532, 4
        %v534 = vand.u32 %v532, 15
        %v535 = vsub.s32 0, %v534
        %v536 = vsel %vm530, %v535, %v534
        %vm537 = vcmp.lt.s32.totalorder %v355, 0
        %v538 = vsub.s32 0, %v355
        %v539 = vsel %vm537, %v538, %v355
        %v540 = vshrl.u32 %v539, 4
        %v541 = vand.u32 %v539, 15
        %v542 = vsub.s32 0, %v541
        %v543 = vsel %vm537, %v542, %v541
        %vm544 = vcmp.lt.s32.totalorder %v356, 0
        %v545 = vsub.s32 0, %v356
        %v546 = vsel %vm544, %v545, %v356
        %v547 = vshrl.u32 %v546, 4
        %v548 = vand.u32 %v546, 15
        %v549 = vsub.s32 0, %v548
        %v550 = vsel %vm544, %v549, %v548
        %vm551 = vcmp.lt.s32.totalorder %v357, 0
        %v552 = vsub.s32 0, %v357
        %v553 = vsel %vm551, %v552, %v357
        %v554 = vshrl.u32 %v553, 4
        %v555 = vand.u32 %v553, 15
        %v556 = vsub.s32 0, %v555
        %v557 = vsel %vm551, %v556, %v555
        %vm558 = vcmp.lt.s32.totalorder %v358, 0
        %v559 = vsub.s32 0, %v358
        %v560 = vsel %vm558, %v559, %v358
        %v561 = vshrl.u32 %v560, 4
        %v562 = vand.u32 %v560, 15
        %v563 = vsub.s32 0, %v562
        %v564 = vsel %vm558, %v563, %v562
        %vm565 = vcmp.lt.s32.totalorder %v359, 0
        %v566 = vsub.s32 0, %v359
        %v567 = vsel %vm565, %v566, %v359
        %v568 = vshrl.u32 %v567, 4
        %v569 = vand.u32 %v567, 15
        %v570 = vsub.s32 0, %v569
        %v571 = vsel %vm565, %v570, %v569
        %vm572 = vcmp.lt.s32.totalorder %v360, 0
        %v573 = vsub.s32 0, %v360
        %v574 = vsel %vm572, %v573, %v360
        %v575 = vshrl.u32 %v574, 4
        %v576 = vand.u32 %v574, 15
        %v577 = vsub.s32 0, %v576
        %v578 = vsel %vm572, %v577, %v576
        %vm579 = vcmp.lt.s32.totalorder %v361, 0
        %v580 = vsub.s32 0, %v361
        %v581 = vsel %vm579, %v580, %v361
        %v582 = vshrl.u32 %v581, 4
        %v583 = vand.u32 %v581, 15
        %v584 = vsub.s32 0, %v583
        %v585 = vsel %vm579, %v584, %v583
        %vm586 = vcmp.ne.s32.totalorder %v368, 0
        %vm587 = vcmp.ne.s32.totalorder %v375, 0
        %vm588 = vcmp.ne.s32.totalorder %v382, 0
        %vm589 = vcmp.ne.s32.totalorder %v389, 0
        %vm590 = vcmp.ne.s32.totalorder %v396, 0
        %vm591 = vcmp.ne.s32.totalorder %v403, 0
        %vm592 = vcmp.ne.s32.totalorder %v410, 0
        %vm593 = vcmp.ne.s32.totalorder %v417, 0
        %vm594 = vcmp.ne.s32.totalorder %v424, 0
        %vm595 = vcmp.ne.s32.totalorder %v431, 0
        %vm596 = vcmp.ne.s32.totalorder %v438, 0
        %vm597 = vcmp.ne.s32.totalorder %v445, 0
        %vm598 = vcmp.ne.s32.totalorder %v452, 0
        %vm599 = vcmp.ne.s32.totalorder %v459, 0
        %vm600 = vcmp.ne.s32.totalorder %v466, 0
        %vm601 = vcmp.ne.s32.totalorder %v473, 0
        %vm602 = vcmp.ne.s32.totalorder %v480, 0
        %vm603 = vcmp.ne.s32.totalorder %v487, 0
        %vm604 = vcmp.ne.s32.totalorder %v494, 0
        %vm605 = vcmp.ne.s32.totalorder %v501, 0
        %vm606 = vcmp.ne.s32.totalorder %v508, 0
        %vm607 = vcmp.ne.s32.totalorder %v515, 0
        %vm608 = vcmp.ne.s32.totalorder %v522, 0
        %vm609 = vcmp.ne.s32.totalorder %v529, 0
        %vm610 = vcmp.ne.s32.totalorder %v536, 0
        %vm611 = vcmp.ne.s32.totalorder %v543, 0
        %vm612 = vcmp.ne.s32.totalorder %v550, 0
        %vm613 = vcmp.ne.s32.totalorder %v557, 0
        %vm614 = vcmp.ne.s32.totalorder %v564, 0
        %vm615 = vcmp.ne.s32.totalorder %v571, 0
        %vm616 = vcmp.ne.s32.totalorder %v578, 0
        %vm617 = vcmp.ne.s32.totalorder %v585, 0
        %vm618 = vcmp.lt.s32.totalorder %v368, 0
        %vm619 = vcmp.lt.s32.totalorder %v375, 0
        %vm620 = vcmp.lt.s32.totalorder %v382, 0
        %vm621 = vcmp.lt.s32.totalorder %v389, 0
        %vm622 = vcmp.lt.s32.totalorder %v396, 0
        %vm623 = vcmp.lt.s32.totalorder %v403, 0
        %vm624 = vcmp.lt.s32.totalorder %v410, 0
        %vm625 = vcmp.lt.s32.totalorder %v417, 0
        %vm626 = vcmp.lt.s32.totalorder %v424, 0
        %vm627 = vcmp.lt.s32.totalorder %v431, 0
        %vm628 = vcmp.lt.s32.totalorder %v438, 0
        %vm629 = vcmp.lt.s32.totalorder %v445, 0
        %vm630 = vcmp.lt.s32.totalorder %v452, 0
        %vm631 = vcmp.lt.s32.totalorder %v459, 0
        %vm632 = vcmp.lt.s32.totalorder %v466, 0
        %vm633 = vcmp.lt.s32.totalorder %v473, 0
        %vm634 = vcmp.lt.s32.totalorder %v480, 0
        %vm635 = vcmp.lt.s32.totalorder %v487, 0
        %vm636 = vcmp.lt.s32.totalorder %v494, 0
        %vm637 = vcmp.lt.s32.totalorder %v501, 0
        %vm638 = vcmp.lt.s32.totalorder %v508, 0
        %vm639 = vcmp.lt.s32.totalorder %v515, 0
        %vm640 = vcmp.lt.s32.totalorder %v522, 0
        %vm641 = vcmp.lt.s32.totalorder %v529, 0
        %vm642 = vcmp.lt.s32.totalorder %v536, 0
        %vm643 = vcmp.lt.s32.totalorder %v543, 0
        %vm644 = vcmp.lt.s32.totalorder %v550, 0
        %vm645 = vcmp.lt.s32.totalorder %v557, 0
        %vm646 = vcmp.lt.s32.totalorder %v564, 0
        %vm647 = vcmp.lt.s32.totalorder %v571, 0
        %vm648 = vcmp.lt.s32.totalorder %v578, 0
        %vm649 = vcmp.lt.s32.totalorder %v585, 0
        %vm650 = vmand %vm618, %vm586
        %vm651 = vmand %vm619, %vm587
        %vm652 = vmand %vm620, %vm588
        %vm653 = vmand %vm621, %vm589
        %vm654 = vmand %vm622, %vm590
        %vm655 = vmand %vm623, %vm591
        %vm656 = vmand %vm624, %vm592
        %vm657 = vmand %vm625, %vm593
        %vm658 = vmand %vm626, %vm594
        %vm659 = vmand %vm627, %vm595
        %vm660 = vmand %vm628, %vm596
        %vm661 = vmand %vm629, %vm597
        %vm662 = vmand %vm630, %vm598
        %vm663 = vmand %vm631, %vm599
        %vm664 = vmand %vm632, %vm600
        %vm665 = vmand %vm633, %vm601
        %vm666 = vmand %vm634, %vm602
        %vm667 = vmand %vm635, %vm603
        %vm668 = vmand %vm636, %vm604
        %vm669 = vmand %vm637, %vm605
        %vm670 = vmand %vm638, %vm606
        %vm671 = vmand %vm639, %vm607
        %vm672 = vmand %vm640, %vm608
        %vm673 = vmand %vm641, %vm609
        %vm674 = vmand %vm642, %vm610
        %vm675 = vmand %vm643, %vm611
        %vm676 = vmand %vm644, %vm612
        %vm677 = vmand %vm645, %vm613
        %vm678 = vmand %vm646, %vm614
        %vm679 = vmand %vm647, %vm615
        %vm680 = vmand %vm648, %vm616
        %vm681 = vmand %vm649, %vm617
        %v682 = vadd.s32 %v368, 16
        %v683 = vadd.s32 %v375, 16
        %v684 = vadd.s32 %v382, 16
        %v685 = vadd.s32 %v389, 16
        %v686 = vadd.s32 %v396, 16
        %v687 = vadd.s32 %v403, 16
        %v688 = vadd.s32 %v410, 16
        %v689 = vadd.s32 %v417, 16
        %v690 = vadd.s32 %v424, 16
        %v691 = vadd.s32 %v431, 16
        %v692 = vadd.s32 %v438, 16
        %v693 = vadd.s32 %v445, 16
        %v694 = vadd.s32 %v452, 16
        %v695 = vadd.s32 %v459, 16
        %v696 = vadd.s32 %v466, 16
        %v697 = vadd.s32 %v473, 16
        %v698 = vadd.s32 %v480, 16
        %v699 = vadd.s32 %v487, 16
        %v700 = vadd.s32 %v494, 16
        %v701 = vadd.s32 %v501, 16
        %v702 = vadd.s32 %v508, 16
        %v703 = vadd.s32 %v515, 16
        %v704 = vadd.s32 %v522, 16
        %v705 = vadd.s32 %v529, 16
        %v706 = vadd.s32 %v536, 16
        %v707 = vadd.s32 %v543, 16
        %v708 = vadd.s32 %v550, 16
        %v709 = vadd.s32 %v557, 16
        %v710 = vadd.s32 %v564, 16
        %v711 = vadd.s32 %v571, 16
        %v712 = vadd.s32 %v578, 16
        %v713 = vadd.s32 %v585, 16
        %v714 = vsel %vm650, %v682, %v368
        %v715 = vsel %vm651, %v683, %v375
        %v716 = vsel %vm652, %v684, %v382
        %v717 = vsel %vm653, %v685, %v389
        %v718 = vsel %vm654, %v686, %v396
        %v719 = vsel %vm655, %v687, %v403
        %v720 = vsel %vm656, %v688, %v410
        %v721 = vsel %vm657, %v689, %v417
        %v722 = vsel %vm658, %v690, %v424
        %v723 = vsel %vm659, %v691, %v431
        %v724 = vsel %vm660, %v692, %v438
        %v725 = vsel %vm661, %v693, %v445
        %v726 = vsel %vm662, %v694, %v452
        %v727 = vsel %vm663, %v695, %v459
        %v728 = vsel %vm664, %v696, %v466
        %v729 = vsel %vm665, %v697, %v473
        %v730 = vsel %vm666, %v698, %v480
        %v731 = vsel %vm667, %v699, %v487
        %v732 = vsel %vm668, %v700, %v494
        %v733 = vsel %vm669, %v701, %v501
        %v734 = vsel %vm670, %v702, %v508
        %v735 = vsel %vm671, %v703, %v515
        %v736 = vsel %vm672, %v704, %v522
        %v737 = vsel %vm673, %v705, %v529
        %v738 = vsel %vm674, %v706, %v536
        %v739 = vsel %vm675, %v707, %v543
        %v740 = vsel %vm676, %v708, %v550
        %v741 = vsel %vm677, %v709, %v557
        %v742 = vsel %vm678, %v710, %v564
        %v743 = vsel %vm679, %v711, %v571
        %v744 = vsel %vm680, %v712, %v578
        %v745 = vsel %vm681, %v713, %v585
        %vm746 = vcmp.eq.s32.totalorder %v714, 0
        %vm747 = vcmp.eq.s32.totalorder %v715, 0
        %vm748 = vcmp.eq.s32.totalorder %v716, 0
        %vm749 = vcmp.eq.s32.totalorder %v717, 0
        %vm750 = vcmp.eq.s32.totalorder %v718, 0
        %vm751 = vcmp.eq.s32.totalorder %v719, 0
        %vm752 = vcmp.eq.s32.totalorder %v720, 0
        %vm753 = vcmp.eq.s32.totalorder %v721, 0
        %vm754 = vcmp.eq.s32.totalorder %v722, 0
        %vm755 = vcmp.eq.s32.totalorder %v723, 0
        %vm756 = vcmp.eq.s32.totalorder %v724, 0
        %vm757 = vcmp.eq.s32.totalorder %v725, 0
        %vm758 = vcmp.eq.s32.totalorder %v726, 0
        %vm759 = vcmp.eq.s32.totalorder %v727, 0
        %vm760 = vcmp.eq.s32.totalorder %v728, 0
        %vm761 = vcmp.eq.s32.totalorder %v729, 0
        %vm762 = vcmp.eq.s32.totalorder %v730, 0
        %vm763 = vcmp.eq.s32.totalorder %v731, 0
        %vm764 = vcmp.eq.s32.totalorder %v732, 0
        %vm765 = vcmp.eq.s32.totalorder %v733, 0
        %vm766 = vcmp.eq.s32.totalorder %v734, 0
        %vm767 = vcmp.eq.s32.totalorder %v735, 0
        %vm768 = vcmp.eq.s32.totalorder %v736, 0
        %vm769 = vcmp.eq.s32.totalorder %v737, 0
        %vm770 = vcmp.eq.s32.totalorder %v738, 0
        %vm771 = vcmp.eq.s32.totalorder %v739, 0
        %vm772 = vcmp.eq.s32.totalorder %v740, 0
        %vm773 = vcmp.eq.s32.totalorder %v741, 0
        %vm774 = vcmp.eq.s32.totalorder %v742, 0
        %vm775 = vcmp.eq.s32.totalorder %v743, 0
        %vm776 = vcmp.eq.s32.totalorder %v744, 0
        %vm777 = vcmp.eq.s32.totalorder %v745, 0
        %vm778 = vcmp.eq.s32.totalorder %v714, 15
        %vm779 = vcmp.eq.s32.totalorder %v715, 15
        %vm780 = vcmp.eq.s32.totalorder %v716, 15
        %vm781 = vcmp.eq.s32.totalorder %v717, 15
        %vm782 = vcmp.eq.s32.totalorder %v718, 15
        %vm783 = vcmp.eq.s32.totalorder %v719, 15
        %vm784 = vcmp.eq.s32.totalorder %v720, 15
        %vm785 = vcmp.eq.s32.totalorder %v721, 15
        %vm786 = vcmp.eq.s32.totalorder %v722, 15
        %vm787 = vcmp.eq.s32.totalorder %v723, 15
        %vm788 = vcmp.eq.s32.totalorder %v724, 15
        %vm789 = vcmp.eq.s32.totalorder %v725, 15
        %vm790 = vcmp.eq.s32.totalorder %v726, 15
        %vm791 = vcmp.eq.s32.totalorder %v727, 15
        %vm792 = vcmp.eq.s32.totalorder %v728, 15
        %vm793 = vcmp.eq.s32.totalorder %v729, 15
        %vm794 = vcmp.eq.s32.totalorder %v730, 15
        %vm795 = vcmp.eq.s32.totalorder %v731, 15
        %vm796 = vcmp.eq.s32.totalorder %v732, 15
        %vm797 = vcmp.eq.s32.totalorder %v733, 15
        %vm798 = vcmp.eq.s32.totalorder %v734, 15
        %vm799 = vcmp.eq.s32.totalorder %v735, 15
        %vm800 = vcmp.eq.s32.totalorder %v736, 15
        %vm801 = vcmp.eq.s32.totalorder %v737, 15
        %vm802 = vcmp.eq.s32.totalorder %v738, 15
        %vm803 = vcmp.eq.s32.totalorder %v739, 15
        %vm804 = vcmp.eq.s32.totalorder %v740, 15
        %vm805 = vcmp.eq.s32.totalorder %v741, 15
        %vm806 = vcmp.eq.s32.totalorder %v742, 15
        %vm807 = vcmp.eq.s32.totalorder %v743, 15
        %vm808 = vcmp.eq.s32.totalorder %v744, 15
        %vm809 = vcmp.eq.s32.totalorder %v745, 15
        %vm842 = vcmask 1040384
        %v843 = vrot.slane %v297, 7
        %v844 = vrot.slane %v298, 7
        %v845 = vsel %vm842, %v843, %v844
        %v846 = vrot.slane %v299, 7
        %v847 = vsel %vm842, %v844, %v846
        %v848 = vrot.slane %v300, 7
        %v849 = vsel %vm842, %v846, %v848
        %v850 = vrot.slane %v301, 7
        %v851 = vsel %vm842, %v848, %v850
        %v852 = vrot.slane %v302, 7
        %v853 = vsel %vm842, %v850, %v852
        %v854 = vrot.slane %v303, 7
        %v855 = vsel %vm842, %v852, %v854
        %v856 = vrot.slane %v304, 7
        %v857 = vsel %vm842, %v854, %v856
        %v858 = vrot.slane %v305, 7
        %v859 = vsel %vm842, %v856, %v858
        %v860 = vrot.slane %v306, 7
        %v861 = vsel %vm842, %v858, %v860
        %v862 = vrot.slane %v307, 7
        %v863 = vsel %vm842, %v860, %v862
        %v864 = vrot.slane %v308, 7
        %v865 = vsel %vm842, %v862, %v864
        %v866 = vrot.slane %v309, 7
        %v867 = vsel %vm842, %v864, %v866
        %v868 = vrot.slane %v310, 7
        %v869 = vsel %vm842, %v866, %v868
        %v870 = vrot.slane %v311, 7
        %v871 = vsel %vm842, %v868, %v870
        %v872 = vrot.slane %v312, 7
        %v873 = vsel %vm842, %v870, %v872
        %v874 = vrot.slane %v313, 7
        %v875 = vsel %vm842, %v872, %v874
        %v876 = vrot.slane %v314, 7
        %v877 = vsel %vm842, %v874, %v876
        %v878 = vrot.slane %v315, 7
        %v879 = vsel %vm842, %v876, %v878
        %v880 = vrot.slane %v316, 7
        %v881 = vsel %vm842, %v878, %v880
        %v882 = vrot.slane %v317, 7
        %v883 = vsel %vm842, %v880, %v882
        %v884 = vrot.slane %v318, 7
        %v885 = vsel %vm842, %v882, %v884
        %v886 = vrot.slane %v319, 7
        %v887 = vsel %vm842, %v884, %v886
        %v888 = vrot.slane %v320, 7
        %v889 = vsel %vm842, %v886, %v888
        %v890 = vrot.slane %v321, 7
        %v891 = vsel %vm842, %v888, %v890
        %v892 = vrot.slane %v322, 7
        %v893 = vsel %vm842, %v890, %v892
        %v894 = vrot.slane %v323, 7
        %v895 = vsel %vm842, %v892, %v894
        %v896 = vrot.slane %v324, 7
        %v897 = vsel %vm842, %v894, %v896
        %v898 = vrot.slane %v325, 7
        %v899 = vsel %vm842, %v896, %v898
        %v900 = vrot.slane %v326, 7
        %v901 = vsel %vm842, %v898, %v900
        %v902 = vrot.slane %v327, 7
        %v903 = vsel %vm842, %v900, %v902
        %v904 = vrot.slane %v328, 7
        %v905 = vsel %vm842, %v902, %v904
        %v938 = vsel %vm842, 0.0, %v843
        %vm939 = vcmask 1046528
        %v940 = vrot.slane %v297, 1
        %v941 = vrot.slane %v298, 1
        %v942 = vsel %vm939, %v940, %v941
        %v943 = vrot.slane %v299, 1
        %v944 = vsel %vm939, %v941, %v943
        %v945 = vrot.slane %v300, 1
        %v946 = vsel %vm939, %v943, %v945
        %v947 = vrot.slane %v301, 1
        %v948 = vsel %vm939, %v945, %v947
        %v949 = vrot.slane %v302, 1
        %v950 = vsel %vm939, %v947, %v949
        %v951 = vrot.slane %v303, 1
        %v952 = vsel %vm939, %v949, %v951
        %v953 = vrot.slane %v304, 1
        %v954 = vsel %vm939, %v951, %v953
        %v955 = vrot.slane %v305, 1
        %v956 = vsel %vm939, %v953, %v955
        %v957 = vrot.slane %v306, 1
        %v958 = vsel %vm939, %v955, %v957
        %v959 = vrot.slane %v307, 1
        %v960 = vsel %vm939, %v957, %v959
        %v961 = vrot.slane %v308, 1
        %v962 = vsel %vm939, %v959, %v961
        %v963 = vrot.slane %v309, 1
        %v964 = vsel %vm939, %v961, %v963
        %v965 = vrot.slane %v310, 1
        %v966 = vsel %vm939, %v963, %v965
        %v967 = vrot.slane %v311, 1
        %v968 = vsel %vm939, %v965, %v967
        %v969 = vrot.slane %v312, 1
        %v970 = vsel %vm939, %v967, %v969
        %v971 = vrot.slane %v313, 1
        %v972 = vsel %vm939, %v969, %v971
        %v973 = vrot.slane %v314, 1
        %v974 = vsel %vm939, %v971, %v973
        %v975 = vrot.slane %v315, 1
        %v976 = vsel %vm939, %v973, %v975
        %v977 = vrot.slane %v316, 1
        %v978 = vsel %vm939, %v975, %v977
        %v979 = vrot.slane %v317, 1
        %v980 = vsel %vm939, %v977, %v979
        %v981 = vrot.slane %v318, 1
        %v982 = vsel %vm939, %v979, %v981
        %v983 = vrot.slane %v319, 1
        %v984 = vsel %vm939, %v981, %v983
        %v985 = vrot.slane %v320, 1
        %v986 = vsel %vm939, %v983, %v985
        %v987 = vrot.slane %v321, 1
        %v988 = vsel %vm939, %v985, %v987
        %v989 = vrot.slane %v322, 1
        %v990 = vsel %vm939, %v987, %v989
        %v991 = vrot.slane %v323, 1
        %v992 = vsel %vm939, %v989, %v991
        %v993 = vrot.slane %v324, 1
        %v994 = vsel %vm939, %v991, %v993
        %v995 = vrot.slane %v325, 1
        %v996 = vsel %vm939, %v993, %v995
        %v997 = vrot.slane %v326, 1
        %v998 = vsel %vm939, %v995, %v997
        %v999 = vrot.slane %v327, 1
        %v1000 = vsel %vm939, %v997, %v999
        %v1001 = vrot.slane %v328, 1
        %v1002 = vsel %vm939, %v999, %v1001
        %v1035 = vsel %vm939, %v1001, 0.0
        %v1036 = vsel %vm746, 1, 0
        %v1037 = vsel %vm747, 1, 0
        %v1038 = vsel %vm748, 1, 0
        %v1039 = vsel %vm749, 1, 0
        %v1040 = vsel %vm750, 1, 0
        %v1041 = vsel %vm751, 1, 0
        %v1042 = vsel %vm752, 1, 0
        %v1043 = vsel %vm753, 1, 0
        %v1044 = vsel %vm754, 1, 0
        %v1045 = vsel %vm755, 1, 0
        %v1046 = vsel %vm756, 1, 0
        %v1047 = vsel %vm757, 1, 0
        %v1048 = vsel %vm758, 1, 0
        %v1049 = vsel %vm759, 1, 0
        %v1050 = vsel %vm760, 1, 0
        %v1051 = vsel %vm761, 1, 0
        %v1052 = vsel %vm762, 1, 0
        %v1053 = vsel %vm763, 1, 0
        %v1054 = vsel %vm764, 1, 0
        %v1055 = vsel %vm765, 1, 0
        %v1056 = vsel %vm766, 1, 0
        %v1057 = vsel %vm767, 1, 0
        %v1058 = vsel %vm768, 1, 0
        %v1059 = vsel %vm769, 1, 0
        %v1060 = vsel %vm770, 1, 0
        %v1061 = vsel %vm771, 1, 0
        %v1062 = vsel %vm772, 1, 0
        %v1063 = vsel %vm773, 1, 0
        %v1064 = vsel %vm774, 1, 0
        %v1065 = vsel %vm775, 1, 0
        %v1066 = vsel %vm776, 1, 0
        %v1067 = vsel %vm777, 1, 0
        %vm1068 = vcmp.eq.s32.totalorder %v1036, 1
        %vm1069 = vcmp.eq.s32.totalorder %v1037, 1
        %vm1070 = vcmp.eq.s32.totalorder %v1038, 1
        %vm1071 = vcmp.eq.s32.totalorder %v1039, 1
        %vm1072 = vcmp.eq.s32.totalorder %v1040, 1
        %vm1073 = vcmp.eq.s32.totalorder %v1041, 1
        %vm1074 = vcmp.eq.s32.totalorder %v1042, 1
        %vm1075 = vcmp.eq.s32.totalorder %v1043, 1
        %vm1076 = vcmp.eq.s32.totalorder %v1044, 1
        %vm1077 = vcmp.eq.s32.totalorder %v1045, 1
        %vm1078 = vcmp.eq.s32.totalorder %v1046, 1
        %vm1079 = vcmp.eq.s32.totalorder %v1047, 1
        %vm1080 = vcmp.eq.s32.totalorder %v1048, 1
        %vm1081 = vcmp.eq.s32.totalorder %v1049, 1
        %vm1082 = vcmp.eq.s32.totalorder %v1050, 1
        %vm1083 = vcmp.eq.s32.totalorder %v1051, 1
        %vm1084 = vcmp.eq.s32.totalorder %v1052, 1
        %vm1085 = vcmp.eq.s32.totalorder %v1053, 1
        %vm1086 = vcmp.eq.s32.totalorder %v1054, 1
        %vm1087 = vcmp.eq.s32.totalorder %v1055, 1
        %vm1088 = vcmp.eq.s32.totalorder %v1056, 1
        %vm1089 = vcmp.eq.s32.totalorder %v1057, 1
        %vm1090 = vcmp.eq.s32.totalorder %v1058, 1
        %vm1091 = vcmp.eq.s32.totalorder %v1059, 1
        %vm1092 = vcmp.eq.s32.totalorder %v1060, 1
        %vm1093 = vcmp.eq.s32.totalorder %v1061, 1
        %vm1094 = vcmp.eq.s32.totalorder %v1062, 1
        %vm1095 = vcmp.eq.s32.totalorder %v1063, 1
        %vm1096 = vcmp.eq.s32.totalorder %v1064, 1
        %vm1097 = vcmp.eq.s32.totalorder %v1065, 1
        %vm1098 = vcmp.eq.s32.totalorder %v1066, 1
        %vm1099 = vcmp.eq.s32.totalorder %v1067, 1
        %v1100 = vsel %vm1068, 0.0, %v938
        %v1101 = vsel %vm1069, 0.0, %v845
        %v1102 = vsel %vm1070, 0.0, %v847
        %v1103 = vsel %vm1071, 0.0, %v849
        %v1104 = vsel %vm1072, 0.0, %v851
        %v1105 = vsel %vm1073, 0.0, %v853
        %v1106 = vsel %vm1074, 0.0, %v855
        %v1107 = vsel %vm1075, 0.0, %v857
        %v1108 = vsel %vm1076, 0.0, %v859
        %v1109 = vsel %vm1077, 0.0, %v861
        %v1110 = vsel %vm1078, 0.0, %v863
        %v1111 = vsel %vm1079, 0.0, %v865
        %v1112 = vsel %vm1080, 0.0, %v867
        %v1113 = vsel %vm1081, 0.0, %v869
        %v1114 = vsel %vm1082, 0.0, %v871
        %v1115 = vsel %vm1083, 0.0, %v873
        %v1116 = vsel %vm1084, 0.0, %v875
        %v1117 = vsel %vm1085, 0.0, %v877
        %v1118 = vsel %vm1086, 0.0, %v879
        %v1119 = vsel %vm1087, 0.0, %v881
        %v1120 = vsel %vm1088, 0.0, %v883
        %v1121 = vsel %vm1089, 0.0, %v885
        %v1122 = vsel %vm1090, 0.0, %v887
        %v1123 = vsel %vm1091, 0.0, %v889
        %v1124 = vsel %vm1092, 0.0, %v891
        %v1125 = vsel %vm1093, 0.0, %v893
        %v1126 = vsel %vm1094, 0.0, %v895
        %v1127 = vsel %vm1095, 0.0, %v897
        %v1128 = vsel %vm1096, 0.0, %v899
        %v1129 = vsel %vm1097, 0.0, %v901
        %v1130 = vsel %vm1098, 0.0, %v903
        %v1131 = vsel %vm1099, 0.0, %v905
        %v1132 = vsel %vm778, 1, 0
        %v1133 = vsel %vm779, 1, 0
        %v1134 = vsel %vm780, 1, 0
        %v1135 = vsel %vm781, 1, 0
        %v1136 = vsel %vm782, 1, 0
        %v1137 = vsel %vm783, 1, 0
        %v1138 = vsel %vm784, 1, 0
        %v1139 = vsel %vm785, 1, 0
        %v1140 = vsel %vm786, 1, 0
        %v1141 = vsel %vm787, 1, 0
        %v1142 = vsel %vm788, 1, 0
        %v1143 = vsel %vm789, 1, 0
        %v1144 = vsel %vm790, 1, 0
        %v1145 = vsel %vm791, 1, 0
        %v1146 = vsel %vm792, 1, 0
        %v1147 = vsel %vm793, 1, 0
        %v1148 = vsel %vm794, 1, 0
        %v1149 = vsel %vm795, 1, 0
        %v1150 = vsel %vm796, 1, 0
        %v1151 = vsel %vm797, 1, 0
        %v1152 = vsel %vm798, 1, 0
        %v1153 = vsel %vm799, 1, 0
        %v1154 = vsel %vm800, 1, 0
        %v1155 = vsel %vm801, 1, 0
        %v1156 = vsel %vm802, 1, 0
        %v1157 = vsel %vm803, 1, 0
        %v1158 = vsel %vm804, 1, 0
        %v1159 = vsel %vm805, 1, 0
        %v1160 = vsel %vm806, 1, 0
        %v1161 = vsel %vm807, 1, 0
        %v1162 = vsel %vm808, 1, 0
        %v1163 = vsel %vm809, 1, 0
        %vm1164 = vcmp.eq.s32.totalorder %v1132, 1
        %vm1165 = vcmp.eq.s32.totalorder %v1133, 1
        %vm1166 = vcmp.eq.s32.totalorder %v1134, 1
        %vm1167 = vcmp.eq.s32.totalorder %v1135, 1
        %vm1168 = vcmp.eq.s32.totalorder %v1136, 1
        %vm1169 = vcmp.eq.s32.totalorder %v1137, 1
        %vm1170 = vcmp.eq.s32.totalorder %v1138, 1
        %vm1171 = vcmp.eq.s32.totalorder %v1139, 1
        %vm1172 = vcmp.eq.s32.totalorder %v1140, 1
        %vm1173 = vcmp.eq.s32.totalorder %v1141, 1
        %vm1174 = vcmp.eq.s32.totalorder %v1142, 1
        %vm1175 = vcmp.eq.s32.totalorder %v1143, 1
        %vm1176 = vcmp.eq.s32.totalorder %v1144, 1
        %vm1177 = vcmp.eq.s32.totalorder %v1145, 1
        %vm1178 = vcmp.eq.s32.totalorder %v1146, 1
        %vm1179 = vcmp.eq.s32.totalorder %v1147, 1
        %vm1180 = vcmp.eq.s32.totalorder %v1148, 1
        %vm1181 = vcmp.eq.s32.totalorder %v1149, 1
        %vm1182 = vcmp.eq.s32.totalorder %v1150, 1
        %vm1183 = vcmp.eq.s32.totalorder %v1151, 1
        %vm1184 = vcmp.eq.s32.totalorder %v1152, 1
        %vm1185 = vcmp.eq.s32.totalorder %v1153, 1
        %vm1186 = vcmp.eq.s32.totalorder %v1154, 1
        %vm1187 = vcmp.eq.s32.totalorder %v1155, 1
        %vm1188 = vcmp.eq.s32.totalorder %v1156, 1
        %vm1189 = vcmp.eq.s32.totalorder %v1157, 1
        %vm1190 = vcmp.eq.s32.totalorder %v1158, 1
        %vm1191 = vcmp.eq.s32.totalorder %v1159, 1
        %vm1192 = vcmp.eq.s32.totalorder %v1160, 1
        %vm1193 = vcmp.eq.s32.totalorder %v1161, 1
        %vm1194 = vcmp.eq.s32.totalorder %v1162, 1
        %vm1195 = vcmp.eq.s32.totalorder %v1163, 1
        %v1196 = vsel %vm1164, 0.0, %v942
        %v1197 = vsel %vm1165, 0.0, %v944
        %v1198 = vsel %vm1166, 0.0, %v946
        %v1199 = vsel %vm1167, 0.0, %v948
        %v1200 = vsel %vm1168, 0.0, %v950
        %v1201 = vsel %vm1169, 0.0, %v952
        %v1202 = vsel %vm1170, 0.0, %v954
        %v1203 = vsel %vm1171, 0.0, %v956
        %v1204 = vsel %vm1172, 0.0, %v958
        %v1205 = vsel %vm1173, 0.0, %v960
        %v1206 = vsel %vm1174, 0.0, %v962
        %v1207 = vsel %vm1175, 0.0, %v964
        %v1208 = vsel %vm1176, 0.0, %v966
        %v1209 = vsel %vm1177, 0.0, %v968
        %v1210 = vsel %vm1178, 0.0, %v970
        %v1211 = vsel %vm1179, 0.0, %v972
        %v1212 = vsel %vm1180, 0.0, %v974
        %v1213 = vsel %vm1181, 0.0, %v976
        %v1214 = vsel %vm1182, 0.0, %v978
        %v1215 = vsel %vm1183, 0.0, %v980
        %v1216 = vsel %vm1184, 0.0, %v982
        %v1217 = vsel %vm1185, 0.0, %v984
        %v1218 = vsel %vm1186, 0.0, %v986
        %v1219 = vsel %vm1187, 0.0, %v988
        %v1220 = vsel %vm1188, 0.0, %v990
        %v1221 = vsel %vm1189, 0.0, %v992
        %v1222 = vsel %vm1190, 0.0, %v994
        %v1223 = vsel %vm1191, 0.0, %v996
        %v1224 = vsel %vm1192, 0.0, %v998
        %v1225 = vsel %vm1193, 0.0, %v1000
        %v1226 = vsel %vm1194, 0.0, %v1002
        %v1227 = vsel %vm1195, 0.0, %v1035
        %v1228 = vld [vmem:[#allocation5] sm:$0xff]
        %v1229 = vld [vmem:[#allocation5 + $0x8] sm:$0xff]
        %v1230 = vld [vmem:[#allocation5 + $0x10] sm:$0xff]
        %v1231 = vld [vmem:[#allocation5 + $0x18] sm:$0xff]
        %v1232 = vld [vmem:[#allocation5 + $0x20] sm:$0xff]
        %v1233 = vld [vmem:[#allocation5 + $0x28] sm:$0xff]
        %v1234 = vld [vmem:[#allocation5 + $0x30] sm:$0xff]
        %v1235 = vld [vmem:[#allocation5 + $0x38] sm:$0xff]
        %v1236 = vld [vmem:[#allocation5 + $0x40] sm:$0xff]
        %v1237 = vld [vmem:[#allocation5 + $0x48] sm:$0xff]
        %v1238 = vld [vmem:[#allocation5 + $0x50] sm:$0xff]
        %v1239 = vld [vmem:[#allocation5 + $0x58] sm:$0xff]
        %v1240 = vld [vmem:[#allocation5 + $0x60] sm:$0xff]
        %v1241 = vld [vmem:[#allocation5 + $0x68] sm:$0xff]
        %v1242 = vld [vmem:[#allocation5 + $0x70] sm:$0xff]
        %v1243 = vld [vmem:[#allocation5 + $0x78] sm:$0xff]
        %v1244 = vld [vmem:[#allocation5 + $0x80] sm:$0xff]
        %v1245 = vld [vmem:[#allocation5 + $0x88] sm:$0xff]
        %v1246 = vld [vmem:[#allocation5 + $0x90] sm:$0xff]
        %v1247 = vld [vmem:[#allocation5 + $0x98] sm:$0xff]
        %v1248 = vld [vmem:[#allocation5 + $0xa0] sm:$0xff]
        %v1249 = vld [vmem:[#allocation5 + $0xa8] sm:$0xff]
        %v1250 = vld [vmem:[#allocation5 + $0xb0] sm:$0xff]
        %v1251 = vld [vmem:[#allocation5 + $0xb8] sm:$0xff]
        %v1252 = vld [vmem:[#allocation5 + $0xc0] sm:$0xff]
        %v1253 = vld [vmem:[#allocation5 + $0xc8] sm:$0xff]
        %v1254 = vld [vmem:[#allocation5 + $0xd0] sm:$0xff]
        %v1255 = vld [vmem:[#allocation5 + $0xd8] sm:$0xff]
        %v1256 = vld [vmem:[#allocation5 + $0xe0] sm:$0xff]
        %v1257 = vld [vmem:[#allocation5 + $0xe8] sm:$0xff]
        %v1258 = vld [vmem:[#allocation5 + $0xf0] sm:$0xff]
        %v1259 = vld [vmem:[#allocation5 + $0xf8] sm:$0xff]
        %v1260 = vld [vmem:[#allocation5 + $0x100] sm:$0xff]
        %v1261 = vld [vmem:[#allocation5 + $0x108] sm:$0xff]
        %v1262 = vld [vmem:[#allocation5 + $0x110] sm:$0xff]
        %v1263 = vld [vmem:[#allocation5 + $0x118] sm:$0xff]
        %v1264 = vld [vmem:[#allocation5 + $0x120] sm:$0xff]
        %v1265 = vld [vmem:[#allocation5 + $0x128] sm:$0xff]
        %v1266 = vld [vmem:[#allocation5 + $0x130] sm:$0xff]
        %v1267 = vld [vmem:[#allocation5 + $0x138] sm:$0xff]
        %v1268 = vld [vmem:[#allocation5 + $0x140] sm:$0xff]
        %v1269 = vld [vmem:[#allocation5 + $0x148] sm:$0xff]
        %v1270 = vld [vmem:[#allocation5 + $0x150] sm:$0xff]
        %v1271 = vld [vmem:[#allocation5 + $0x158] sm:$0xff]
        %v1272 = vld [vmem:[#allocation5 + $0x160] sm:$0xff]
        %v1273 = vld [vmem:[#allocation5 + $0x168] sm:$0xff]
        %v1274 = vld [vmem:[#allocation5 + $0x170] sm:$0xff]
        %v1275 = vld [vmem:[#allocation5 + $0x178] sm:$0xff]
        %1276 = vmatprep.subr.mxu0 0.0
        %1277 = vmatpush1.msra.mxu0 %v1228
        %1278 = vmatprep.subr.mxu0 0.0
        %1279 = vmatpush1.msra.mxu0 %v1229
        %1280 = vmatprep.subr.mxu0 0.0
        %1281 = vmatpush1.msra.mxu0 %v1230
        %1282 = vmatprep.subr.mxu0 0.0
        %1283 = vmatpush1.msra.mxu0 %v1231
        %1284 = vmatprep.subr.mxu0 0.0
        %1285 = vmatpush1.msra.mxu0 %v1232
        %1286 = vmatprep.subr.mxu0 0.0
        %1287 = vmatpush1.msra.mxu0 %v1233
        %1288 = vmatprep.subr.mxu0 0.0
        %1289 = vmatpush1.msra.mxu0 %v1234
        %1290 = vmatprep.subr.mxu0 0.0
        %1291 = vmatpush1.msra.mxu0 %v1235
        %1292 = vmatprep.subr.mxu0 0.0
        %1293 = vmatpush1.msra.mxu0 %v1236
        %1294 = vmatprep.subr.mxu0 0.0
        %1295 = vmatpush1.msra.mxu0 %v1237
        %1296 = vmatprep.subr.mxu0 0.0
        %1297 = vmatpush1.msra.mxu0 %v1238
        %1298 = vmatprep.subr.mxu0 0.0
        %1299 = vmatpush1.msra.mxu0 %v1239
        %1300 = vmatprep.subr.mxu0 0.0
        %1301 = vmatpush1.msra.mxu0 %v1240
        %1302 = vmatprep.subr.mxu0 0.0
        %1303 = vmatpush1.msra.mxu0 %v1241
        %1304 = vmatprep.subr.mxu0 0.0
        %1305 = vmatpush1.msra.mxu0 %v1242
        %1306 = vmatprep.subr.mxu0 0.0
        %1307 = vmatpush1.msra.mxu0 %v1243
        %1308 = vmatprep.subr.mxu0 0.0
        %1309 = vmatpush1.msra.mxu0 %v1244
        %1310 = vmatprep.subr.mxu0 0.0
        %1311 = vmatpush1.msra.mxu0 %v1245
        %1312 = vmatprep.subr.mxu0 0.0
        %1313 = vmatpush1.msra.mxu0 %v1246
        %1314 = vmatprep.subr.mxu0 0.0
        %1315 = vmatpush1.msra.mxu0 %v1247
        %1316 = vmatprep.subr.mxu0 0.0
        %1317 = vmatpush1.msra.mxu0 %v1248
        %1318 = vmatprep.subr.mxu0 0.0
        %1319 = vmatpush1.msra.mxu0 %v1249
        %1320 = vmatprep.subr.mxu0 0.0
        %1321 = vmatpush1.msra.mxu0 %v1250
        %1322 = vmatprep.subr.mxu0 0.0
        %1323 = vmatpush1.msra.mxu0 %v1251
        %1324 = vmatprep.subr.mxu0 0.0
        %1325 = vmatpush1.msra.mxu0 %v1252
        %1326 = vmatprep.subr.mxu0 0.0
        %1327 = vmatpush1.msra.mxu0 %v1253
        %1328 = vmatprep.subr.mxu0 0.0
        %1329 = vmatpush1.msra.mxu0 %v1254
        %1330 = vmatprep.subr.mxu0 0.0
        %1331 = vmatpush1.msra.mxu0 %v1255
        %1332 = vmatprep.subr.mxu0 0.0
        %1333 = vmatpush1.msra.mxu0 %v1256
        %1334 = vmatprep.subr.mxu0 0.0
        %1335 = vmatpush1.msra.mxu0 %v1257
        %1336 = vmatprep.subr.mxu0 0.0
        %1337 = vmatpush1.msra.mxu0 %v1258
        %1338 = vmatprep.subr.mxu0 0.0
        %1339 = vmatpush1.msra.mxu0 %v1259
        %1340 = vmatprep.mubr.f32.mxu0 %v297
        %1341 = vmatmul.mubr.f32.gmra.mrb[0].mxu0 %v1100
        %v1342 = vpop.f32.mrb[0].mxu0
        %v1343 = vadd.f32 0.0, %v1342
        %v1344 = vpop.f32.mrb[0].mxu0
        %1345 = vmatprep.mubr.f32.mxu0 %v298
        %1346 = vmatmul.mubr.f32.gmra.mrb[0].mxu0 %v1101
        %v1347 = vpop.f32.mrb[0].mxu0
        %v1348 = vadd.f32 0.0, %v1347
        %v1349 = vpop.f32.mrb[0].mxu0
        %1350 = vmatprep.mubr.f32.mxu0 %v299
        %1351 = vmatmul.mubr.f32.gmra.mrb[0].mxu0 %v1102
        %v1352 = vpop.f32.mrb[0].mxu0
        %v1353 = vadd.f32 0.0, %v1352
        %v1354 = vpop.f32.mrb[0].mxu0
        %1355 = vmatprep.mubr.f32.mxu0 %v300
        %1356 = vmatmul.mubr.f32.gmra.mrb[0].mxu0 %v1103
        %v1357 = vpop.f32.mrb[0].mxu0
        %v1358 = vadd.f32 0.0, %v1357
        %v1359 = vpop.f32.mrb[0].mxu0
        %1360 = vmatprep.mubr.f32.mxu0 %v301
        %1361 = vmatmul.mubr.f32.gmra.mrb[0].mxu0 %v1104
        %v1362 = vpop.f32.mrb[0].mxu0
        %v1363 = vadd.f32 0.0, %v1362
        %v1364 = vpop.f32.mrb[0].mxu0
        %1365 = vmatprep.mubr.f32.mxu0 %v302
        %1366 = vmatmul.mubr.f32.gmra.mrb[0].mxu0 %v1105
        %v1367 = vpop.f32.mrb[0].mxu0
        %v1368 = vadd.f32 0.0, %v1367
        %v1369 = vpop.f32.mrb[0].mxu0
        %1370 = vmatprep.mubr.f32.mxu0 %v303
        %1371 = vmatmul.mubr.f32.gmra.mrb[0].mxu0 %v1106
        %v1372 = vpop.f32.mrb[0].mxu0
        %v1373 = vadd.f32 0.0, %v1372
        %v1374 = vpop.f32.mrb[0].mxu0
        %1375 = vmatprep.mubr.f32.mxu0 %v304
        %1376 = vmatmul.mubr.f32.gmra.mrb[0].mxu0 %v1107
        %v1377 = vpop.f32.mrb[0].mxu0
        %v1378 = vadd.f32 0.0, %v1377
        %v1379 = vpop.f32.mrb[0].mxu0
        %1380 = vmatprep.mubr.f32.mxu0 %v305
        %1381 = vmatmul.mubr.f32.gmra.mrb[0].mxu0 %v1108
        %v1382 = vpop.f32.mrb[0].mxu0
        %v1383 = vadd.f32 0.0, %v1382
        %v1384 = vpop.f32.mrb[0].mxu0
        %1385 = vmatprep.mubr.f32.mxu0 %v306
        %1386 = vmatmul.mubr.f32.gmra.mrb[0].mxu0 %v1109
        %v1387 = vpop.f32.mrb[0].mxu0
        %v1388 = vadd.f32 0.0, %v1387
        %v1389 = vpop.f32.mrb[0].mxu0
        %1390 = vmatprep.mubr.f32.mxu0 %v307
        %1391 = vmatmul.mubr.f32.gmra.mrb[0].mxu0 %v1110
        %v1392 = vpop.f32.mrb[0].mxu0
        %v1393 = vadd.f32 0.0, %v1392
        %v1394 = vpop.f32.mrb[0].mxu0
        %1395 = vmatprep.mubr.f32.mxu0 %v308
        %1396 = vmatmul.mubr.f32.gmra.mrb[0].mxu0 %v1111
        %v1397 = vpop.f32.mrb[0].mxu0
        %v1398 = vadd.f32 0.0, %v1397
        %v1399 = vpop.f32.mrb[0].mxu0
        %1400 = vmatprep.mubr.f32.mxu0 %v309
        %1401 = vmatmul.mubr.f32.gmra.mrb[0].mxu0 %v1112
        %v1402 = vpop.f32.mrb[0].mxu0
        %v1403 = vadd.f32 0.0, %v1402
        %v1404 = vpop.f32.mrb[0].mxu0
        %1405 = vmatprep.mubr.f32.mxu0 %v310
        %1406 = vmatmul.mubr.f32.gmra.mrb[0].mxu0 %v1113
        %v1407 = vpop.f32.mrb[0].mxu0
        %v1408 = vadd.f32 0.0, %v1407
        %v1409 = vpop.f32.mrb[0].mxu0
        %1410 = vmatprep.mubr.f32.mxu0 %v311
        %1411 = vmatmul.mubr.f32.gmra.mrb[0].mxu0 %v1114
        %v1412 = vpop.f32.mrb[0].mxu0
        %v1413 = vadd.f32 0.0, %v1412
        %v1414 = vpop.f32.mrb[0].mxu0
        %1415 = vmatprep.mubr.f32.mxu0 %v312
        %1416 = vmatmul.mubr.f32.gmra.mrb[0].mxu0 %v1115
        %v1417 = vpop.f32.mrb[0].mxu0
        %v1418 = vadd.f32 0.0, %v1417
        %v1419 = vpop.f32.mrb[0].mxu0
        %1420 = vmatprep.mubr.f32.mxu0 %v313
        %1421 = vmatmul.mubr.f32.gmra.mrb[0].mxu0 %v1116
        %v1422 = vpop.f32.mrb[0].mxu0
        %v1423 = vadd.f32 0.0, %v1422
        %v1424 = vpop.f32.mrb[0].mxu0
        %1425 = vmatprep.mubr.f32.mxu0 %v314
        %1426 = vmatmul.mubr.f32.gmra.mrb[0].mxu0 %v1117
        %v1427 = vpop.f32.mrb[0].mxu0
        %v1428 = vadd.f32 0.0, %v1427
        %v1429 = vpop.f32.mrb[0].mxu0
        %1430 = vmatprep.mubr.f32.mxu0 %v315
        %1431 = vmatmul.mubr.f32.gmra.mrb[0].mxu0 %v1118
        %v1432 = vpop.f32.mrb[0].mxu0
        %v1433 = vadd.f32 0.0, %v1432
        %v1434 = vpop.f32.mrb[0].mxu0
        %1435 = vmatprep.mubr.f32.mxu0 %v316
        %1436 = vmatmul.mubr.f32.gmra.mrb[0].mxu0 %v1119
        %v1437 = vpop.f32.mrb[0].mxu0
        %v1438 = vadd.f32 0.0, %v1437
        %v1439 = vpop.f32.mrb[0].mxu0
        %1440 = vmatprep.mubr.f32.mxu0 %v317
        %1441 = vmatmul.mubr.f32.gmra.mrb[0].mxu0 %v1120
        %v1442 = vpop.f32.mrb[0].mxu0
        %v1443 = vadd.f32 0.0, %v1442
        %v1444 = vpop.f32.mrb[0].mxu0
        %1445 = vmatprep.mubr.f32.mxu0 %v318
        %1446 = vmatmul.mubr.f32.gmra.mrb[0].mxu0 %v1121
        %v1447 = vpop.f32.mrb[0].mxu0
        %v1448 = vadd.f32 0.0, %v1447
        %v1449 = vpop.f32.mrb[0].mxu0
        %1450 = vmatprep.mubr.f32.mxu0 %v319
        %1451 = vmatmul.mubr.f32.gmra.mrb[0].mxu0 %v1122
        %v1452 = vpop.f32.mrb[0].mxu0
        %v1453 = vadd.f32 0.0, %v1452
        %v1454 = vpop.f32.mrb[0].mxu0
        %1455 = vmatprep.mubr.f32.mxu0 %v320
        %1456 = vmatmul.mubr.f32.gmra.mrb[0].mxu0 %v1123
        %v1457 = vpop.f32.mrb[0].mxu0
        %v1458 = vadd.f32 0.0, %v1457
        %v1459 = vpop.f32.mrb[0].mxu0
        %1460 = vmatprep.mubr.f32.mxu0 %v321
        %1461 = vmatmul.mubr.f32.gmra.mrb[0].mxu0 %v1124
        %v1462 = vpop.f32.mrb[0].mxu0
        %v1463 = vadd.f32 0.0, %v1462
        %v1464 = vpop.f32.mrb[0].mxu0
        %1465 = vmatprep.mubr.f32.mxu0 %v322
        %1466 = vmatmul.mubr.f32.gmra.mrb[0].mxu0 %v1125
        %v1467 = vpop.f32.mrb[0].mxu0
        %v1468 = vadd.f32 0.0, %v1467
        %v1469 = vpop.f32.mrb[0].mxu0
        %1470 = vmatprep.mubr.f32.mxu0 %v323
        %1471 = vmatmul.mubr.f32.gmra.mrb[0].mxu0 %v1126
        %v1472 = vpop.f32.mrb[0].mxu0
        %v1473 = vadd.f32 0.0, %v1472
        %v1474 = vpop.f32.mrb[0].mxu0
        %1475 = vmatprep.mubr.f32.mxu0 %v324
        %1476 = vmatmul.mubr.f32.gmra.mrb[0].mxu0 %v1127
        %v1477 = vpop.f32.mrb[0].mxu0
        %v1478 = vadd.f32 0.0, %v1477
        %v1479 = vpop.f32.mrb[0].mxu0
        %1480 = vmatprep.mubr.f32.mxu0 %v325
        %1481 = vmatmul.mubr.f32.gmra.mrb[0].mxu0 %v1128
        %v1482 = vpop.f32.mrb[0].mxu0
        %v1483 = vadd.f32 0.0, %v1482
        %v1484 = vpop.f32.mrb[0].mxu0
        %1485 = vmatprep.mubr.f32.mxu0 %v326
        %1486 = vmatmul.mubr.f32.gmra.mrb[0].mxu0 %v1129
        %v1487 = vpop.f32.mrb[0].mxu0
        %v1488 = vadd.f32 0.0, %v1487
        %v1489 = vpop.f32.mrb[0].mxu0
        %1490 = vmatprep.mubr.f32.mxu0 %v327
        %1491 = vmatmul.mubr.f32.gmra.mrb[0].mxu0 %v1130
        %v1492 = vpop.f32.mrb[0].mxu0
        %v1493 = vpop.f32.mrb[0].mxu0
        %1494 = vmatprep.mubr.f32.mxu0 %v328
        %1495 = vmatmul.mubr.f32.gmra.mrb[0].mxu0 %v1131
        %v1496 = vpop.f32.mrb[0].mxu0
        %v1497 = vpop.f32.mrb[0].mxu0
        %1498 = vdwg.mxu0
        %1499 = vmatprep.subr.mxu0 0.0
        %1500 = vmatpush1.msra.mxu0 %v1260
        %1501 = vmatprep.subr.mxu0 0.0
        %1502 = vmatpush1.msra.mxu0 %v1261
        %1503 = vmatprep.subr.mxu0 0.0
        %1504 = vmatpush1.msra.mxu0 %v1262
        %1505 = vmatprep.subr.mxu0 0.0
        %1506 = vmatpush1.msra.mxu0 %v1263
        %1507 = vmatprep.subr.mxu0 0.0
        %1508 = vmatpush1.msra.mxu0 %v1264
        %1509 = vmatprep.subr.mxu0 0.0
        %1510 = vmatpush1.msra.mxu0 %v1265
        %1511 = vmatprep.subr.mxu0 0.0
        %1512 = vmatpush1.msra.mxu0 %v1266
        %1513 = vmatprep.subr.mxu0 0.0
        %1514 = vmatpush1.msra.mxu0 %v1267
        %1515 = vmatprep.subr.mxu0 0.0
        %1516 = vmatpush1.msra.mxu0 %v1268
        %1517 = vmatprep.subr.mxu0 0.0
        %1518 = vmatpush1.msra.mxu0 %v1269
        %1519 = vmatprep.subr.mxu0 0.0
        %1520 = vmatpush1.msra.mxu0 %v1270
        %1521 = vmatprep.subr.mxu0 0.0
        %1522 = vmatpush1.msra.mxu0 %v1271
        %1523 = vmatprep.subr.mxu0 0.0
        %1524 = vmatpush1.msra.mxu0 %v1272
        %1525 = vmatprep.subr.mxu0 0.0
        %1526 = vmatpush1.msra.mxu0 %v1273
        %1527 = vmatprep.subr.mxu0 0.0
        %1528 = vmatpush1.msra.mxu0 %v1274
        %1529 = vmatprep.subr.mxu0 0.0
        %1530 = vmatpush1.msra.mxu0 %v1275
        %1531 = vmatprep.subr.mxu0 0.0
        %1532 = vmatpush1.msra.mxu0 0.0
        %1533 = vmatprep.subr.mxu0 0.0
        %1534 = vmatpush1.msra.mxu0 0.0
        %1535 = vmatprep.subr.mxu0 0.0
        %1536 = vmatpush1.msra.mxu0 0.0
        %1537 = vmatprep.subr.mxu0 0.0
        %1538 = vmatpush1.msra.mxu0 0.0
        %1539 = vmatprep.subr.mxu0 0.0
        %1540 = vmatpush1.msra.mxu0 0.0
        %1541 = vmatprep.subr.mxu0 0.0
        %1542 = vmatpush1.msra.mxu0 0.0
        %1543 = vmatprep.subr.mxu0 0.0
        %1544 = vmatpush1.msra.mxu0 0.0
        %1545 = vmatprep.subr.mxu0 0.0
        %1546 = vmatpush1.msra.mxu0 0.0
        %1547 = vmatprep.subr.mxu0 0.0
        %1548 = vmatpush1.msra.mxu0 0.0
        %1549 = vmatprep.subr.mxu0 0.0
        %1550 = vmatpush1.msra.mxu0 0.0
        %1551 = vmatprep.subr.mxu0 0.0
        %1552 = vmatpush1.msra.mxu0 0.0
        %1553 = vmatprep.subr.mxu0 0.0
        %1554 = vmatpush1.msra.mxu0 0.0
        %1555 = vmatprep.subr.mxu0 0.0
        %1556 = vmatpush1.msra.mxu0 0.0
        %1557 = vmatprep.subr.mxu0 0.0
        %1558 = vmatpush1.msra.mxu0 0.0
        %1559 = vmatprep.subr.mxu0 0.0
        %1560 = vmatpush1.msra.mxu0 0.0
        %1561 = vmatprep.subr.mxu0 0.0
        %1562 = vmatpush1.msra.mxu0 0.0
        %1563 = vmatprep.mubr.f32.mxu0 0.0
        %1564 = vmatmul.mubr.f32.gmra.mrb[0].mxu0 %v1196
        %v1565 = vpop.f32.mrb[0].mxu0
        %v1566 = vadd.f32 %v1343, %v1565
        %v1567 = vpop.f32.mrb[0].mxu0
        %1568 = vmatprep.mubr.f32.mxu0 0.0
        %1569 = vmatmul.mubr.f32.gmra.mrb[0].mxu0 %v1197
        %v1570 = vpop.f32.mrb[0].mxu0
        %v1571 = vadd.f32 %v1348, %v1570
        %v1572 = vpop.f32.mrb[0].mxu0
        %1573 = vmatprep.mubr.f32.mxu0 0.0
        %1574 = vmatmul.mubr.f32.gmra.mrb[0].mxu0 %v1198
        %v1575 = vpop.f32.mrb[0].mxu0
        %v1576 = vadd.f32 %v1353, %v1575
        %v1577 = vpop.f32.mrb[0].mxu0
        %1578 = vmatprep.mubr.f32.mxu0 0.0
        %1579 = vmatmul.mubr.f32.gmra.mrb[0].mxu0 %v1199
        %v1580 = vpop.f32.mrb[0].mxu0
        %v1581 = vadd.f32 %v1358, %v1580
        %v1582 = vpop.f32.mrb[0].mxu0
        %1583 = vmatprep.mubr.f32.mxu0 0.0
        %1584 = vmatmul.mubr.f32.gmra.mrb[0].mxu0 %v1200
        %v1585 = vpop.f32.mrb[0].mxu0
        %v1586 = vadd.f32 %v1363, %v1585
        %v1587 = vpop.f32.mrb[0].mxu0
        %1588 = vmatprep.mubr.f32.mxu0 0.0
        %1589 = vmatmul.mubr.f32.gmra.mrb[0].mxu0 %v1201
        %v1590 = vpop.f32.mrb[0].mxu0
        %v1591 = vadd.f32 %v1368, %v1590
        %v1592 = vpop.f32.mrb[0].mxu0
        %1593 = vmatprep.mubr.f32.mxu0 0.0
        %1594 = vmatmul.mubr.f32.gmra.mrb[0].mxu0 %v1202
        %v1595 = vpop.f32.mrb[0].mxu0
        %v1596 = vadd.f32 %v1373, %v1595
        %v1597 = vpop.f32.mrb[0].mxu0
        %1598 = vmatprep.mubr.f32.mxu0 0.0
        %1599 = vmatmul.mubr.f32.gmra.mrb[0].mxu0 %v1203
        %v1600 = vpop.f32.mrb[0].mxu0
        %v1601 = vadd.f32 %v1378, %v1600
        %v1602 = vpop.f32.mrb[0].mxu0
        %1603 = vmatprep.mubr.f32.mxu0 0.0
        %1604 = vmatmul.mubr.f32.gmra.mrb[0].mxu0 %v1204
        %v1605 = vpop.f32.mrb[0].mxu0
        %v1606 = vadd.f32 %v1383, %v1605
        %v1607 = vpop.f32.mrb[0].mxu0
        %1608 = vmatprep.mubr.f32.mxu0 0.0
        %1609 = vmatmul.mubr.f32.gmra.mrb[0].mxu0 %v1205
        %v1610 = vpop.f32.mrb[0].mxu0
        %v1611 = vadd.f32 %v1388, %v1610
        %v1612 = vpop.f32.mrb[0].mxu0
        %1613 = vmatprep.mubr.f32.mxu0 0.0
        %1614 = vmatmul.mubr.f32.gmra.mrb[0].mxu0 %v1206
        %v1615 = vpop.f32.mrb[0].mxu0
        %v1616 = vadd.f32 %v1393, %v1615
        %v1617 = vpop.f32.mrb[0].mxu0
        %1618 = vmatprep.mubr.f32.mxu0 0.0
        %1619 = vmatmul.mubr.f32.gmra.mrb[0].mxu0 %v1207
        %v1620 = vpop.f32.mrb[0].mxu0
        %v1621 = vadd.f32 %v1398, %v1620
        %v1622 = vpop.f32.mrb[0].mxu0
        %1623 = vmatprep.mubr.f32.mxu0 0.0
        %1624 = vmatmul.mubr.f32.gmra.mrb[0].mxu0 %v1208
        %v1625 = vpop.f32.mrb[0].mxu0
        %v1626 = vadd.f32 %v1403, %v1625
        %v1627 = vpop.f32.mrb[0].mxu0
        %1628 = vmatprep.mubr.f32.mxu0 0.0
        %1629 = vmatmul.mubr.f32.gmra.mrb[0].mxu0 %v1209
        %v1630 = vpop.f32.mrb[0].mxu0
        %v1631 = vadd.f32 %v1408, %v1630
        %v1632 = vpop.f32.mrb[0].mxu0
        %1633 = vmatprep.mubr.f32.mxu0 0.0
        %1634 = vmatmul.mubr.f32.gmra.mrb[0].mxu0 %v1210
        %v1635 = vpop.f32.mrb[0].mxu0
        %v1636 = vadd.f32 %v1413, %v1635
        %v1637 = vpop.f32.mrb[0].mxu0
        %1638 = vmatprep.mubr.f32.mxu0 0.0
        %1639 = vmatmul.mubr.f32.gmra.mrb[0].mxu0 %v1211
        %v1640 = vpop.f32.mrb[0].mxu0
        %v1641 = vadd.f32 %v1418, %v1640
        %v1642 = vpop.f32.mrb[0].mxu0
        %1643 = vmatprep.mubr.f32.mxu0 0.0
        %1644 = vmatmul.mubr.f32.gmra.mrb[0].mxu0 %v1212
        %v1645 = vpop.f32.mrb[0].mxu0
        %v1646 = vadd.f32 %v1423, %v1645
        %v1647 = vpop.f32.mrb[0].mxu0
        %1648 = vmatprep.mubr.f32.mxu0 0.0
        %1649 = vmatmul.mubr.f32.gmra.mrb[0].mxu0 %v1213
        %v1650 = vpop.f32.mrb[0].mxu0
        %v1651 = vadd.f32 %v1428, %v1650
        %v1652 = vpop.f32.mrb[0].mxu0
        %1653 = vmatprep.mubr.f32.mxu0 0.0
        %1654 = vmatmul.mubr.f32.gmra.mrb[0].mxu0 %v1214
        %v1655 = vpop.f32.mrb[0].mxu0
        %v1656 = vadd.f32 %v1433, %v1655
        %v1657 = vpop.f32.mrb[0].mxu0
        %1658 = vmatprep.mubr.f32.mxu0 0.0
        %1659 = vmatmul.mubr.f32.gmra.mrb[0].mxu0 %v1215
        %v1660 = vpop.f32.mrb[0].mxu0
        %v1661 = vadd.f32 %v1438, %v1660
        %v1662 = vpop.f32.mrb[0].mxu0
        %1663 = vmatprep.mubr.f32.mxu0 0.0
        %1664 = vmatmul.mubr.f32.gmra.mrb[0].mxu0 %v1216
        %v1665 = vpop.f32.mrb[0].mxu0
        %v1666 = vadd.f32 %v1443, %v1665
        %v1667 = vpop.f32.mrb[0].mxu0
        %1668 = vmatprep.mubr.f32.mxu0 0.0
        %1669 = vmatmul.mubr.f32.gmra.mrb[0].mxu0 %v1217
        %v1670 = vpop.f32.mrb[0].mxu0
        %v1671 = vadd.f32 %v1448, %v1670
        %v1672 = vpop.f32.mrb[0].mxu0
        %1673 = vmatprep.mubr.f32.mxu0 0.0
        %1674 = vmatmul.mubr.f32.gmra.mrb[0].mxu0 %v1218
        %v1675 = vpop.f32.mrb[0].mxu0
        %v1676 = vadd.f32 %v1453, %v1675
        %v1677 = vpop.f32.mrb[0].mxu0
        %1678 = vmatprep.mubr.f32.mxu0 0.0
        %1679 = vmatmul.mubr.f32.gmra.mrb[0].mxu0 %v1219
        %v1680 = vpop.f32.mrb[0].mxu0
        %v1681 = vadd.f32 %v1458, %v1680
        %v1682 = vpop.f32.mrb[0].mxu0
        %1683 = vmatprep.mubr.f32.mxu0 0.0
        %1684 = vmatmul.mubr.f32.gmra.mrb[0].mxu0 %v1220
        %v1685 = vpop.f32.mrb[0].mxu0
        %v1686 = vadd.f32 %v1463, %v1685
        %v1687 = vpop.f32.mrb[0].mxu0
        %1688 = vmatprep.mubr.f32.mxu0 0.0
        %1689 = vmatmul.mubr.f32.gmra.mrb[0].mxu0 %v1221
        %v1690 = vpop.f32.mrb[0].mxu0
        %v1691 = vadd.f32 %v1468, %v1690
        %v1692 = vpop.f32.mrb[0].mxu0
        %1693 = vmatprep.mubr.f32.mxu0 0.0
        %1694 = vmatmul.mubr.f32.gmra.mrb[0].mxu0 %v1222
        %v1695 = vpop.f32.mrb[0].mxu0
        %v1696 = vadd.f32 %v1473, %v1695
        %v1697 = vpop.f32.mrb[0].mxu0
        %1698 = vmatprep.mubr.f32.mxu0 0.0
        %1699 = vmatmul.mubr.f32.gmra.mrb[0].mxu0 %v1223
        %v1700 = vpop.f32.mrb[0].mxu0
        %v1701 = vadd.f32 %v1478, %v1700
        %v1702 = vpop.f32.mrb[0].mxu0
        %1703 = vmatprep.mubr.f32.mxu0 0.0
        %1704 = vmatmul.mubr.f32.gmra.mrb[0].mxu0 %v1224
        %v1705 = vpop.f32.mrb[0].mxu0
        %v1706 = vadd.f32 %v1483, %v1705
        %v1707 = vpop.f32.mrb[0].mxu0
        %1708 = vmatprep.mubr.f32.mxu0 0.0
        %1709 = vmatmul.mubr.f32.gmra.mrb[0].mxu0 %v1225
        %v1710 = vpop.f32.mrb[0].mxu0
        %v1711 = vadd.f32 %v1488, %v1710
        %v1712 = vpop.f32.mrb[0].mxu0
        %1713 = vmatprep.mubr.f32.mxu0 0.0
        %1714 = vmatmul.mubr.f32.gmra.mrb[0].mxu0 %v1226
        %v1715 = vpop.f32.mrb[0].mxu0
        %v1716 = vpop.f32.mrb[0].mxu0
        %1717 = vmatprep.mubr.f32.mxu0 0.0
        %1718 = vmatmul.mubr.f32.gmra.mrb[0].mxu0 %v1227
        %v1719 = vpop.f32.mrb[0].mxu0
        %v1720 = vpop.f32.mrb[0].mxu0
        %1721 = vdwg.mxu0
        %s1722 = scalar_lea.vmem [#allocation5], 384
        %v1723 = vld [vmem:[%s1722] sm:$0xff]
        %v1724 = vld [vmem:[%s1722 + $0x8] sm:$0xff]
        %v1725 = vld [vmem:[%s1722 + $0x10] sm:$0xff]
        %v1726 = vld [vmem:[%s1722 + $0x18] sm:$0xff]
        %v1727 = vld [vmem:[%s1722 + $0x20] sm:$0xff]
        %v1728 = vld [vmem:[%s1722 + $0x28] sm:$0xff]
        %v1729 = vld [vmem:[%s1722 + $0x30] sm:$0xff]
        %v1730 = vld [vmem:[%s1722 + $0x38] sm:$0xff]
        %v1731 = vld [vmem:[%s1722 + $0x40] sm:$0xff]
        %v1732 = vld [vmem:[%s1722 + $0x48] sm:$0xff]
        %v1733 = vld [vmem:[%s1722 + $0x50] sm:$0xff]
        %v1734 = vld [vmem:[%s1722 + $0x58] sm:$0xff]
        %v1735 = vld [vmem:[%s1722 + $0x60] sm:$0xff]
        %v1736 = vld [vmem:[%s1722 + $0x68] sm:$0xff]
        %v1737 = vld [vmem:[%s1722 + $0x70] sm:$0xff]
        %v1738 = vld [vmem:[%s1722 + $0x78] sm:$0xff]
        %v1739 = vld [vmem:[%s1722 + $0x80] sm:$0xff]
        %v1740 = vld [vmem:[%s1722 + $0x88] sm:$0xff]
        %v1741 = vld [vmem:[%s1722 + $0x90] sm:$0xff]
        %v1742 = vld [vmem:[%s1722 + $0x98] sm:$0xff]
        %v1743 = vld [vmem:[%s1722 + $0xa0] sm:$0xff]
        %v1744 = vld [vmem:[%s1722 + $0xa8] sm:$0xff]
        %v1745 = vld [vmem:[%s1722 + $0xb0] sm:$0xff]
        %v1746 = vld [vmem:[%s1722 + $0xb8] sm:$0xff]
        %v1747 = vld [vmem:[%s1722 + $0xc0] sm:$0xff]
        %v1748 = vld [vmem:[%s1722 + $0xc8] sm:$0xff]
        %v1749 = vld [vmem:[%s1722 + $0xd0] sm:$0xff]
        %v1750 = vld [vmem:[%s1722 + $0xd8] sm:$0xff]
        %v1751 = vld [vmem:[%s1722 + $0xe0] sm:$0xff]
        %v1752 = vld [vmem:[%s1722 + $0xe8] sm:$0xff]
        %v1753 = vld [vmem:[%s1722 + $0xf0] sm:$0xff]
        %v1754 = vld [vmem:[%s1722 + $0xf8] sm:$0xff]
        %v1755 = vld [vmem:[%s1722 + $0x100] sm:$0xff]
        %v1756 = vld [vmem:[%s1722 + $0x108] sm:$0xff]
        %v1757 = vld [vmem:[%s1722 + $0x110] sm:$0xff]
        %v1758 = vld [vmem:[%s1722 + $0x118] sm:$0xff]
        %v1759 = vld [vmem:[%s1722 + $0x120] sm:$0xff]
        %v1760 = vld [vmem:[%s1722 + $0x128] sm:$0xff]
        %v1761 = vld [vmem:[%s1722 + $0x130] sm:$0xff]
        %v1762 = vld [vmem:[%s1722 + $0x138] sm:$0xff]
        %v1763 = vld [vmem:[%s1722 + $0x140] sm:$0xff]
        %v1764 = vld [vmem:[%s1722 + $0x148] sm:$0xff]
        %v1765 = vld [vmem:[%s1722 + $0x150] sm:$0xff]
        %v1766 = vld [vmem:[%s1722 + $0x158] sm:$0xff]
        %v1767 = vld [vmem:[%s1722 + $0x160] sm:$0xff]
        %v1768 = vld [vmem:[%s1722 + $0x168] sm:$0xff]
        %v1769 = vld [vmem:[%s1722 + $0x170] sm:$0xff]
        %v1770 = vld [vmem:[%s1722 + $0x178] sm:$0xff]
        %s1771 = scalar_lea.vmem [#allocation5], 768
        %v1772 = vld [vmem:[%s1771] sm:$0xff]
        %v1773 = vld [vmem:[%s1771 + $0x8] sm:$0xff]
        %v1774 = vld [vmem:[%s1771 + $0x10] sm:$0xff]
        %v1775 = vld [vmem:[%s1771 + $0x18] sm:$0xff]
        %v1776 = vld [vmem:[%s1771 + $0x20] sm:$0xff]
        %v1777 = vld [vmem:[%s1771 + $0x28] sm:$0xff]
        %v1778 = vld [vmem:[%s1771 + $0x30] sm:$0xff]
        %v1779 = vld [vmem:[%s1771 + $0x38] sm:$0xff]
        %v1780 = vld [vmem:[%s1771 + $0x40] sm:$0xff]
        %v1781 = vld [vmem:[%s1771 + $0x48] sm:$0xff]
        %v1782 = vld [vmem:[%s1771 + $0x50] sm:$0xff]
        %v1783 = vld [vmem:[%s1771 + $0x58] sm:$0xff]
        %v1784 = vld [vmem:[%s1771 + $0x60] sm:$0xff]
        %v1785 = vld [vmem:[%s1771 + $0x68] sm:$0xff]
        %v1786 = vld [vmem:[%s1771 + $0x70] sm:$0xff]
        %v1787 = vld [vmem:[%s1771 + $0x78] sm:$0xff]
        %v1788 = vld [vmem:[%s1771 + $0x80] sm:$0xff]
        %v1789 = vld [vmem:[%s1771 + $0x88] sm:$0xff]
        %v1790 = vld [vmem:[%s1771 + $0x90] sm:$0xff]
        %v1791 = vld [vmem:[%s1771 + $0x98] sm:$0xff]
        %v1792 = vld [vmem:[%s1771 + $0xa0] sm:$0xff]
        %v1793 = vld [vmem:[%s1771 + $0xa8] sm:$0xff]
        %v1794 = vld [vmem:[%s1771 + $0xb0] sm:$0xff]
        %v1795 = vld [vmem:[%s1771 + $0xb8] sm:$0xff]
        %v1796 = vld [vmem:[%s1771 + $0xc0] sm:$0xff]
        %v1797 = vld [vmem:[%s1771 + $0xc8] sm:$0xff]
        %v1798 = vld [vmem:[%s1771 + $0xd0] sm:$0xff]
        %v1799 = vld [vmem:[%s1771 + $0xd8] sm:$0xff]
        %v1800 = vld [vmem:[%s1771 + $0xe0] sm:$0xff]
        %v1801 = vld [vmem:[%s1771 + $0xe8] sm:$0xff]
        %v1802 = vld [vmem:[%s1771 + $0xf0] sm:$0xff]
        %v1803 = vld [vmem:[%s1771 + $0xf8] sm:$0xff]
        %v1804 = vld [vmem:[%s1771 + $0x100] sm:$0xff]
        %v1805 = vld [vmem:[%s1771 + $0x108] sm:$0xff]
        %v1806 = vld [vmem:[%s1771 + $0x110] sm:$0xff]
        %v1807 = vld [vmem:[%s1771 + $0x118] sm:$0xff]
        %v1808 = vld [vmem:[%s1771 + $0x120] sm:$0xff]
        %v1809 = vld [vmem:[%s1771 + $0x128] sm:$0xff]
        %v1810 = vld [vmem:[%s1771 + $0x130] sm:$0xff]
        %v1811 = vld [vmem:[%s1771 + $0x138] sm:$0xff]
        %v1812 = vld [vmem:[%s1771 + $0x140] sm:$0xff]
        %v1813 = vld [vmem:[%s1771 + $0x148] sm:$0xff]
        %v1814 = vld [vmem:[%s1771 + $0x150] sm:$0xff]
        %v1815 = vld [vmem:[%s1771 + $0x158] sm:$0xff]
        %v1816 = vld [vmem:[%s1771 + $0x160] sm:$0xff]
        %v1817 = vld [vmem:[%s1771 + $0x168] sm:$0xff]
        %v1818 = vld [vmem:[%s1771 + $0x170] sm:$0xff]
        %v1819 = vld [vmem:[%s1771 + $0x178] sm:$0xff]
        %1820 = vmatprep.subr.mxu0 0.0
        %1821 = vmatpush1.msra.mxu0 %v1772
        %1822 = vmatprep.subr.mxu0 0.0
        %1823 = vmatpush1.msra.mxu0 %v1773
        %1824 = vmatprep.subr.mxu0 0.0
        %1825 = vmatpush1.msra.mxu0 %v1774
        %1826 = vmatprep.subr.mxu0 0.0
        %1827 = vmatpush1.msra.mxu0 %v1775
        %1828 = vmatprep.subr.mxu0 0.0
        %1829 = vmatpush1.msra.mxu0 %v1776
        %1830 = vmatprep.subr.mxu0 0.0
        %1831 = vmatpush1.msra.mxu0 %v1777
        %1832 = vmatprep.subr.mxu0 0.0
        %1833 = vmatpush1.msra.mxu0 %v1778
        %1834 = vmatprep.subr.mxu0 0.0
        %1835 = vmatpush1.msra.mxu0 %v1779
        %1836 = vmatprep.subr.mxu0 0.0
        %1837 = vmatpush1.msra.mxu0 %v1780
        %1838 = vmatprep.subr.mxu0 0.0
        %1839 = vmatpush1.msra.mxu0 %v1781
        %1840 = vmatprep.subr.mxu0 0.0
        %1841 = vmatpush1.msra.mxu0 %v1782
        %1842 = vmatprep.subr.mxu0 0.0
        %1843 = vmatpush1.msra.mxu0 %v1783
        %1844 = vmatprep.subr.mxu0 0.0
        %1845 = vmatpush1.msra.mxu0 %v1784
        %1846 = vmatprep.subr.mxu0 0.0
        %1847 = vmatpush1.msra.mxu0 %v1785
        %1848 = vmatprep.subr.mxu0 0.0
        %1849 = vmatpush1.msra.mxu0 %v1786
        %1850 = vmatprep.subr.mxu0 0.0
        %1851 = vmatpush1.msra.mxu0 %v1787
        %1852 = vmatprep.subr.mxu0 0.0
        %1853 = vmatpush1.msra.mxu0 %v1788
        %1854 = vmatprep.subr.mxu0 0.0
        %1855 = vmatpush1.msra.mxu0 %v1789
        %1856 = vmatprep.subr.mxu0 0.0
        %1857 = vmatpush1.msra.mxu0 %v1790
        %1858 = vmatprep.subr.mxu0 0.0
        %1859 = vmatpush1.msra.mxu0 %v1791
        %1860 = vmatprep.subr.mxu0 0.0
        %1861 = vmatpush1.msra.mxu0 %v1792
        %1862 = vmatprep.subr.mxu0 0.0
        %1863 = vmatpush1.msra.mxu0 %v1793
        %1864 = vmatprep.subr.mxu0 0.0
        %1865 = vmatpush1.msra.mxu0 %v1794
        %1866 = vmatprep.subr.mxu0 0.0
        %1867 = vmatpush1.msra.mxu0 %v1795
        %1868 = vmatprep.subr.mxu0 0.0
        %1869 = vmatpush1.msra.mxu0 %v1796
        %1870 = vmatprep.subr.mxu0 0.0
        %1871 = vmatpush1.msra.mxu0 %v1797
        %1872 = vmatprep.subr.mxu0 0.0
        %1873 = vmatpush1.msra.mxu0 %v1798
        %1874 = vmatprep.subr.mxu0 0.0
        %1875 = vmatpush1.msra.mxu0 %v1799
        %1876 = vmatprep.subr.mxu0 0.0
        %1877 = vmatpush1.msra.mxu0 %v1800
        %1878 = vmatprep.subr.mxu0 0.0
        %1879 = vmatpush1.msra.mxu0 %v1801
        %1880 = vmatprep.subr.mxu0 0.0
        %1881 = vmatpush1.msra.mxu0 %v1802
        %1882 = vmatprep.subr.mxu0 0.0
        %1883 = vmatpush1.msra.mxu0 %v1803
        %1884 = vmatprep.mubr.f32.mxu0 %v297
        %1885 = vmatmul.mubr.f32.gmra.mrb[0].mxu0 %v1100
        %v1886 = vpop.f32.mrb[0].mxu0
        %v1887 = vpop.f32.mrb[0].mxu0
        %1888 = vmatprep.mubr.f32.mxu0 %v298
        %1889 = vmatmul.mubr.f32.gmra.mrb[0].mxu0 %v1101
        %v1890 = vpop.f32.mrb[0].mxu0
        %v1891 = vpop.f32.mrb[0].mxu0
        %1892 = vmatprep.mubr.f32.mxu0 %v299
        %1893 = vmatmul.mubr.f32.gmra.mrb[0].mxu0 %v1102
        %v1894 = vpop.f32.mrb[0].mxu0
        %v1895 = vadd.f32 0.0, %v1894
        %v1896 = vpop.f32.mrb[0].mxu0
        %1897 = vmatprep.mubr.f32.mxu0 %v300
        %1898 = vmatmul.mubr.f32.gmra.mrb[0].mxu0 %v1103
        %v1899 = vpop.f32.mrb[0].mxu0
        %v1900 = vadd.f32 0.0, %v1899
        %v1901 = vpop.f32.mrb[0].mxu0
        %1902 = vmatprep.mubr.f32.mxu0 %v301
        %1903 = vmatmul.mubr.f32.gmra.mrb[0].mxu0 %v1104
        %v1904 = vpop.f32.mrb[0].mxu0
        %v1905 = vadd.f32 0.0, %v1904
        %v1906 = vpop.f32.mrb[0].mxu0
        %1907 = vmatprep.mubr.f32.mxu0 %v302
        %1908 = vmatmul.mubr.f32.gmra.mrb[0].mxu0 %v1105
        %v1909 = vpop.f32.mrb[0].mxu0
        %v1910 = vadd.f32 0.0, %v1909
        %v1911 = vpop.f32.mrb[0].mxu0
        %1912 = vmatprep.mubr.f32.mxu0 %v303
        %1913 = vmatmul.mubr.f32.gmra.mrb[0].mxu0 %v1106
        %v1914 = vpop.f32.mrb[0].mxu0
        %v1915 = vadd.f32 0.0, %v1914
        %v1916 = vpop.f32.mrb[0].mxu0
        %1917 = vmatprep.mubr.f32.mxu0 %v304
        %1918 = vmatmul.mubr.f32.gmra.mrb[0].mxu0 %v1107
        %v1919 = vpop.f32.mrb[0].mxu0
        %v1920 = vadd.f32 0.0, %v1919
        %v1921 = vpop.f32.mrb[0].mxu0
        %1922 = vmatprep.mubr.f32.mxu0 %v305
        %1923 = vmatmul.mubr.f32.gmra.mrb[0].mxu0 %v1108
        %v1924 = vpop.f32.mrb[0].mxu0
        %v1925 = vadd.f32 0.0, %v1924
        %v1926 = vpop.f32.mrb[0].mxu0
        %1927 = vmatprep.mubr.f32.mxu0 %v306
        %1928 = vmatmul.mubr.f32.gmra.mrb[0].mxu0 %v1109
        %v1929 = vpop.f32.mrb[0].mxu0
        %v1930 = vadd.f32 0.0, %v1929
        %v1931 = vpop.f32.mrb[0].mxu0
        %1932 = vmatprep.mubr.f32.mxu0 %v307
        %1933 = vmatmul.mubr.f32.gmra.mrb[0].mxu0 %v1110
        %v1934 = vpop.f32.mrb[0].mxu0
        %v1935 = vadd.f32 0.0, %v1934
        %v1936 = vpop.f32.mrb[0].mxu0
        %1937 = vmatprep.mubr.f32.mxu0 %v308
        %1938 = vmatmul.mubr.f32.gmra.mrb[0].mxu0 %v1111
        %v1939 = vpop.f32.mrb[0].mxu0
        %v1940 = vadd.f32 0.0, %v1939
        %v1941 = vpop.f32.mrb[0].mxu0
        %1942 = vmatprep.mubr.f32.mxu0 %v309
        %1943 = vmatmul.mubr.f32.gmra.mrb[0].mxu0 %v1112
        %v1944 = vpop.f32.mrb[0].mxu0
        %v1945 = vadd.f32 0.0, %v1944
        %v1946 = vpop.f32.mrb[0].mxu0
        %1947 = vmatprep.mubr.f32.mxu0 %v310
        %1948 = vmatmul.mubr.f32.gmra.mrb[0].mxu0 %v1113
        %v1949 = vpop.f32.mrb[0].mxu0
        %v1950 = vadd.f32 0.0, %v1949
        %v1951 = vpop.f32.mrb[0].mxu0
        %1952 = vmatprep.mubr.f32.mxu0 %v311
        %1953 = vmatmul.mubr.f32.gmra.mrb[0].mxu0 %v1114
        %v1954 = vpop.f32.mrb[0].mxu0
        %v1955 = vadd.f32 0.0, %v1954
        %v1956 = vpop.f32.mrb[0].mxu0
        %1957 = vmatprep.mubr.f32.mxu0 %v312
        %1958 = vmatmul.mubr.f32.gmra.mrb[0].mxu0 %v1115
        %v1959 = vpop.f32.mrb[0].mxu0
        %v1960 = vadd.f32 0.0, %v1959
        %v1961 = vpop.f32.mrb[0].mxu0
        %1962 = vmatprep.mubr.f32.mxu0 %v313
        %1963 = vmatmul.mubr.f32.gmra.mrb[0].mxu0 %v1116
        %v1964 = vpop.f32.mrb[0].mxu0
        %v1965 = vadd.f32 0.0, %v1964
        %v1966 = vpop.f32.mrb[0].mxu0
        %1967 = vmatprep.mubr.f32.mxu0 %v314
        %1968 = vmatmul.mubr.f32.gmra.mrb[0].mxu0 %v1117
        %v1969 = vpop.f32.mrb[0].mxu0
        %v1970 = vadd.f32 0.0, %v1969
        %v1971 = vpop.f32.mrb[0].mxu0
        %1972 = vmatprep.mubr.f32.mxu0 %v315
        %1973 = vmatmul.mubr.f32.gmra.mrb[0].mxu0 %v1118
        %v1974 = vpop.f32.mrb[0].mxu0
        %v1975 = vadd.f32 0.0, %v1974
        %v1976 = vpop.f32.mrb[0].mxu0
        %1977 = vmatprep.mubr.f32.mxu0 %v316
        %1978 = vmatmul.mubr.f32.gmra.mrb[0].mxu0 %v1119
        %v1979 = vpop.f32.mrb[0].mxu0
        %v1980 = vadd.f32 0.0, %v1979
        %v1981 = vpop.f32.mrb[0].mxu0
        %1982 = vmatprep.mubr.f32.mxu0 %v317
        %1983 = vmatmul.mubr.f32.gmra.mrb[0].mxu0 %v1120
        %v1984 = vpop.f32.mrb[0].mxu0
        %v1985 = vadd.f32 0.0, %v1984
        %v1986 = vpop.f32.mrb[0].mxu0
        %1987 = vmatprep.mubr.f32.mxu0 %v318
        %1988 = vmatmul.mubr.f32.gmra.mrb[0].mxu0 %v1121
        %v1989 = vpop.f32.mrb[0].mxu0
        %v1990 = vadd.f32 0.0, %v1989
        %v1991 = vpop.f32.mrb[0].mxu0
        %1992 = vmatprep.mubr.f32.mxu0 %v319
        %1993 = vmatmul.mubr.f32.gmra.mrb[0].mxu0 %v1122
        %v1994 = vpop.f32.mrb[0].mxu0
        %v1995 = vadd.f32 0.0, %v1994
        %v1996 = vpop.f32.mrb[0].mxu0
        %1997 = vmatprep.mubr.f32.mxu0 %v320
        %1998 = vmatmul.mubr.f32.gmra.mrb[0].mxu0 %v1123
        %v1999 = vpop.f32.mrb[0].mxu0
        %v2000 = vadd.f32 0.0, %v1999
        %v2001 = vpop.f32.mrb[0].mxu0
        %2002 = vmatprep.mubr.f32.mxu0 %v321
        %2003 = vmatmul.mubr.f32.gmra.mrb[0].mxu0 %v1124
        %v2004 = vpop.f32.mrb[0].mxu0
        %v2005 = vadd.f32 0.0, %v2004
        %v2006 = vpop.f32.mrb[0].mxu0
        %2007 = vmatprep.mubr.f32.mxu0 %v322
        %2008 = vmatmul.mubr.f32.gmra.mrb[0].mxu0 %v1125
        %v2009 = vpop.f32.mrb[0].mxu0
        %v2010 = vadd.f32 0.0, %v2009
        %v2011 = vpop.f32.mrb[0].mxu0
        %2012 = vmatprep.mubr.f32.mxu0 %v323
        %2013 = vmatmul.mubr.f32.gmra.mrb[0].mxu0 %v1126
        %v2014 = vpop.f32.mrb[0].mxu0
        %v2015 = vadd.f32 0.0, %v2014
        %v2016 = vpop.f32.mrb[0].mxu0
        %2017 = vmatprep.mubr.f32.mxu0 %v324
        %2018 = vmatmul.mubr.f32.gmra.mrb[0].mxu0 %v1127
        %v2019 = vpop.f32.mrb[0].mxu0
        %v2020 = vadd.f32 0.0, %v2019
        %v2021 = vpop.f32.mrb[0].mxu0
        %2022 = vmatprep.mubr.f32.mxu0 %v325
        %2023 = vmatmul.mubr.f32.gmra.mrb[0].mxu0 %v1128
        %v2024 = vpop.f32.mrb[0].mxu0
        %v2025 = vadd.f32 0.0, %v2024
        %v2026 = vpop.f32.mrb[0].mxu0
        %2027 = vmatprep.mubr.f32.mxu0 %v326
        %2028 = vmatmul.mubr.f32.gmra.mrb[0].mxu0 %v1129
        %v2029 = vpop.f32.mrb[0].mxu0
        %v2030 = vadd.f32 0.0, %v2029
        %v2031 = vpop.f32.mrb[0].mxu0
        %2032 = vmatprep.mubr.f32.mxu0 %v327
        %2033 = vmatmul.mubr.f32.gmra.mrb[0].mxu0 %v1130
        %v2034 = vpop.f32.mrb[0].mxu0
        %v2035 = vadd.f32 0.0, %v2034
        %v2036 = vpop.f32.mrb[0].mxu0
        %2037 = vmatprep.mubr.f32.mxu0 %v328
        %2038 = vmatmul.mubr.f32.gmra.mrb[0].mxu0 %v1131
        %v2039 = vpop.f32.mrb[0].mxu0
        %v2040 = vadd.f32 0.0, %v2039
        %v2041 = vpop.f32.mrb[0].mxu0
        %2042 = vdwg.mxu0
        %2043 = vmatprep.subr.mxu0 0.0
        %2044 = vmatpush1.msra.mxu0 %v1804
        %2045 = vmatprep.subr.mxu0 0.0
        %2046 = vmatpush1.msra.mxu0 %v1805
        %2047 = vmatprep.subr.mxu0 0.0
        %2048 = vmatpush1.msra.mxu0 %v1806
        %2049 = vmatprep.subr.mxu0 0.0
        %2050 = vmatpush1.msra.mxu0 %v1807
        %2051 = vmatprep.subr.mxu0 0.0
        %2052 = vmatpush1.msra.mxu0 %v1808
        %2053 = vmatprep.subr.mxu0 0.0
        %2054 = vmatpush1.msra.mxu0 %v1809
        %2055 = vmatprep.subr.mxu0 0.0
        %2056 = vmatpush1.msra.mxu0 %v1810
        %2057 = vmatprep.subr.mxu0 0.0
        %2058 = vmatpush1.msra.mxu0 %v1811
        %2059 = vmatprep.subr.mxu0 0.0
        %2060 = vmatpush1.msra.mxu0 %v1812
        %2061 = vmatprep.subr.mxu0 0.0
        %2062 = vmatpush1.msra.mxu0 %v1813
        %2063 = vmatprep.subr.mxu0 0.0
        %2064 = vmatpush1.msra.mxu0 %v1814
        %2065 = vmatprep.subr.mxu0 0.0
        %2066 = vmatpush1.msra.mxu0 %v1815
        %2067 = vmatprep.subr.mxu0 0.0
        %2068 = vmatpush1.msra.mxu0 %v1816
        %2069 = vmatprep.subr.mxu0 0.0
        %2070 = vmatpush1.msra.mxu0 %v1817
        %2071 = vmatprep.subr.mxu0 0.0
        %2072 = vmatpush1.msra.mxu0 %v1818
        %2073 = vmatprep.subr.mxu0 0.0
        %2074 = vmatpush1.msra.mxu0 %v1819
        %2075 = vmatprep.subr.mxu0 0.0
        %2076 = vmatpush1.msra.mxu0 0.0
        %2077 = vmatprep.subr.mxu0 0.0
        %2078 = vmatpush1.msra.mxu0 0.0
        %2079 = vmatprep.subr.mxu0 0.0
        %2080 = vmatpush1.msra.mxu0 0.0
        %2081 = vmatprep.subr.mxu0 0.0
        %2082 = vmatpush1.msra.mxu0 0.0
        %2083 = vmatprep.subr.mxu0 0.0
        %2084 = vmatpush1.msra.mxu0 0.0
        %2085 = vmatprep.subr.mxu0 0.0
        %2086 = vmatpush1.msra.mxu0 0.0
        %2087 = vmatprep.subr.mxu0 0.0
        %2088 = vmatpush1.msra.mxu0 0.0
        %2089 = vmatprep.subr.mxu0 0.0
        %2090 = vmatpush1.msra.mxu0 0.0
        %2091 = vmatprep.subr.mxu0 0.0
        %2092 = vmatpush1.msra.mxu0 0.0
        %2093 = vmatprep.subr.mxu0 0.0
        %2094 = vmatpush1.msra.mxu0 0.0
        %2095 = vmatprep.subr.mxu0 0.0
        %2096 = vmatpush1.msra.mxu0 0.0
        %2097 = vmatprep.subr.mxu0 0.0
        %2098 = vmatpush1.msra.mxu0 0.0
        %2099 = vmatprep.subr.mxu0 0.0
        %2100 = vmatpush1.msra.mxu0 0.0
        %2101 = vmatprep.subr.mxu0 0.0
        %2102 = vmatpush1.msra.mxu0 0.0
        %2103 = vmatprep.subr.mxu0 0.0
        %2104 = vmatpush1.msra.mxu0 0.0
        %2105 = vmatprep.subr.mxu0 0.0
        %2106 = vmatpush1.msra.mxu0 0.0
        %2107 = vmatprep.mubr.f32.mxu0 0.0
        %2108 = vmatmul.mubr.f32.gmra.mrb[0].mxu0 %v1196
        %v2109 = vpop.f32.mrb[0].mxu0
        %v2110 = vpop.f32.mrb[0].mxu0
        %2111 = vmatprep.mubr.f32.mxu0 0.0
        %2112 = vmatmul.mubr.f32.gmra.mrb[0].mxu0 %v1197
        %v2113 = vpop.f32.mrb[0].mxu0
        %v2114 = vpop.f32.mrb[0].mxu0
        %2115 = vmatprep.mubr.f32.mxu0 0.0
        %2116 = vmatmul.mubr.f32.gmra.mrb[0].mxu0 %v1198
        %v2117 = vpop.f32.mrb[0].mxu0
        %v2118 = vadd.f32 %v1895, %v2117
        %v2119 = vpop.f32.mrb[0].mxu0
        %2120 = vmatprep.mubr.f32.mxu0 0.0
        %2121 = vmatmul.mubr.f32.gmra.mrb[0].mxu0 %v1199
        %v2122 = vpop.f32.mrb[0].mxu0
        %v2123 = vadd.f32 %v1900, %v2122
        %v2124 = vpop.f32.mrb[0].mxu0
        %2125 = vmatprep.mubr.f32.mxu0 0.0
        %2126 = vmatmul.mubr.f32.gmra.mrb[0].mxu0 %v1200
        %v2127 = vpop.f32.mrb[0].mxu0
        %v2128 = vadd.f32 %v1905, %v2127
        %v2129 = vpop.f32.mrb[0].mxu0
        %2130 = vmatprep.mubr.f32.mxu0 0.0
        %2131 = vmatmul.mubr.f32.gmra.mrb[0].mxu0 %v1201
        %v2132 = vpop.f32.mrb[0].mxu0
        %v2133 = vadd.f32 %v1910, %v2132
        %v2134 = vpop.f32.mrb[0].mxu0
        %2135 = vmatprep.mubr.f32.mxu0 0.0
        %2136 = vmatmul.mubr.f32.gmra.mrb[0].mxu0 %v1202
        %v2137 = vpop.f32.mrb[0].mxu0
        %v2138 = vadd.f32 %v1915, %v2137
        %v2139 = vpop.f32.mrb[0].mxu0
        %2140 = vmatprep.mubr.f32.mxu0 0.0
        %2141 = vmatmul.mubr.f32.gmra.mrb[0].mxu0 %v1203
        %v2142 = vpop.f32.mrb[0].mxu0
        %v2143 = vadd.f32 %v1920, %v2142
        %v2144 = vpop.f32.mrb[0].mxu0
        %2145 = vmatprep.mubr.f32.mxu0 0.0
        %2146 = vmatmul.mubr.f32.gmra.mrb[0].mxu0 %v1204
        %v2147 = vpop.f32.mrb[0].mxu0
        %v2148 = vadd.f32 %v1925, %v2147
        %v2149 = vpop.f32.mrb[0].mxu0
        %2150 = vmatprep.mubr.f32.mxu0 0.0
        %2151 = vmatmul.mubr.f32.gmra.mrb[0].mxu0 %v1205
        %v2152 = vpop.f32.mrb[0].mxu0
        %v2153 = vadd.f32 %v1930, %v2152
        %v2154 = vpop.f32.mrb[0].mxu0
        %2155 = vmatprep.mubr.f32.mxu0 0.0
        %2156 = vmatmul.mubr.f32.gmra.mrb[0].mxu0 %v1206
        %v2157 = vpop.f32.mrb[0].mxu0
        %v2158 = vadd.f32 %v1935, %v2157
        %v2159 = vpop.f32.mrb[0].mxu0
        %2160 = vmatprep.mubr.f32.mxu0 0.0
        %2161 = vmatmul.mubr.f32.gmra.mrb[0].mxu0 %v1207
        %v2162 = vpop.f32.mrb[0].mxu0
        %v2163 = vadd.f32 %v1940, %v2162
        %v2164 = vpop.f32.mrb[0].mxu0
        %2165 = vmatprep.mubr.f32.mxu0 0.0
        %2166 = vmatmul.mubr.f32.gmra.mrb[0].mxu0 %v1208
        %v2167 = vpop.f32.mrb[0].mxu0
        %v2168 = vadd.f32 %v1945, %v2167
        %v2169 = vpop.f32.mrb[0].mxu0
        %2170 = vmatprep.mubr.f32.mxu0 0.0
        %2171 = vmatmul.mubr.f32.gmra.mrb[0].mxu0 %v1209
        %v2172 = vpop.f32.mrb[0].mxu0
        %v2173 = vadd.f32 %v1950, %v2172
        %v2174 = vpop.f32.mrb[0].mxu0
        %2175 = vmatprep.mubr.f32.mxu0 0.0
        %2176 = vmatmul.mubr.f32.gmra.mrb[0].mxu0 %v1210
        %v2177 = vpop.f32.mrb[0].mxu0
        %v2178 = vadd.f32 %v1955, %v2177
        %v2179 = vpop.f32.mrb[0].mxu0
        %2180 = vmatprep.mubr.f32.mxu0 0.0
        %2181 = vmatmul.mubr.f32.gmra.mrb[0].mxu0 %v1211
        %v2182 = vpop.f32.mrb[0].mxu0
        %v2183 = vadd.f32 %v1960, %v2182
        %v2184 = vpop.f32.mrb[0].mxu0
        %2185 = vmatprep.mubr.f32.mxu0 0.0
        %2186 = vmatmul.mubr.f32.gmra.mrb[0].mxu0 %v1212
        %v2187 = vpop.f32.mrb[0].mxu0
        %v2188 = vadd.f32 %v1965, %v2187
        %v2189 = vpop.f32.mrb[0].mxu0
        %2190 = vmatprep.mubr.f32.mxu0 0.0
        %2191 = vmatmul.mubr.f32.gmra.mrb[0].mxu0 %v1213
        %v2192 = vpop.f32.mrb[0].mxu0
        %v2193 = vadd.f32 %v1970, %v2192
        %v2194 = vpop.f32.mrb[0].mxu0
        %2195 = vmatprep.mubr.f32.mxu0 0.0
        %2196 = vmatmul.mubr.f32.gmra.mrb[0].mxu0 %v1214
        %v2197 = vpop.f32.mrb[0].mxu0
        %v2198 = vadd.f32 %v1975, %v2197
        %v2199 = vpop.f32.mrb[0].mxu0
        %2200 = vmatprep.mubr.f32.mxu0 0.0
        %2201 = vmatmul.mubr.f32.gmra.mrb[0].mxu0 %v1215
        %v2202 = vpop.f32.mrb[0].mxu0
        %v2203 = vadd.f32 %v1980, %v2202
        %v2204 = vpop.f32.mrb[0].mxu0
        %2205 = vmatprep.mubr.f32.mxu0 0.0
        %2206 = vmatmul.mubr.f32.gmra.mrb[0].mxu0 %v1216
        %v2207 = vpop.f32.mrb[0].mxu0
        %v2208 = vadd.f32 %v1985, %v2207
        %v2209 = vpop.f32.mrb[0].mxu0
        %2210 = vmatprep.mubr.f32.mxu0 0.0
        %2211 = vmatmul.mubr.f32.gmra.mrb[0].mxu0 %v1217
        %v2212 = vpop.f32.mrb[0].mxu0
        %v2213 = vadd.f32 %v1990, %v2212
        %v2214 = vpop.f32.mrb[0].mxu0
        %2215 = vmatprep.mubr.f32.mxu0 0.0
        %2216 = vmatmul.mubr.f32.gmra.mrb[0].mxu0 %v1218
        %v2217 = vpop.f32.mrb[0].mxu0
        %v2218 = vadd.f32 %v1995, %v2217
        %v2219 = vpop.f32.mrb[0].mxu0
        %2220 = vmatprep.mubr.f32.mxu0 0.0
        %2221 = vmatmul.mubr.f32.gmra.mrb[0].mxu0 %v1219
        %v2222 = vpop.f32.mrb[0].mxu0
        %v2223 = vadd.f32 %v2000, %v2222
        %v2224 = vpop.f32.mrb[0].mxu0
        %2225 = vmatprep.mubr.f32.mxu0 0.0
        %2226 = vmatmul.mubr.f32.gmra.mrb[0].mxu0 %v1220
        %v2227 = vpop.f32.mrb[0].mxu0
        %v2228 = vadd.f32 %v2005, %v2227
        %v2229 = vpop.f32.mrb[0].mxu0
        %2230 = vmatprep.mubr.f32.mxu0 0.0
        %2231 = vmatmul.mubr.f32.gmra.mrb[0].mxu0 %v1221
        %v2232 = vpop.f32.mrb[0].mxu0
        %v2233 = vadd.f32 %v2010, %v2232
        %v2234 = vpop.f32.mrb[0].mxu0
        %2235 = vmatprep.mubr.f32.mxu0 0.0
        %2236 = vmatmul.mubr.f32.gmra.mrb[0].mxu0 %v1222
        %v2237 = vpop.f32.mrb[0].mxu0
        %v2238 = vadd.f32 %v2015, %v2237
        %v2239 = vpop.f32.mrb[0].mxu0
        %2240 = vmatprep.mubr.f32.mxu0 0.0
        %2241 = vmatmul.mubr.f32.gmra.mrb[0].mxu0 %v1223
        %v2242 = vpop.f32.mrb[0].mxu0
        %v2243 = vadd.f32 %v2020, %v2242
        %v2244 = vpop.f32.mrb[0].mxu0
        %2245 = vmatprep.mubr.f32.mxu0 0.0
        %2246 = vmatmul.mubr.f32.gmra.mrb[0].mxu0 %v1224
        %v2247 = vpop.f32.mrb[0].mxu0
        %v2248 = vadd.f32 %v2025, %v2247
        %v2249 = vpop.f32.mrb[0].mxu0
        %2250 = vmatprep.mubr.f32.mxu0 0.0
        %2251 = vmatmul.mubr.f32.gmra.mrb[0].mxu0 %v1225
        %v2252 = vpop.f32.mrb[0].mxu0
        %v2253 = vadd.f32 %v2030, %v2252
        %v2254 = vpop.f32.mrb[0].mxu0
        %2255 = vmatprep.mubr.f32.mxu0 0.0
        %2256 = vmatmul.mubr.f32.gmra.mrb[0].mxu0 %v1226
        %v2257 = vpop.f32.mrb[0].mxu0
        %v2258 = vadd.f32 %v2035, %v2257
        %v2259 = vpop.f32.mrb[0].mxu0
        %2260 = vmatprep.mubr.f32.mxu0 0.0
        %2261 = vmatmul.mubr.f32.gmra.mrb[0].mxu0 %v1227
        %v2262 = vpop.f32.mrb[0].mxu0
        %v2263 = vadd.f32 %v2040, %v2262
        %v2264 = vpop.f32.mrb[0].mxu0
        %2265 = vdwg.mxu0
        %2266 = vmatprep.subr.mxu0 0.0
        %2267 = vmatpush1.msra.mxu0 %v1723
        %2268 = vmatprep.subr.mxu0 0.0
        %2269 = vmatpush1.msra.mxu0 %v1724
        %2270 = vmatprep.subr.mxu0 0.0
        %2271 = vmatpush1.msra.mxu0 %v1725
        %2272 = vmatprep.subr.mxu0 0.0
        %2273 = vmatpush1.msra.mxu0 %v1726
        %2274 = vmatprep.subr.mxu0 0.0
        %2275 = vmatpush1.msra.mxu0 %v1727
        %2276 = vmatprep.subr.mxu0 0.0
        %2277 = vmatpush1.msra.mxu0 %v1728
        %2278 = vmatprep.subr.mxu0 0.0
        %2279 = vmatpush1.msra.mxu0 %v1729
        %2280 = vmatprep.subr.mxu0 0.0
        %2281 = vmatpush1.msra.mxu0 %v1730
        %2282 = vmatprep.subr.mxu0 0.0
        %2283 = vmatpush1.msra.mxu0 %v1731
        %2284 = vmatprep.subr.mxu0 0.0
        %2285 = vmatpush1.msra.mxu0 %v1732
        %2286 = vmatprep.subr.mxu0 0.0
        %2287 = vmatpush1.msra.mxu0 %v1733
        %2288 = vmatprep.subr.mxu0 0.0
        %2289 = vmatpush1.msra.mxu0 %v1734
        %2290 = vmatprep.subr.mxu0 0.0
        %2291 = vmatpush1.msra.mxu0 %v1735
        %2292 = vmatprep.subr.mxu0 0.0
        %2293 = vmatpush1.msra.mxu0 %v1736
        %2294 = vmatprep.subr.mxu0 0.0
        %2295 = vmatpush1.msra.mxu0 %v1737
        %2296 = vmatprep.subr.mxu0 0.0
        %2297 = vmatpush1.msra.mxu0 %v1738
        %2298 = vmatprep.subr.mxu0 0.0
        %2299 = vmatpush1.msra.mxu0 %v1739
        %2300 = vmatprep.subr.mxu0 0.0
        %2301 = vmatpush1.msra.mxu0 %v1740
        %2302 = vmatprep.subr.mxu0 0.0
        %2303 = vmatpush1.msra.mxu0 %v1741
        %2304 = vmatprep.subr.mxu0 0.0
        %2305 = vmatpush1.msra.mxu0 %v1742
        %2306 = vmatprep.subr.mxu0 0.0
        %2307 = vmatpush1.msra.mxu0 %v1743
        %2308 = vmatprep.subr.mxu0 0.0
        %2309 = vmatpush1.msra.mxu0 %v1744
        %2310 = vmatprep.subr.mxu0 0.0
        %2311 = vmatpush1.msra.mxu0 %v1745
        %2312 = vmatprep.subr.mxu0 0.0
        %2313 = vmatpush1.msra.mxu0 %v1746
        %2314 = vmatprep.subr.mxu0 0.0
        %2315 = vmatpush1.msra.mxu0 %v1747
        %2316 = vmatprep.subr.mxu0 0.0
        %2317 = vmatpush1.msra.mxu0 %v1748
        %2318 = vmatprep.subr.mxu0 0.0
        %2319 = vmatpush1.msra.mxu0 %v1749
        %2320 = vmatprep.subr.mxu0 0.0
        %2321 = vmatpush1.msra.mxu0 %v1750
        %2322 = vmatprep.subr.mxu0 0.0
        %2323 = vmatpush1.msra.mxu0 %v1751
        %2324 = vmatprep.subr.mxu0 0.0
        %2325 = vmatpush1.msra.mxu0 %v1752
        %2326 = vmatprep.subr.mxu0 0.0
        %2327 = vmatpush1.msra.mxu0 %v1753
        %2328 = vmatprep.subr.mxu0 0.0
        %2329 = vmatpush1.msra.mxu0 %v1754
        %2330 = vmatprep.mubr.f32.mxu0 %v297
        %2331 = vmatmul.mubr.f32.gmra.mrb[0].mxu0 %v1100
        %v2332 = vpop.f32.mrb[0].mxu0
        %v2333 = vadd.f32 0.0, %v2332
        %v2334 = vpop.f32.mrb[0].mxu0
        %2335 = vmatprep.mubr.f32.mxu0 %v298
        %2336 = vmatmul.mubr.f32.gmra.mrb[0].mxu0 %v1101
        %v2337 = vpop.f32.mrb[0].mxu0
        %v2338 = vadd.f32 0.0, %v2337
        %v2339 = vpop.f32.mrb[0].mxu0
        %2340 = vmatprep.mubr.f32.mxu0 %v299
        %2341 = vmatmul.mubr.f32.gmra.mrb[0].mxu0 %v1102
        %v2342 = vpop.f32.mrb[0].mxu0
        %v2343 = vadd.f32 %v1566, %v2342
        %v2344 = vpop.f32.mrb[0].mxu0
        %2345 = vmatprep.mubr.f32.mxu0 %v300
        %2346 = vmatmul.mubr.f32.gmra.mrb[0].mxu0 %v1103
        %v2347 = vpop.f32.mrb[0].mxu0
        %v2348 = vadd.f32 %v1571, %v2347
        %v2349 = vpop.f32.mrb[0].mxu0
        %2350 = vmatprep.mubr.f32.mxu0 %v301
        %2351 = vmatmul.mubr.f32.gmra.mrb[0].mxu0 %v1104
        %v2352 = vpop.f32.mrb[0].mxu0
        %v2353 = vadd.f32 %v1576, %v2352
        %v2354 = vpop.f32.mrb[0].mxu0
        %2355 = vmatprep.mubr.f32.mxu0 %v302
        %2356 = vmatmul.mubr.f32.gmra.mrb[0].mxu0 %v1105
        %v2357 = vpop.f32.mrb[0].mxu0
        %v2358 = vadd.f32 %v1581, %v2357
        %v2359 = vpop.f32.mrb[0].mxu0
        %2360 = vmatprep.mubr.f32.mxu0 %v303
        %2361 = vmatmul.mubr.f32.gmra.mrb[0].mxu0 %v1106
        %v2362 = vpop.f32.mrb[0].mxu0
        %v2363 = vadd.f32 %v1586, %v2362
        %v2364 = vpop.f32.mrb[0].mxu0
        %2365 = vmatprep.mubr.f32.mxu0 %v304
        %2366 = vmatmul.mubr.f32.gmra.mrb[0].mxu0 %v1107
        %v2367 = vpop.f32.mrb[0].mxu0
        %v2368 = vadd.f32 %v1591, %v2367
        %v2369 = vpop.f32.mrb[0].mxu0
        %2370 = vmatprep.mubr.f32.mxu0 %v305
        %2371 = vmatmul.mubr.f32.gmra.mrb[0].mxu0 %v1108
        %v2372 = vpop.f32.mrb[0].mxu0
        %v2373 = vadd.f32 %v1596, %v2372
        %v2374 = vpop.f32.mrb[0].mxu0
        %2375 = vmatprep.mubr.f32.mxu0 %v306
        %2376 = vmatmul.mubr.f32.gmra.mrb[0].mxu0 %v1109
        %v2377 = vpop.f32.mrb[0].mxu0
        %v2378 = vadd.f32 %v1601, %v2377
        %v2379 = vpop.f32.mrb[0].mxu0
        %2380 = vmatprep.mubr.f32.mxu0 %v307
        %2381 = vmatmul.mubr.f32.gmra.mrb[0].mxu0 %v1110
        %v2382 = vpop.f32.mrb[0].mxu0
        %v2383 = vadd.f32 %v1606, %v2382
        %v2384 = vpop.f32.mrb[0].mxu0
        %2385 = vmatprep.mubr.f32.mxu0 %v308
        %2386 = vmatmul.mubr.f32.gmra.mrb[0].mxu0 %v1111
        %v2387 = vpop.f32.mrb[0].mxu0
        %v2388 = vadd.f32 %v1611, %v2387
        %v2389 = vpop.f32.mrb[0].mxu0
        %2390 = vmatprep.mubr.f32.mxu0 %v309
        %2391 = vmatmul.mubr.f32.gmra.mrb[0].mxu0 %v1112
        %v2392 = vpop.f32.mrb[0].mxu0
        %v2393 = vadd.f32 %v1616, %v2392
        %v2394 = vpop.f32.mrb[0].mxu0
        %2395 = vmatprep.mubr.f32.mxu0 %v310
        %2396 = vmatmul.mubr.f32.gmra.mrb[0].mxu0 %v1113
        %v2397 = vpop.f32.mrb[0].mxu0
        %v2398 = vadd.f32 %v1621, %v2397
        %v2399 = vpop.f32.mrb[0].mxu0
        %2400 = vmatprep.mubr.f32.mxu0 %v311
        %2401 = vmatmul.mubr.f32.gmra.mrb[0].mxu0 %v1114
        %v2402 = vpop.f32.mrb[0].mxu0
        %v2403 = vadd.f32 %v1626, %v2402
        %v2404 = vpop.f32.mrb[0].mxu0
        %2405 = vmatprep.mubr.f32.mxu0 %v312
        %2406 = vmatmul.mubr.f32.gmra.mrb[0].mxu0 %v1115
        %v2407 = vpop.f32.mrb[0].mxu0
        %v2408 = vadd.f32 %v1631, %v2407
        %v2409 = vpop.f32.mrb[0].mxu0
        %2410 = vmatprep.mubr.f32.mxu0 %v313
        %2411 = vmatmul.mubr.f32.gmra.mrb[0].mxu0 %v1116
        %v2412 = vpop.f32.mrb[0].mxu0
        %v2413 = vadd.f32 %v1636, %v2412
        %v2414 = vpop.f32.mrb[0].mxu0
        %2415 = vmatprep.mubr.f32.mxu0 %v314
        %2416 = vmatmul.mubr.f32.gmra.mrb[0].mxu0 %v1117
        %v2417 = vpop.f32.mrb[0].mxu0
        %v2418 = vadd.f32 %v1641, %v2417
        %v2419 = vpop.f32.mrb[0].mxu0
        %2420 = vmatprep.mubr.f32.mxu0 %v315
        %2421 = vmatmul.mubr.f32.gmra.mrb[0].mxu0 %v1118
        %v2422 = vpop.f32.mrb[0].mxu0
        %v2423 = vadd.f32 %v1646, %v2422
        %v2424 = vpop.f32.mrb[0].mxu0
        %2425 = vmatprep.mubr.f32.mxu0 %v316
        %2426 = vmatmul.mubr.f32.gmra.mrb[0].mxu0 %v1119
        %v2427 = vpop.f32.mrb[0].mxu0
        %v2428 = vadd.f32 %v1651, %v2427
        %v2429 = vpop.f32.mrb[0].mxu0
        %2430 = vmatprep.mubr.f32.mxu0 %v317
        %2431 = vmatmul.mubr.f32.gmra.mrb[0].mxu0 %v1120
        %v2432 = vpop.f32.mrb[0].mxu0
        %v2433 = vadd.f32 %v1656, %v2432
        %v2434 = vpop.f32.mrb[0].mxu0
        %2435 = vmatprep.mubr.f32.mxu0 %v318
        %2436 = vmatmul.mubr.f32.gmra.mrb[0].mxu0 %v1121
        %v2437 = vpop.f32.mrb[0].mxu0
        %v2438 = vadd.f32 %v1661, %v2437
        %v2439 = vpop.f32.mrb[0].mxu0
        %2440 = vmatprep.mubr.f32.mxu0 %v319
        %2441 = vmatmul.mubr.f32.gmra.mrb[0].mxu0 %v1122
        %v2442 = vpop.f32.mrb[0].mxu0
        %v2443 = vadd.f32 %v1666, %v2442
        %v2444 = vpop.f32.mrb[0].mxu0
        %2445 = vmatprep.mubr.f32.mxu0 %v320
        %2446 = vmatmul.mubr.f32.gmra.mrb[0].mxu0 %v1123
        %v2447 = vpop.f32.mrb[0].mxu0
        %v2448 = vadd.f32 %v1671, %v2447
        %v2449 = vpop.f32.mrb[0].mxu0
        %2450 = vmatprep.mubr.f32.mxu0 %v321
        %2451 = vmatmul.mubr.f32.gmra.mrb[0].mxu0 %v1124
        %v2452 = vpop.f32.mrb[0].mxu0
        %v2453 = vadd.f32 %v1676, %v2452
        %v2454 = vpop.f32.mrb[0].mxu0
        %2455 = vmatprep.mubr.f32.mxu0 %v322
        %2456 = vmatmul.mubr.f32.gmra.mrb[0].mxu0 %v1125
        %v2457 = vpop.f32.mrb[0].mxu0
        %v2458 = vadd.f32 %v1681, %v2457
        %v2459 = vpop.f32.mrb[0].mxu0
        %2460 = vmatprep.mubr.f32.mxu0 %v323
        %2461 = vmatmul.mubr.f32.gmra.mrb[0].mxu0 %v1126
        %v2462 = vpop.f32.mrb[0].mxu0
        %v2463 = vadd.f32 %v1686, %v2462
        %v2464 = vpop.f32.mrb[0].mxu0
        %2465 = vmatprep.mubr.f32.mxu0 %v324
        %2466 = vmatmul.mubr.f32.gmra.mrb[0].mxu0 %v1127
        %v2467 = vpop.f32.mrb[0].mxu0
        %v2468 = vadd.f32 %v1691, %v2467
        %v2469 = vpop.f32.mrb[0].mxu0
        %2470 = vmatprep.mubr.f32.mxu0 %v325
        %2471 = vmatmul.mubr.f32.gmra.mrb[0].mxu0 %v1128
        %v2472 = vpop.f32.mrb[0].mxu0
        %v2473 = vadd.f32 %v1696, %v2472
        %v2474 = vpop.f32.mrb[0].mxu0
        %2475 = vmatprep.mubr.f32.mxu0 %v326
        %2476 = vmatmul.mubr.f32.gmra.mrb[0].mxu0 %v1129
        %v2477 = vpop.f32.mrb[0].mxu0
        %v2478 = vadd.f32 %v1701, %v2477
        %v2479 = vpop.f32.mrb[0].mxu0
        %2480 = vmatprep.mubr.f32.mxu0 %v327
        %2481 = vmatmul.mubr.f32.gmra.mrb[0].mxu0 %v1130
        %v2482 = vpop.f32.mrb[0].mxu0
        %v2483 = vadd.f32 %v1706, %v2482
        %v2484 = vpop.f32.mrb[0].mxu0
        %2485 = vmatprep.mubr.f32.mxu0 %v328
        %2486 = vmatmul.mubr.f32.gmra.mrb[0].mxu0 %v1131
        %v2487 = vpop.f32.mrb[0].mxu0
        %v2488 = vadd.f32 %v1711, %v2487
        %v2489 = vpop.f32.mrb[0].mxu0
        %2490 = vdwg.mxu0
        %2491 = vmatprep.subr.mxu0 0.0
        %2492 = vmatpush1.msra.mxu0 %v1755
        %2493 = vmatprep.subr.mxu0 0.0
        %2494 = vmatpush1.msra.mxu0 %v1756
        %2495 = vmatprep.subr.mxu0 0.0
        %2496 = vmatpush1.msra.mxu0 %v1757
        %2497 = vmatprep.subr.mxu0 0.0
        %2498 = vmatpush1.msra.mxu0 %v1758
        %2499 = vmatprep.subr.mxu0 0.0
        %2500 = vmatpush1.msra.mxu0 %v1759
        %2501 = vmatprep.subr.mxu0 0.0
        %2502 = vmatpush1.msra.mxu0 %v1760
        %2503 = vmatprep.subr.mxu0 0.0
        %2504 = vmatpush1.msra.mxu0 %v1761
        %2505 = vmatprep.subr.mxu0 0.0
        %2506 = vmatpush1.msra.mxu0 %v1762
        %2507 = vmatprep.subr.mxu0 0.0
        %2508 = vmatpush1.msra.mxu0 %v1763
        %2509 = vmatprep.subr.mxu0 0.0
        %2510 = vmatpush1.msra.mxu0 %v1764
        %2511 = vmatprep.subr.mxu0 0.0
        %2512 = vmatpush1.msra.mxu0 %v1765
        %2513 = vmatprep.subr.mxu0 0.0
        %2514 = vmatpush1.msra.mxu0 %v1766
        %2515 = vmatprep.subr.mxu0 0.0
        %2516 = vmatpush1.msra.mxu0 %v1767
        %2517 = vmatprep.subr.mxu0 0.0
        %2518 = vmatpush1.msra.mxu0 %v1768
        %2519 = vmatprep.subr.mxu0 0.0
        %2520 = vmatpush1.msra.mxu0 %v1769
        %2521 = vmatprep.subr.mxu0 0.0
        %2522 = vmatpush1.msra.mxu0 %v1770
        %2523 = vmatprep.subr.mxu0 0.0
        %2524 = vmatpush1.msra.mxu0 0.0
        %2525 = vmatprep.subr.mxu0 0.0
        %2526 = vmatpush1.msra.mxu0 0.0
        %2527 = vmatprep.subr.mxu0 0.0
        %2528 = vmatpush1.msra.mxu0 0.0
        %2529 = vmatprep.subr.mxu0 0.0
        %2530 = vmatpush1.msra.mxu0 0.0
        %2531 = vmatprep.subr.mxu0 0.0
        %2532 = vmatpush1.msra.mxu0 0.0
        %2533 = vmatprep.subr.mxu0 0.0
        %2534 = vmatpush1.msra.mxu0 0.0
        %2535 = vmatprep.subr.mxu0 0.0
        %2536 = vmatpush1.msra.mxu0 0.0
        %2537 = vmatprep.subr.mxu0 0.0
        %2538 = vmatpush1.msra.mxu0 0.0
        %2539 = vmatprep.subr.mxu0 0.0
        %2540 = vmatpush1.msra.mxu0 0.0
        %2541 = vmatprep.subr.mxu0 0.0
        %2542 = vmatpush1.msra.mxu0 0.0
        %2543 = vmatprep.subr.mxu0 0.0
        %2544 = vmatpush1.msra.mxu0 0.0
        %2545 = vmatprep.subr.mxu0 0.0
        %2546 = vmatpush1.msra.mxu0 0.0
        %2547 = vmatprep.subr.mxu0 0.0
        %2548 = vmatpush1.msra.mxu0 0.0
        %2549 = vmatprep.subr.mxu0 0.0
        %2550 = vmatpush1.msra.mxu0 0.0
        %2551 = vmatprep.subr.mxu0 0.0
        %2552 = vmatpush1.msra.mxu0 0.0
        %2553 = vmatprep.subr.mxu0 0.0
        %2554 = vmatpush1.msra.mxu0 0.0
        %2555 = vmatprep.mubr.f32.mxu0 0.0
        %2556 = vmatmul.mubr.f32.gmra.mrb[0].mxu0 %v1196
        %v2557 = vpop.f32.mrb[0].mxu0
        %v2558 = vadd.f32 %v2333, %v2557
        %v2559 = vpop.f32.mrb[0].mxu0
        %2560 = vmatprep.mubr.f32.mxu0 0.0
        %2561 = vmatmul.mubr.f32.gmra.mrb[0].mxu0 %v1197
        %v2562 = vpop.f32.mrb[0].mxu0
        %v2563 = vadd.f32 %v2338, %v2562
        %v2564 = vpop.f32.mrb[0].mxu0
        %2565 = vmatprep.mubr.f32.mxu0 0.0
        %2566 = vmatmul.mubr.f32.gmra.mrb[0].mxu0 %v1198
        %v2567 = vpop.f32.mrb[0].mxu0
        %v2568 = vadd.f32 %v2343, %v2567
        %v2569 = vpop.f32.mrb[0].mxu0
        %2570 = vmatprep.mubr.f32.mxu0 0.0
        %2571 = vmatmul.mubr.f32.gmra.mrb[0].mxu0 %v1199
        %v2572 = vpop.f32.mrb[0].mxu0
        %v2573 = vadd.f32 %v2348, %v2572
        %v2574 = vpop.f32.mrb[0].mxu0
        %2575 = vmatprep.mubr.f32.mxu0 0.0
        %2576 = vmatmul.mubr.f32.gmra.mrb[0].mxu0 %v1200
        %v2577 = vpop.f32.mrb[0].mxu0
        %v2578 = vadd.f32 %v2353, %v2577
        %v2579 = vpop.f32.mrb[0].mxu0
        %2580 = vmatprep.mubr.f32.mxu0 0.0
        %2581 = vmatmul.mubr.f32.gmra.mrb[0].mxu0 %v1201
        %v2582 = vpop.f32.mrb[0].mxu0
        %v2583 = vadd.f32 %v2358, %v2582
        %v2584 = vpop.f32.mrb[0].mxu0
        %2585 = vmatprep.mubr.f32.mxu0 0.0
        %2586 = vmatmul.mubr.f32.gmra.mrb[0].mxu0 %v1202
        %v2587 = vpop.f32.mrb[0].mxu0
        %v2588 = vadd.f32 %v2363, %v2587
        %v2589 = vpop.f32.mrb[0].mxu0
        %2590 = vmatprep.mubr.f32.mxu0 0.0
        %2591 = vmatmul.mubr.f32.gmra.mrb[0].mxu0 %v1203
        %v2592 = vpop.f32.mrb[0].mxu0
        %v2593 = vadd.f32 %v2368, %v2592
        %v2594 = vpop.f32.mrb[0].mxu0
        %2595 = vmatprep.mubr.f32.mxu0 0.0
        %2596 = vmatmul.mubr.f32.gmra.mrb[0].mxu0 %v1204
        %v2597 = vpop.f32.mrb[0].mxu0
        %v2598 = vadd.f32 %v2373, %v2597
        %v2599 = vpop.f32.mrb[0].mxu0
        %2600 = vmatprep.mubr.f32.mxu0 0.0
        %2601 = vmatmul.mubr.f32.gmra.mrb[0].mxu0 %v1205
        %v2602 = vpop.f32.mrb[0].mxu0
        %v2603 = vadd.f32 %v2378, %v2602
        %v2604 = vpop.f32.mrb[0].mxu0
        %2605 = vmatprep.mubr.f32.mxu0 0.0
        %2606 = vmatmul.mubr.f32.gmra.mrb[0].mxu0 %v1206
        %v2607 = vpop.f32.mrb[0].mxu0
        %v2608 = vadd.f32 %v2383, %v2607
        %v2609 = vpop.f32.mrb[0].mxu0
        %2610 = vmatprep.mubr.f32.mxu0 0.0
        %2611 = vmatmul.mubr.f32.gmra.mrb[0].mxu0 %v1207
        %v2612 = vpop.f32.mrb[0].mxu0
        %v2613 = vadd.f32 %v2388, %v2612
        %v2614 = vpop.f32.mrb[0].mxu0
        %2615 = vmatprep.mubr.f32.mxu0 0.0
        %2616 = vmatmul.mubr.f32.gmra.mrb[0].mxu0 %v1208
        %v2617 = vpop.f32.mrb[0].mxu0
        %v2618 = vadd.f32 %v2393, %v2617
        %v2619 = vpop.f32.mrb[0].mxu0
        %2620 = vmatprep.mubr.f32.mxu0 0.0
        %2621 = vmatmul.mubr.f32.gmra.mrb[0].mxu0 %v1209
        %v2622 = vpop.f32.mrb[0].mxu0
        %v2623 = vadd.f32 %v2398, %v2622
        %v2624 = vpop.f32.mrb[0].mxu0
        %2625 = vmatprep.mubr.f32.mxu0 0.0
        %2626 = vmatmul.mubr.f32.gmra.mrb[0].mxu0 %v1210
        %v2627 = vpop.f32.mrb[0].mxu0
        %v2628 = vadd.f32 %v2403, %v2627
        %v2629 = vpop.f32.mrb[0].mxu0
        %2630 = vmatprep.mubr.f32.mxu0 0.0
        %2631 = vmatmul.mubr.f32.gmra.mrb[0].mxu0 %v1211
        %v2632 = vpop.f32.mrb[0].mxu0
        %v2633 = vadd.f32 %v2408, %v2632
        %v2634 = vpop.f32.mrb[0].mxu0
        %2635 = vmatprep.mubr.f32.mxu0 0.0
        %2636 = vmatmul.mubr.f32.gmra.mrb[0].mxu0 %v1212
        %v2637 = vpop.f32.mrb[0].mxu0
        %v2638 = vadd.f32 %v2413, %v2637
        %v2639 = vpop.f32.mrb[0].mxu0
        %2640 = vmatprep.mubr.f32.mxu0 0.0
        %2641 = vmatmul.mubr.f32.gmra.mrb[0].mxu0 %v1213
        %v2642 = vpop.f32.mrb[0].mxu0
        %v2643 = vadd.f32 %v2418, %v2642
        %v2644 = vpop.f32.mrb[0].mxu0
        %2645 = vmatprep.mubr.f32.mxu0 0.0
        %2646 = vmatmul.mubr.f32.gmra.mrb[0].mxu0 %v1214
        %v2647 = vpop.f32.mrb[0].mxu0
        %v2648 = vadd.f32 %v2423, %v2647
        %v2649 = vpop.f32.mrb[0].mxu0
        %2650 = vmatprep.mubr.f32.mxu0 0.0
        %2651 = vmatmul.mubr.f32.gmra.mrb[0].mxu0 %v1215
        %v2652 = vpop.f32.mrb[0].mxu0
        %v2653 = vadd.f32 %v2428, %v2652
        %v2654 = vpop.f32.mrb[0].mxu0
        %2655 = vmatprep.mubr.f32.mxu0 0.0
        %2656 = vmatmul.mubr.f32.gmra.mrb[0].mxu0 %v1216
        %v2657 = vpop.f32.mrb[0].mxu0
        %v2658 = vadd.f32 %v2433, %v2657
        %v2659 = vpop.f32.mrb[0].mxu0
        %2660 = vmatprep.mubr.f32.mxu0 0.0
        %2661 = vmatmul.mubr.f32.gmra.mrb[0].mxu0 %v1217
        %v2662 = vpop.f32.mrb[0].mxu0
        %v2663 = vadd.f32 %v2438, %v2662
        %v2664 = vpop.f32.mrb[0].mxu0
        %2665 = vmatprep.mubr.f32.mxu0 0.0
        %2666 = vmatmul.mubr.f32.gmra.mrb[0].mxu0 %v1218
        %v2667 = vpop.f32.mrb[0].mxu0
        %v2668 = vadd.f32 %v2443, %v2667
        %v2669 = vpop.f32.mrb[0].mxu0
        %2670 = vmatprep.mubr.f32.mxu0 0.0
        %2671 = vmatmul.mubr.f32.gmra.mrb[0].mxu0 %v1219
        %v2672 = vpop.f32.mrb[0].mxu0
        %v2673 = vadd.f32 %v2448, %v2672
        %v2674 = vpop.f32.mrb[0].mxu0
        %2675 = vmatprep.mubr.f32.mxu0 0.0
        %2676 = vmatmul.mubr.f32.gmra.mrb[0].mxu0 %v1220
        %v2677 = vpop.f32.mrb[0].mxu0
        %v2678 = vadd.f32 %v2453, %v2677
        %v2679 = vpop.f32.mrb[0].mxu0
        %2680 = vmatprep.mubr.f32.mxu0 0.0
        %2681 = vmatmul.mubr.f32.gmra.mrb[0].mxu0 %v1221
        %v2682 = vpop.f32.mrb[0].mxu0
        %v2683 = vadd.f32 %v2458, %v2682
        %v2684 = vpop.f32.mrb[0].mxu0
        %2685 = vmatprep.mubr.f32.mxu0 0.0
        %2686 = vmatmul.mubr.f32.gmra.mrb[0].mxu0 %v1222
        %v2687 = vpop.f32.mrb[0].mxu0
        %v2688 = vadd.f32 %v2463, %v2687
        %v2689 = vpop.f32.mrb[0].mxu0
        %2690 = vmatprep.mubr.f32.mxu0 0.0
        %2691 = vmatmul.mubr.f32.gmra.mrb[0].mxu0 %v1223
        %v2692 = vpop.f32.mrb[0].mxu0
        %v2693 = vadd.f32 %v2468, %v2692
        %v2694 = vpop.f32.mrb[0].mxu0
        %2695 = vmatprep.mubr.f32.mxu0 0.0
        %2696 = vmatmul.mubr.f32.gmra.mrb[0].mxu0 %v1224
        %v2697 = vpop.f32.mrb[0].mxu0
        %v2698 = vadd.f32 %v2473, %v2697
        %v2699 = vpop.f32.mrb[0].mxu0
        %2700 = vmatprep.mubr.f32.mxu0 0.0
        %2701 = vmatmul.mubr.f32.gmra.mrb[0].mxu0 %v1225
        %v2702 = vpop.f32.mrb[0].mxu0
        %v2703 = vadd.f32 %v2478, %v2702
        %v2704 = vpop.f32.mrb[0].mxu0
        %2705 = vmatprep.mubr.f32.mxu0 0.0
        %2706 = vmatmul.mubr.f32.gmra.mrb[0].mxu0 %v1226
        %v2707 = vpop.f32.mrb[0].mxu0
        %v2708 = vadd.f32 %v2483, %v2707
        %v2709 = vpop.f32.mrb[0].mxu0
        %2710 = vmatprep.mubr.f32.mxu0 0.0
        %2711 = vmatmul.mubr.f32.gmra.mrb[0].mxu0 %v1227
        %v2712 = vpop.f32.mrb[0].mxu0
        %v2713 = vadd.f32 %v2488, %v2712
        %v2714 = vpop.f32.mrb[0].mxu0
        %2715 = vdwg.mxu0
        %v2716 = vadd.f32 %v2558, %v2118
        %v2717 = vadd.f32 %v2563, %v2123
        %v2718 = vadd.f32 %v2568, %v2128
        %v2719 = vadd.f32 %v2573, %v2133
        %v2720 = vadd.f32 %v2578, %v2138
        %v2721 = vadd.f32 %v2583, %v2143
        %v2722 = vadd.f32 %v2588, %v2148
        %v2723 = vadd.f32 %v2593, %v2153
        %v2724 = vadd.f32 %v2598, %v2158
        %v2725 = vadd.f32 %v2603, %v2163
        %v2726 = vadd.f32 %v2608, %v2168
        %v2727 = vadd.f32 %v2613, %v2173
        %v2728 = vadd.f32 %v2618, %v2178
        %v2729 = vadd.f32 %v2623, %v2183
        %v2730 = vadd.f32 %v2628, %v2188
        %v2731 = vadd.f32 %v2633, %v2193
        %v2732 = vadd.f32 %v2638, %v2198
        %v2733 = vadd.f32 %v2643, %v2203
        %v2734 = vadd.f32 %v2648, %v2208
        %v2735 = vadd.f32 %v2653, %v2213
        %v2736 = vadd.f32 %v2658, %v2218
        %v2737 = vadd.f32 %v2663, %v2223
        %v2738 = vadd.f32 %v2668, %v2228
        %v2739 = vadd.f32 %v2673, %v2233
        %v2740 = vadd.f32 %v2678, %v2238
        %v2741 = vadd.f32 %v2683, %v2243
        %v2742 = vadd.f32 %v2688, %v2248
        %v2743 = vadd.f32 %v2693, %v2253
        %v2744 = vadd.f32 %v2698, %v2258
        %v2745 = vadd.f32 %v2703, %v2263
        %v2746 = vadd.f32 %v2708, 0.0
        %v2747 = vadd.f32 %v2713, 0.0
        %v2748 = vld [vmem:[#allocation7] sm:$0x1]
        %v2750 = vlaneseq
        %v2751 = vshrl.u32 %v2750, 7
        %v2752 = vsub.s32 0, %v2751
        %v2753 = vrot.slane %v2748, %v2752
        %v2755 = vadd.f32 %v2716, %v2753
        %v2756 = vadd.f32 %v2717, %v2753
        %v2757 = vadd.f32 %v2718, %v2753
        %v2758 = vadd.f32 %v2719, %v2753
        %v2759 = vadd.f32 %v2720, %v2753
        %v2760 = vadd.f32 %v2721, %v2753
        %v2761 = vadd.f32 %v2722, %v2753
        %v2762 = vadd.f32 %v2723, %v2753
        %v2763 = vadd.f32 %v2724, %v2753
        %v2764 = vadd.f32 %v2725, %v2753
        %v2765 = vadd.f32 %v2726, %v2753
        %v2766 = vadd.f32 %v2727, %v2753
        %v2767 = vadd.f32 %v2728, %v2753
        %v2768 = vadd.f32 %v2729, %v2753
        %v2769 = vadd.f32 %v2730, %v2753
        %v2770 = vadd.f32 %v2731, %v2753
        %v2771 = vadd.f32 %v2732, %v2753
        %v2772 = vadd.f32 %v2733, %v2753
        %v2773 = vadd.f32 %v2734, %v2753
        %v2774 = vadd.f32 %v2735, %v2753
        %v2775 = vadd.f32 %v2736, %v2753
        %v2776 = vadd.f32 %v2737, %v2753
        %v2777 = vadd.f32 %v2738, %v2753
        %v2778 = vadd.f32 %v2739, %v2753
        %v2779 = vadd.f32 %v2740, %v2753
        %v2780 = vadd.f32 %v2741, %v2753
        %v2781 = vadd.f32 %v2742, %v2753
        %v2782 = vadd.f32 %v2743, %v2753
        %v2783 = vadd.f32 %v2744, %v2753
        %v2784 = vadd.f32 %v2745, %v2753
        %v2785 = vadd.f32 %v2746, %v2753
        %v2786 = vadd.f32 %v2747, %v2753
        %v2787 = vmax.f32 %v2755, 0.0
        %v2788 = vmax.f32 %v2756, 0.0
        %v2789 = vmax.f32 %v2757, 0.0
        %v2790 = vmax.f32 %v2758, 0.0
        %v2791 = vmax.f32 %v2759, 0.0
        %v2792 = vmax.f32 %v2760, 0.0
        %v2793 = vmax.f32 %v2761, 0.0
        %v2794 = vmax.f32 %v2762, 0.0
        %v2795 = vmax.f32 %v2763, 0.0
        %v2796 = vmax.f32 %v2764, 0.0
        %v2797 = vmax.f32 %v2765, 0.0
        %v2798 = vmax.f32 %v2766, 0.0
        %v2799 = vmax.f32 %v2767, 0.0
        %v2800 = vmax.f32 %v2768, 0.0
        %v2801 = vmax.f32 %v2769, 0.0
        %v2802 = vmax.f32 %v2770, 0.0
        %v2803 = vmax.f32 %v2771, 0.0
        %v2804 = vmax.f32 %v2772, 0.0
        %v2805 = vmax.f32 %v2773, 0.0
        %v2806 = vmax.f32 %v2774, 0.0
        %v2807 = vmax.f32 %v2775, 0.0
        %v2808 = vmax.f32 %v2776, 0.0
        %v2809 = vmax.f32 %v2777, 0.0
        %v2810 = vmax.f32 %v2778, 0.0
        %v2811 = vmax.f32 %v2779, 0.0
        %v2812 = vmax.f32 %v2780, 0.0
        %v2813 = vmax.f32 %v2781, 0.0
        %v2814 = vmax.f32 %v2782, 0.0
        %v2815 = vmax.f32 %v2783, 0.0
        %v2816 = vmax.f32 %v2784, 0.0
        %v2817 = vmax.f32 %v2785, 0.0
        %v2818 = vmax.f32 %v2786, 0.0
        %v2851 = vrot.slane %v2787, 7
        %v2852 = vrot.slane %v2788, 7
        %v2853 = vsel %vm842, %v2851, %v2852
        %v2854 = vrot.slane %v2789, 7
        %v2855 = vsel %vm842, %v2852, %v2854
        %v2856 = vrot.slane %v2790, 7
        %v2857 = vsel %vm842, %v2854, %v2856
        %v2858 = vrot.slane %v2791, 7
        %v2859 = vsel %vm842, %v2856, %v2858
        %v2860 = vrot.slane %v2792, 7
        %v2861 = vsel %vm842, %v2858, %v2860
        %v2862 = vrot.slane %v2793, 7
        %v2863 = vsel %vm842, %v2860, %v2862
        %v2864 = vrot.slane %v2794, 7
        %v2865 = vsel %vm842, %v2862, %v2864
        %v2866 = vrot.slane %v2795, 7
        %v2867 = vsel %vm842, %v2864, %v2866
        %v2868 = vrot.slane %v2796, 7
        %v2869 = vsel %vm842, %v2866, %v2868
        %v2870 = vrot.slane %v2797, 7
        %v2871 = vsel %vm842, %v2868, %v2870
        %v2872 = vrot.slane %v2798, 7
        %v2873 = vsel %vm842, %v2870, %v2872
        %v2874 = vrot.slane %v2799, 7
        %v2875 = vsel %vm842, %v2872, %v2874
        %v2876 = vrot.slane %v2800, 7
        %v2877 = vsel %vm842, %v2874, %v2876
        %v2878 = vrot.slane %v2801, 7
        %v2879 = vsel %vm842, %v2876, %v2878
        %v2880 = vrot.slane %v2802, 7
        %v2881 = vsel %vm842, %v2878, %v2880
        %v2882 = vrot.slane %v2803, 7
        %v2883 = vsel %vm842, %v2880, %v2882
        %v2884 = vrot.slane %v2804, 7
        %v2885 = vsel %vm842, %v2882, %v2884
        %v2886 = vrot.slane %v2805, 7
        %v2887 = vsel %vm842, %v2884, %v2886
        %v2888 = vrot.slane %v2806, 7
        %v2889 = vsel %vm842, %v2886, %v2888
        %v2890 = vrot.slane %v2807, 7
        %v2891 = vsel %vm842, %v2888, %v2890
        %v2892 = vrot.slane %v2808, 7
        %v2893 = vsel %vm842, %v2890, %v2892
        %v2894 = vrot.slane %v2809, 7
        %v2895 = vsel %vm842, %v2892, %v2894
        %v2896 = vrot.slane %v2810, 7
        %v2897 = vsel %vm842, %v2894, %v2896
        %v2898 = vrot.slane %v2811, 7
        %v2899 = vsel %vm842, %v2896, %v2898
        %v2900 = vrot.slane %v2812, 7
        %v2901 = vsel %vm842, %v2898, %v2900
        %v2902 = vrot.slane %v2813, 7
        %v2903 = vsel %vm842, %v2900, %v2902
        %v2904 = vrot.slane %v2814, 7
        %v2905 = vsel %vm842, %v2902, %v2904
        %v2906 = vrot.slane %v2815, 7
        %v2907 = vsel %vm842, %v2904, %v2906
        %v2908 = vrot.slane %v2816, 7
        %v2909 = vsel %vm842, %v2906, %v2908
        %v2910 = vrot.slane %v2817, 7
        %v2911 = vsel %vm842, %v2908, %v2910
        %v2912 = vrot.slane %v2818, 7
        %v2913 = vsel %vm842, %v2910, %v2912
        %v2946 = vsel %vm842, 0.0, %v2851
        %v2947 = vrot.slane %v2787, 1
        %v2948 = vrot.slane %v2788, 1
        %v2949 = vsel %vm939, %v2947, %v2948
        %v2950 = vrot.slane %v2789, 1
        %v2951 = vsel %vm939, %v2948, %v2950
        %v2952 = vrot.slane %v2790, 1
        %v2953 = vsel %vm939, %v2950, %v2952
        %v2954 = vrot.slane %v2791, 1
        %v2955 = vsel %vm939, %v2952, %v2954
        %v2956 = vrot.slane %v2792, 1
        %v2957 = vsel %vm939, %v2954, %v2956
        %v2958 = vrot.slane %v2793, 1
        %v2959 = vsel %vm939, %v2956, %v2958
        %v2960 = vrot.slane %v2794, 1
        %v2961 = vsel %vm939, %v2958, %v2960
        %v2962 = vrot.slane %v2795, 1
        %v2963 = vsel %vm939, %v2960, %v2962
        %v2964 = vrot.slane %v2796, 1
        %v2965 = vsel %vm939, %v2962, %v2964
        %v2966 = vrot.slane %v2797, 1
        %v2967 = vsel %vm939, %v2964, %v2966
        %v2968 = vrot.slane %v2798, 1
        %v2969 = vsel %vm939, %v2966, %v2968
        %v2970 = vrot.slane %v2799, 1
        %v2971 = vsel %vm939, %v2968, %v2970
        %v2972 = vrot.slane %v2800, 1
        %v2973 = vsel %vm939, %v2970, %v2972
        %v2974 = vrot.slane %v2801, 1
        %v2975 = vsel %vm939, %v2972, %v2974
        %v2976 = vrot.slane %v2802, 1
        %v2977 = vsel %vm939, %v2974, %v2976
        %v2978 = vrot.slane %v2803, 1
        %v2979 = vsel %vm939, %v2976, %v2978
        %v2980 = vrot.slane %v2804, 1
        %v2981 = vsel %vm939, %v2978, %v2980
        %v2982 = vrot.slane %v2805, 1
        %v2983 = vsel %vm939, %v2980, %v2982
        %v2984 = vrot.slane %v2806, 1
        %v2985 = vsel %vm939, %v2982, %v2984
        %v2986 = vrot.slane %v2807, 1
        %v2987 = vsel %vm939, %v2984, %v2986
        %v2988 = vrot.slane %v2808, 1
        %v2989 = vsel %vm939, %v2986, %v2988
        %v2990 = vrot.slane %v2809, 1
        %v2991 = vsel %vm939, %v2988, %v2990
        %v2992 = vrot.slane %v2810, 1
        %v2993 = vsel %vm939, %v2990, %v2992
        %v2994 = vrot.slane %v2811, 1
        %v2995 = vsel %vm939, %v2992, %v2994
        %v2996 = vrot.slane %v2812, 1
        %v2997 = vsel %vm939, %v2994, %v2996
        %v2998 = vrot.slane %v2813, 1
        %v2999 = vsel %vm939, %v2996, %v2998
        %v3000 = vrot.slane %v2814, 1
        %v3001 = vsel %vm939, %v2998, %v3000
        %v3002 = vrot.slane %v2815, 1
        %v3003 = vsel %vm939, %v3000, %v3002
        %v3004 = vrot.slane %v2816, 1
        %v3005 = vsel %vm939, %v3002, %v3004
        %v3006 = vrot.slane %v2817, 1
        %v3007 = vsel %vm939, %v3004, %v3006
        %v3008 = vrot.slane %v2818, 1
        %v3009 = vsel %vm939, %v3006, %v3008
        %v3042 = vsel %vm939, %v3008, 0.0
        %v3043 = vsel %vm1068, 0.0, %v2946
        %v3044 = vsel %vm1069, 0.0, %v2853
        %v3045 = vsel %vm1070, 0.0, %v2855
        %v3046 = vsel %vm1071, 0.0, %v2857
        %v3047 = vsel %vm1072, 0.0, %v2859
        %v3048 = vsel %vm1073, 0.0, %v2861
        %v3049 = vsel %vm1074, 0.0, %v2863
        %v3050 = vsel %vm1075, 0.0, %v2865
        %v3051 = vsel %vm1076, 0.0, %v2867
        %v3052 = vsel %vm1077, 0.0, %v2869
        %v3053 = vsel %vm1078, 0.0, %v2871
        %v3054 = vsel %vm1079, 0.0, %v2873
        %v3055 = vsel %vm1080, 0.0, %v2875
        %v3056 = vsel %vm1081, 0.0, %v2877
        %v3057 = vsel %vm1082, 0.0, %v2879
        %v3058 = vsel %vm1083, 0.0, %v2881
        %v3059 = vsel %vm1084, 0.0, %v2883
        %v3060 = vsel %vm1085, 0.0, %v2885
        %v3061 = vsel %vm1086, 0.0, %v2887
        %v3062 = vsel %vm1087, 0.0, %v2889
        %v3063 = vsel %vm1088, 0.0, %v2891
        %v3064 = vsel %vm1089, 0.0, %v2893
        %v3065 = vsel %vm1090, 0.0, %v2895
        %v3066 = vsel %vm1091, 0.0, %v2897
        %v3067 = vsel %vm1092, 0.0, %v2899
        %v3068 = vsel %vm1093, 0.0, %v2901
        %v3069 = vsel %vm1094, 0.0, %v2903
        %v3070 = vsel %vm1095, 0.0, %v2905
        %v3071 = vsel %vm1096, 0.0, %v2907
        %v3072 = vsel %vm1097, 0.0, %v2909
        %v3073 = vsel %vm1098, 0.0, %v2911
        %v3074 = vsel %vm1099, 0.0, %v2913
        %v3075 = vsel %vm1164, 0.0, %v2949
        %v3076 = vsel %vm1165, 0.0, %v2951
        %v3077 = vsel %vm1166, 0.0, %v2953
        %v3078 = vsel %vm1167, 0.0, %v2955
        %v3079 = vsel %vm1168, 0.0, %v2957
        %v3080 = vsel %vm1169, 0.0, %v2959
        %v3081 = vsel %vm1170, 0.0, %v2961
        %v3082 = vsel %vm1171, 0.0, %v2963
        %v3083 = vsel %vm1172, 0.0, %v2965
        %v3084 = vsel %vm1173, 0.0, %v2967
        %v3085 = vsel %vm1174, 0.0, %v2969
        %v3086 = vsel %vm1175, 0.0, %v2971
        %v3087 = vsel %vm1176, 0.0, %v2973
        %v3088 = vsel %vm1177, 0.0, %v2975
        %v3089 = vsel %vm1178, 0.0, %v2977
        %v3090 = vsel %vm1179, 0.0, %v2979
        %v3091 = vsel %vm1180, 0.0, %v2981
        %v3092 = vsel %vm1181, 0.0, %v2983
        %v3093 = vsel %vm1182, 0.0, %v2985
        %v3094 = vsel %vm1183, 0.0, %v2987
        %v3095 = vsel %vm1184, 0.0, %v2989
        %v3096 = vsel %vm1185, 0.0, %v2991
        %v3097 = vsel %vm1186, 0.0, %v2993
        %v3098 = vsel %vm1187, 0.0, %v2995
        %v3099 = vsel %vm1188, 0.0, %v2997
        %v3100 = vsel %vm1189, 0.0, %v2999
        %v3101 = vsel %vm1190, 0.0, %v3001
        %v3102 = vsel %vm1191, 0.0, %v3003
        %v3103 = vsel %vm1192, 0.0, %v3005
        %v3104 = vsel %vm1193, 0.0, %v3007
        %v3105 = vsel %vm1194, 0.0, %v3009
        %v3106 = vsel %vm1195, 0.0, %v3042
        %v3107 = vld [vmem:[#allocation8] sm:$0xff]
        %v3108 = vld [vmem:[#allocation8 + $0x8] sm:$0xff]
        %v3109 = vld [vmem:[#allocation8 + $0x10] sm:$0xff]
        %v3110 = vld [vmem:[#allocation8 + $0x18] sm:$0xff]
        %v3111 = vld [vmem:[#allocation8 + $0x20] sm:$0xff]
        %v3112 = vld [vmem:[#allocation8 + $0x28] sm:$0xff]
        %v3113 = vld [vmem:[#allocation8 + $0x30] sm:$0xff]
        %v3114 = vld [vmem:[#allocation8 + $0x38] sm:$0xff]
        %v3115 = vld [vmem:[#allocation8 + $0x40] sm:$0xff]
        %v3116 = vld [vmem:[#allocation8 + $0x48] sm:$0xff]
        %v3117 = vld [vmem:[#allocation8 + $0x50] sm:$0xff]
        %v3118 = vld [vmem:[#allocation8 + $0x58] sm:$0xff]
        %v3119 = vld [vmem:[#allocation8 + $0x60] sm:$0xff]
        %v3120 = vld [vmem:[#allocation8 + $0x68] sm:$0xff]
        %v3121 = vld [vmem:[#allocation8 + $0x70] sm:$0xff]
        %v3122 = vld [vmem:[#allocation8 + $0x78] sm:$0xff]
        %v3123 = vld [vmem:[#allocation8 + $0x80] sm:$0xff]
        %v3124 = vld [vmem:[#allocation8 + $0x88] sm:$0xff]
        %v3125 = vld [vmem:[#allocation8 + $0x90] sm:$0xff]
        %v3126 = vld [vmem:[#allocation8 + $0x98] sm:$0xff]
        %v3127 = vld [vmem:[#allocation8 + $0xa0] sm:$0xff]
        %v3128 = vld [vmem:[#allocation8 + $0xa8] sm:$0xff]
        %v3129 = vld [vmem:[#allocation8 + $0xb0] sm:$0xff]
        %v3130 = vld [vmem:[#allocation8 + $0xb8] sm:$0xff]
        %v3131 = vld [vmem:[#allocation8 + $0xc0] sm:$0xff]
        %v3132 = vld [vmem:[#allocation8 + $0xc8] sm:$0xff]
        %v3133 = vld [vmem:[#allocation8 + $0xd0] sm:$0xff]
        %v3134 = vld [vmem:[#allocation8 + $0xd8] sm:$0xff]
        %v3135 = vld [vmem:[#allocation8 + $0xe0] sm:$0xff]
        %v3136 = vld [vmem:[#allocation8 + $0xe8] sm:$0xff]
        %v3137 = vld [vmem:[#allocation8 + $0xf0] sm:$0xff]
        %v3138 = vld [vmem:[#allocation8 + $0xf8] sm:$0xff]
        %v3139 = vld [vmem:[#allocation8 + $0x100] sm:$0xff]
        %v3140 = vld [vmem:[#allocation8 + $0x108] sm:$0xff]
        %v3141 = vld [vmem:[#allocation8 + $0x110] sm:$0xff]
        %v3142 = vld [vmem:[#allocation8 + $0x118] sm:$0xff]
        %v3143 = vld [vmem:[#allocation8 + $0x120] sm:$0xff]
        %v3144 = vld [vmem:[#allocation8 + $0x128] sm:$0xff]
        %v3145 = vld [vmem:[#allocation8 + $0x130] sm:$0xff]
        %v3146 = vld [vmem:[#allocation8 + $0x138] sm:$0xff]
        %v3147 = vld [vmem:[#allocation8 + $0x140] sm:$0xff]
        %v3148 = vld [vmem:[#allocation8 + $0x148] sm:$0xff]
        %v3149 = vld [vmem:[#allocation8 + $0x150] sm:$0xff]
        %v3150 = vld [vmem:[#allocation8 + $0x158] sm:$0xff]
        %v3151 = vld [vmem:[#allocation8 + $0x160] sm:$0xff]
        %v3152 = vld [vmem:[#allocation8 + $0x168] sm:$0xff]
        %v3153 = vld [vmem:[#allocation8 + $0x170] sm:$0xff]
        %v3154 = vld [vmem:[#allocation8 + $0x178] sm:$0xff]
        %3155 = vmatprep.subr.mxu0 0.0
        %3156 = vmatpush1.msra.mxu0 %v3107
        %3157 = vmatprep.subr.mxu0 0.0
        %3158 = vmatpush1.msra.mxu0 %v3108
        %3159 = vmatprep.subr.mxu0 0.0
        %3160 = vmatpush1.msra.mxu0 %v3109
        %3161 = vmatprep.subr.mxu0 0.0
        %3162 = vmatpush1.msra.mxu0 %v3110
        %3163 = vmatprep.subr.mxu0 0.0
        %3164 = vmatpush1.msra.mxu0 %v3111
        %3165 = vmatprep.subr.mxu0 0.0
        %3166 = vmatpush1.msra.mxu0 %v3112
        %3167 = vmatprep.subr.mxu0 0.0
        %3168 = vmatpush1.msra.mxu0 %v3113
        %3169 = vmatprep.subr.mxu0 0.0
        %3170 = vmatpush1.msra.mxu0 %v3114
        %3171 = vmatprep.subr.mxu0 0.0
        %3172 = vmatpush1.msra.mxu0 %v3115
        %3173 = vmatprep.subr.mxu0 0.0
        %3174 = vmatpush1.msra.mxu0 %v3116
        %3175 = vmatprep.subr.mxu0 0.0
        %3176 = vmatpush1.msra.mxu0 %v3117
        %3177 = vmatprep.subr.mxu0 0.0
        %3178 = vmatpush1.msra.mxu0 %v3118
        %3179 = vmatprep.subr.mxu0 0.0
        %3180 = vmatpush1.msra.mxu0 %v3119
        %3181 = vmatprep.subr.mxu0 0.0
        %3182 = vmatpush1.msra.mxu0 %v3120
        %3183 = vmatprep.subr.mxu0 0.0
        %3184 = vmatpush1.msra.mxu0 %v3121
        %3185 = vmatprep.subr.mxu0 0.0
        %3186 = vmatpush1.msra.mxu0 %v3122
        %3187 = vmatprep.subr.mxu0 0.0
        %3188 = vmatpush1.msra.mxu0 %v3123
        %3189 = vmatprep.subr.mxu0 0.0
        %3190 = vmatpush1.msra.mxu0 %v3124
        %3191 = vmatprep.subr.mxu0 0.0
        %3192 = vmatpush1.msra.mxu0 %v3125
        %3193 = vmatprep.subr.mxu0 0.0
        %3194 = vmatpush1.msra.mxu0 %v3126
        %3195 = vmatprep.subr.mxu0 0.0
        %3196 = vmatpush1.msra.mxu0 %v3127
        %3197 = vmatprep.subr.mxu0 0.0
        %3198 = vmatpush1.msra.mxu0 %v3128
        %3199 = vmatprep.subr.mxu0 0.0
        %3200 = vmatpush1.msra.mxu0 %v3129
        %3201 = vmatprep.subr.mxu0 0.0
        %3202 = vmatpush1.msra.mxu0 %v3130
        %3203 = vmatprep.subr.mxu0 0.0
        %3204 = vmatpush1.msra.mxu0 %v3131
        %3205 = vmatprep.subr.mxu0 0.0
        %3206 = vmatpush1.msra.mxu0 %v3132
        %3207 = vmatprep.subr.mxu0 0.0
        %3208 = vmatpush1.msra.mxu0 %v3133
        %3209 = vmatprep.subr.mxu0 0.0
        %3210 = vmatpush1.msra.mxu0 %v3134
        %3211 = vmatprep.subr.mxu0 0.0
        %3212 = vmatpush1.msra.mxu0 %v3135
        %3213 = vmatprep.subr.mxu0 0.0
        %3214 = vmatpush1.msra.mxu0 %v3136
        %3215 = vmatprep.subr.mxu0 0.0
        %3216 = vmatpush1.msra.mxu0 %v3137
        %3217 = vmatprep.subr.mxu0 0.0
        %3218 = vmatpush1.msra.mxu0 %v3138
        %3219 = vmatprep.mubr.f32.mxu0 %v2787
        %3220 = vmatmul.mubr.f32.gmra.mrb[0].mxu0 %v3043
        %v3221 = vpop.f32.mrb[0].mxu0
        %v3222 = vadd.f32 0.0, %v3221
        %v3223 = vpop.f32.mrb[0].mxu0
        %3224 = vmatprep.mubr.f32.mxu0 %v2788
        %3225 = vmatmul.mubr.f32.gmra.mrb[0].mxu0 %v3044
        %v3226 = vpop.f32.mrb[0].mxu0
        %v3227 = vadd.f32 0.0, %v3226
        %v3228 = vpop.f32.mrb[0].mxu0
        %3229 = vmatprep.mubr.f32.mxu0 %v2789
        %3230 = vmatmul.mubr.f32.gmra.mrb[0].mxu0 %v3045
        %v3231 = vpop.f32.mrb[0].mxu0
        %v3232 = vadd.f32 0.0, %v3231
        %v3233 = vpop.f32.mrb[0].mxu0
        %3234 = vmatprep.mubr.f32.mxu0 %v2790
        %3235 = vmatmul.mubr.f32.gmra.mrb[0].mxu0 %v3046
        %v3236 = vpop.f32.mrb[0].mxu0
        %v3237 = vadd.f32 0.0, %v3236
        %v3238 = vpop.f32.mrb[0].mxu0
        %3239 = vmatprep.mubr.f32.mxu0 %v2791
        %3240 = vmatmul.mubr.f32.gmra.mrb[0].mxu0 %v3047
        %v3241 = vpop.f32.mrb[0].mxu0
        %v3242 = vadd.f32 0.0, %v3241
        %v3243 = vpop.f32.mrb[0].mxu0
        %3244 = vmatprep.mubr.f32.mxu0 %v2792
        %3245 = vmatmul.mubr.f32.gmra.mrb[0].mxu0 %v3048
        %v3246 = vpop.f32.mrb[0].mxu0
        %v3247 = vadd.f32 0.0, %v3246
        %v3248 = vpop.f32.mrb[0].mxu0
        %3249 = vmatprep.mubr.f32.mxu0 %v2793
        %3250 = vmatmul.mubr.f32.gmra.mrb[0].mxu0 %v3049
        %v3251 = vpop.f32.mrb[0].mxu0
        %v3252 = vadd.f32 0.0, %v3251
        %v3253 = vpop.f32.mrb[0].mxu0
        %3254 = vmatprep.mubr.f32.mxu0 %v2794
        %3255 = vmatmul.mubr.f32.gmra.mrb[0].mxu0 %v3050
        %v3256 = vpop.f32.mrb[0].mxu0
        %v3257 = vadd.f32 0.0, %v3256
        %v3258 = vpop.f32.mrb[0].mxu0
        %3259 = vmatprep.mubr.f32.mxu0 %v2795
        %3260 = vmatmul.mubr.f32.gmra.mrb[0].mxu0 %v3051
        %v3261 = vpop.f32.mrb[0].mxu0
        %v3262 = vadd.f32 0.0, %v3261
        %v3263 = vpop.f32.mrb[0].mxu0
        %3264 = vmatprep.mubr.f32.mxu0 %v2796
        %3265 = vmatmul.mubr.f32.gmra.mrb[0].mxu0 %v3052
        %v3266 = vpop.f32.mrb[0].mxu0
        %v3267 = vadd.f32 0.0, %v3266
        %v3268 = vpop.f32.mrb[0].mxu0
        %3269 = vmatprep.mubr.f32.mxu0 %v2797
        %3270 = vmatmul.mubr.f32.gmra.mrb[0].mxu0 %v3053
        %v3271 = vpop.f32.mrb[0].mxu0
        %v3272 = vadd.f32 0.0, %v3271
        %v3273 = vpop.f32.mrb[0].mxu0
        %3274 = vmatprep.mubr.f32.mxu0 %v2798
        %3275 = vmatmul.mubr.f32.gmra.mrb[0].mxu0 %v3054
        %v3276 = vpop.f32.mrb[0].mxu0
        %v3277 = vadd.f32 0.0, %v3276
        %v3278 = vpop.f32.mrb[0].mxu0
        %3279 = vmatprep.mubr.f32.mxu0 %v2799
        %3280 = vmatmul.mubr.f32.gmra.mrb[0].mxu0 %v3055
        %v3281 = vpop.f32.mrb[0].mxu0
        %v3282 = vadd.f32 0.0, %v3281
        %v3283 = vpop.f32.mrb[0].mxu0
        %3284 = vmatprep.mubr.f32.mxu0 %v2800
        %3285 = vmatmul.mubr.f32.gmra.mrb[0].mxu0 %v3056
        %v3286 = vpop.f32.mrb[0].mxu0
        %v3287 = vadd.f32 0.0, %v3286
        %v3288 = vpop.f32.mrb[0].mxu0
        %3289 = vmatprep.mubr.f32.mxu0 %v2801
        %3290 = vmatmul.mubr.f32.gmra.mrb[0].mxu0 %v3057
        %v3291 = vpop.f32.mrb[0].mxu0
        %v3292 = vadd.f32 0.0, %v3291
        %v3293 = vpop.f32.mrb[0].mxu0
        %3294 = vmatprep.mubr.f32.mxu0 %v2802
        %3295 = vmatmul.mubr.f32.gmra.mrb[0].mxu0 %v3058
        %v3296 = vpop.f32.mrb[0].mxu0
        %v3297 = vadd.f32 0.0, %v3296
        %v3298 = vpop.f32.mrb[0].mxu0
        %3299 = vmatprep.mubr.f32.mxu0 %v2803
        %3300 = vmatmul.mubr.f32.gmra.mrb[0].mxu0 %v3059
        %v3301 = vpop.f32.mrb[0].mxu0
        %v3302 = vadd.f32 0.0, %v3301
        %v3303 = vpop.f32.mrb[0].mxu0
        %3304 = vmatprep.mubr.f32.mxu0 %v2804
        %3305 = vmatmul.mubr.f32.gmra.mrb[0].mxu0 %v3060
        %v3306 = vpop.f32.mrb[0].mxu0
        %v3307 = vadd.f32 0.0, %v3306
        %v3308 = vpop.f32.mrb[0].mxu0
        %3309 = vmatprep.mubr.f32.mxu0 %v2805
        %3310 = vmatmul.mubr.f32.gmra.mrb[0].mxu0 %v3061
        %v3311 = vpop.f32.mrb[0].mxu0
        %v3312 = vadd.f32 0.0, %v3311
        %v3313 = vpop.f32.mrb[0].mxu0
        %3314 = vmatprep.mubr.f32.mxu0 %v2806
        %3315 = vmatmul.mubr.f32.gmra.mrb[0].mxu0 %v3062
        %v3316 = vpop.f32.mrb[0].mxu0
        %v3317 = vadd.f32 0.0, %v3316
        %v3318 = vpop.f32.mrb[0].mxu0
        %3319 = vmatprep.mubr.f32.mxu0 %v2807
        %3320 = vmatmul.mubr.f32.gmra.mrb[0].mxu0 %v3063
        %v3321 = vpop.f32.mrb[0].mxu0
        %v3322 = vadd.f32 0.0, %v3321
        %v3323 = vpop.f32.mrb[0].mxu0
        %3324 = vmatprep.mubr.f32.mxu0 %v2808
        %3325 = vmatmul.mubr.f32.gmra.mrb[0].mxu0 %v3064
        %v3326 = vpop.f32.mrb[0].mxu0
        %v3327 = vadd.f32 0.0, %v3326
        %v3328 = vpop.f32.mrb[0].mxu0
        %3329 = vmatprep.mubr.f32.mxu0 %v2809
        %3330 = vmatmul.mubr.f32.gmra.mrb[0].mxu0 %v3065
        %v3331 = vpop.f32.mrb[0].mxu0
        %v3332 = vadd.f32 0.0, %v3331
        %v3333 = vpop.f32.mrb[0].mxu0
        %3334 = vmatprep.mubr.f32.mxu0 %v2810
        %3335 = vmatmul.mubr.f32.gmra.mrb[0].mxu0 %v3066
        %v3336 = vpop.f32.mrb[0].mxu0
        %v3337 = vadd.f32 0.0, %v3336
        %v3338 = vpop.f32.mrb[0].mxu0
        %3339 = vmatprep.mubr.f32.mxu0 %v2811
        %3340 = vmatmul.mubr.f32.gmra.mrb[0].mxu0 %v3067
        %v3341 = vpop.f32.mrb[0].mxu0
        %v3342 = vadd.f32 0.0, %v3341
        %v3343 = vpop.f32.mrb[0].mxu0
        %3344 = vmatprep.mubr.f32.mxu0 %v2812
        %3345 = vmatmul.mubr.f32.gmra.mrb[0].mxu0 %v3068
        %v3346 = vpop.f32.mrb[0].mxu0
        %v3347 = vadd.f32 0.0, %v3346
        %v3348 = vpop.f32.mrb[0].mxu0
        %3349 = vmatprep.mubr.f32.mxu0 %v2813
        %3350 = vmatmul.mubr.f32.gmra.mrb[0].mxu0 %v3069
        %v3351 = vpop.f32.mrb[0].mxu0
        %v3352 = vadd.f32 0.0, %v3351
        %v3353 = vpop.f32.mrb[0].mxu0
        %3354 = vmatprep.mubr.f32.mxu0 %v2814
        %3355 = vmatmul.mubr.f32.gmra.mrb[0].mxu0 %v3070
        %v3356 = vpop.f32.mrb[0].mxu0
        %v3357 = vadd.f32 0.0, %v3356
        %v3358 = vpop.f32.mrb[0].mxu0
        %3359 = vmatprep.mubr.f32.mxu0 %v2815
        %3360 = vmatmul.mubr.f32.gmra.mrb[0].mxu0 %v3071
        %v3361 = vpop.f32.mrb[0].mxu0
        %v3362 = vadd.f32 0.0, %v3361
        %v3363 = vpop.f32.mrb[0].mxu0
        %3364 = vmatprep.mubr.f32.mxu0 %v2816
        %3365 = vmatmul.mubr.f32.gmra.mrb[0].mxu0 %v3072
        %v3366 = vpop.f32.mrb[0].mxu0
        %v3367 = vadd.f32 0.0, %v3366
        %v3368 = vpop.f32.mrb[0].mxu0
        %3369 = vmatprep.mubr.f32.mxu0 %v2817
        %3370 = vmatmul.mubr.f32.gmra.mrb[0].mxu0 %v3073
        %v3371 = vpop.f32.mrb[0].mxu0
        %v3372 = vpop.f32.mrb[0].mxu0
        %3373 = vmatprep.mubr.f32.mxu0 %v2818
        %3374 = vmatmul.mubr.f32.gmra.mrb[0].mxu0 %v3074
        %v3375 = vpop.f32.mrb[0].mxu0
        %v3376 = vpop.f32.mrb[0].mxu0
        %3377 = vdwg.mxu0
        %3378 = vmatprep.subr.mxu0 0.0
        %3379 = vmatpush1.msra.mxu0 %v3139
        %3380 = vmatprep.subr.mxu0 0.0
        %3381 = vmatpush1.msra.mxu0 %v3140
        %3382 = vmatprep.subr.mxu0 0.0
        %3383 = vmatpush1.msra.mxu0 %v3141
        %3384 = vmatprep.subr.mxu0 0.0
        %3385 = vmatpush1.msra.mxu0 %v3142
        %3386 = vmatprep.subr.mxu0 0.0
        %3387 = vmatpush1.msra.mxu0 %v3143
        %3388 = vmatprep.subr.mxu0 0.0
        %3389 = vmatpush1.msra.mxu0 %v3144
        %3390 = vmatprep.subr.mxu0 0.0
        %3391 = vmatpush1.msra.mxu0 %v3145
        %3392 = vmatprep.subr.mxu0 0.0
        %3393 = vmatpush1.msra.mxu0 %v3146
        %3394 = vmatprep.subr.mxu0 0.0
        %3395 = vmatpush1.msra.mxu0 %v3147
        %3396 = vmatprep.subr.mxu0 0.0
        %3397 = vmatpush1.msra.mxu0 %v3148
        %3398 = vmatprep.subr.mxu0 0.0
        %3399 = vmatpush1.msra.mxu0 %v3149
        %3400 = vmatprep.subr.mxu0 0.0
        %3401 = vmatpush1.msra.mxu0 %v3150
        %3402 = vmatprep.subr.mxu0 0.0
        %3403 = vmatpush1.msra.mxu0 %v3151
        %3404 = vmatprep.subr.mxu0 0.0
        %3405 = vmatpush1.msra.mxu0 %v3152
        %3406 = vmatprep.subr.mxu0 0.0
        %3407 = vmatpush1.msra.mxu0 %v3153
        %3408 = vmatprep.subr.mxu0 0.0
        %3409 = vmatpush1.msra.mxu0 %v3154
        %3410 = vmatprep.subr.mxu0 0.0
        %3411 = vmatpush1.msra.mxu0 0.0
        %3412 = vmatprep.subr.mxu0 0.0
        %3413 = vmatpush1.msra.mxu0 0.0
        %3414 = vmatprep.subr.mxu0 0.0
        %3415 = vmatpush1.msra.mxu0 0.0
        %3416 = vmatprep.subr.mxu0 0.0
        %3417 = vmatpush1.msra.mxu0 0.0
        %3418 = vmatprep.subr.mxu0 0.0
        %3419 = vmatpush1.msra.mxu0 0.0
        %3420 = vmatprep.subr.mxu0 0.0
        %3421 = vmatpush1.msra.mxu0 0.0
        %3422 = vmatprep.subr.mxu0 0.0
        %3423 = vmatpush1.msra.mxu0 0.0
        %3424 = vmatprep.subr.mxu0 0.0
        %3425 = vmatpush1.msra.mxu0 0.0
        %3426 = vmatprep.subr.mxu0 0.0
        %3427 = vmatpush1.msra.mxu0 0.0
        %3428 = vmatprep.subr.mxu0 0.0
        %3429 = vmatpush1.msra.mxu0 0.0
        %3430 = vmatprep.subr.mxu0 0.0
        %3431 = vmatpush1.msra.mxu0 0.0
        %3432 = vmatprep.subr.mxu0 0.0
        %3433 = vmatpush1.msra.mxu0 0.0
        %3434 = vmatprep.subr.mxu0 0.0
        %3435 = vmatpush1.msra.mxu0 0.0
        %3436 = vmatprep.subr.mxu0 0.0
        %3437 = vmatpush1.msra.mxu0 0.0
        %3438 = vmatprep.subr.mxu0 0.0
        %3439 = vmatpush1.msra.mxu0 0.0
        %3440 = vmatprep.subr.mxu0 0.0
        %3441 = vmatpush1.msra.mxu0 0.0
        %3442 = vmatprep.mubr.f32.mxu0 0.0
        %3443 = vmatmul.mubr.f32.gmra.mrb[0].mxu0 %v3075
        %v3444 = vpop.f32.mrb[0].mxu0
        %v3445 = vadd.f32 %v3222, %v3444
        %v3446 = vpop.f32.mrb[0].mxu0
        %3447 = vmatprep.mubr.f32.mxu0 0.0
        %3448 = vmatmul.mubr.f32.gmra.mrb[0].mxu0 %v3076
        %v3449 = vpop.f32.mrb[0].mxu0
        %v3450 = vadd.f32 %v3227, %v3449
        %v3451 = vpop.f32.mrb[0].mxu0
        %3452 = vmatprep.mubr.f32.mxu0 0.0
        %3453 = vmatmul.mubr.f32.gmra.mrb[0].mxu0 %v3077
        %v3454 = vpop.f32.mrb[0].mxu0
        %v3455 = vadd.f32 %v3232, %v3454
        %v3456 = vpop.f32.mrb[0].mxu0
        %3457 = vmatprep.mubr.f32.mxu0 0.0
        %3458 = vmatmul.mubr.f32.gmra.mrb[0].mxu0 %v3078
        %v3459 = vpop.f32.mrb[0].mxu0
        %v3460 = vadd.f32 %v3237, %v3459
        %v3461 = vpop.f32.mrb[0].mxu0
        %3462 = vmatprep.mubr.f32.mxu0 0.0
        %3463 = vmatmul.mubr.f32.gmra.mrb[0].mxu0 %v3079
        %v3464 = vpop.f32.mrb[0].mxu0
        %v3465 = vadd.f32 %v3242, %v3464
        %v3466 = vpop.f32.mrb[0].mxu0
        %3467 = vmatprep.mubr.f32.mxu0 0.0
        %3468 = vmatmul.mubr.f32.gmra.mrb[0].mxu0 %v3080
        %v3469 = vpop.f32.mrb[0].mxu0
        %v3470 = vadd.f32 %v3247, %v3469
        %v3471 = vpop.f32.mrb[0].mxu0
        %3472 = vmatprep.mubr.f32.mxu0 0.0
        %3473 = vmatmul.mubr.f32.gmra.mrb[0].mxu0 %v3081
        %v3474 = vpop.f32.mrb[0].mxu0
        %v3475 = vadd.f32 %v3252, %v3474
        %v3476 = vpop.f32.mrb[0].mxu0
        %3477 = vmatprep.mubr.f32.mxu0 0.0
        %3478 = vmatmul.mubr.f32.gmra.mrb[0].mxu0 %v3082
        %v3479 = vpop.f32.mrb[0].mxu0
        %v3480 = vadd.f32 %v3257, %v3479
        %v3481 = vpop.f32.mrb[0].mxu0
        %3482 = vmatprep.mubr.f32.mxu0 0.0
        %3483 = vmatmul.mubr.f32.gmra.mrb[0].mxu0 %v3083
        %v3484 = vpop.f32.mrb[0].mxu0
        %v3485 = vadd.f32 %v3262, %v3484
        %v3486 = vpop.f32.mrb[0].mxu0
        %3487 = vmatprep.mubr.f32.mxu0 0.0
        %3488 = vmatmul.mubr.f32.gmra.mrb[0].mxu0 %v3084
        %v3489 = vpop.f32.mrb[0].mxu0
        %v3490 = vadd.f32 %v3267, %v3489
        %v3491 = vpop.f32.mrb[0].mxu0
        %3492 = vmatprep.mubr.f32.mxu0 0.0
        %3493 = vmatmul.mubr.f32.gmra.mrb[0].mxu0 %v3085
        %v3494 = vpop.f32.mrb[0].mxu0
        %v3495 = vadd.f32 %v3272, %v3494
        %v3496 = vpop.f32.mrb[0].mxu0
        %3497 = vmatprep.mubr.f32.mxu0 0.0
        %3498 = vmatmul.mubr.f32.gmra.mrb[0].mxu0 %v3086
        %v3499 = vpop.f32.mrb[0].mxu0
        %v3500 = vadd.f32 %v3277, %v3499
        %v3501 = vpop.f32.mrb[0].mxu0
        %3502 = vmatprep.mubr.f32.mxu0 0.0
        %3503 = vmatmul.mubr.f32.gmra.mrb[0].mxu0 %v3087
        %v3504 = vpop.f32.mrb[0].mxu0
        %v3505 = vadd.f32 %v3282, %v3504
        %v3506 = vpop.f32.mrb[0].mxu0
        %3507 = vmatprep.mubr.f32.mxu0 0.0
        %3508 = vmatmul.mubr.f32.gmra.mrb[0].mxu0 %v3088
        %v3509 = vpop.f32.mrb[0].mxu0
        %v3510 = vadd.f32 %v3287, %v3509
        %v3511 = vpop.f32.mrb[0].mxu0
        %3512 = vmatprep.mubr.f32.mxu0 0.0
        %3513 = vmatmul.mubr.f32.gmra.mrb[0].mxu0 %v3089
        %v3514 = vpop.f32.mrb[0].mxu0
        %v3515 = vadd.f32 %v3292, %v3514
        %v3516 = vpop.f32.mrb[0].mxu0
        %3517 = vmatprep.mubr.f32.mxu0 0.0
        %3518 = vmatmul.mubr.f32.gmra.mrb[0].mxu0 %v3090
        %v3519 = vpop.f32.mrb[0].mxu0
        %v3520 = vadd.f32 %v3297, %v3519
        %v3521 = vpop.f32.mrb[0].mxu0
        %3522 = vmatprep.mubr.f32.mxu0 0.0
        %3523 = vmatmul.mubr.f32.gmra.mrb[0].mxu0 %v3091
        %v3524 = vpop.f32.mrb[0].mxu0
        %v3525 = vadd.f32 %v3302, %v3524
        %v3526 = vpop.f32.mrb[0].mxu0
        %3527 = vmatprep.mubr.f32.mxu0 0.0
        %3528 = vmatmul.mubr.f32.gmra.mrb[0].mxu0 %v3092
        %v3529 = vpop.f32.mrb[0].mxu0
        %v3530 = vadd.f32 %v3307, %v3529
        %v3531 = vpop.f32.mrb[0].mxu0
        %3532 = vmatprep.mubr.f32.mxu0 0.0
        %3533 = vmatmul.mubr.f32.gmra.mrb[0].mxu0 %v3093
        %v3534 = vpop.f32.mrb[0].mxu0
        %v3535 = vadd.f32 %v3312, %v3534
        %v3536 = vpop.f32.mrb[0].mxu0
        %3537 = vmatprep.mubr.f32.mxu0 0.0
        %3538 = vmatmul.mubr.f32.gmra.mrb[0].mxu0 %v3094
        %v3539 = vpop.f32.mrb[0].mxu0
        %v3540 = vadd.f32 %v3317, %v3539
        %v3541 = vpop.f32.mrb[0].mxu0
        %3542 = vmatprep.mubr.f32.mxu0 0.0
        %3543 = vmatmul.mubr.f32.gmra.mrb[0].mxu0 %v3095
        %v3544 = vpop.f32.mrb[0].mxu0
        %v3545 = vadd.f32 %v3322, %v3544
        %v3546 = vpop.f32.mrb[0].mxu0
        %3547 = vmatprep.mubr.f32.mxu0 0.0
        %3548 = vmatmul.mubr.f32.gmra.mrb[0].mxu0 %v3096
        %v3549 = vpop.f32.mrb[0].mxu0
        %v3550 = vadd.f32 %v3327, %v3549
        %v3551 = vpop.f32.mrb[0].mxu0
        %3552 = vmatprep.mubr.f32.mxu0 0.0
        %3553 = vmatmul.mubr.f32.gmra.mrb[0].mxu0 %v3097
        %v3554 = vpop.f32.mrb[0].mxu0
        %v3555 = vadd.f32 %v3332, %v3554
        %v3556 = vpop.f32.mrb[0].mxu0
        %3557 = vmatprep.mubr.f32.mxu0 0.0
        %3558 = vmatmul.mubr.f32.gmra.mrb[0].mxu0 %v3098
        %v3559 = vpop.f32.mrb[0].mxu0
        %v3560 = vadd.f32 %v3337, %v3559
        %v3561 = vpop.f32.mrb[0].mxu0
        %3562 = vmatprep.mubr.f32.mxu0 0.0
        %3563 = vmatmul.mubr.f32.gmra.mrb[0].mxu0 %v3099
        %v3564 = vpop.f32.mrb[0].mxu0
        %v3565 = vadd.f32 %v3342, %v3564
        %v3566 = vpop.f32.mrb[0].mxu0
        %3567 = vmatprep.mubr.f32.mxu0 0.0
        %3568 = vmatmul.mubr.f32.gmra.mrb[0].mxu0 %v3100
        %v3569 = vpop.f32.mrb[0].mxu0
        %v3570 = vadd.f32 %v3347, %v3569
        %v3571 = vpop.f32.mrb[0].mxu0
        %3572 = vmatprep.mubr.f32.mxu0 0.0
        %3573 = vmatmul.mubr.f32.gmra.mrb[0].mxu0 %v3101
        %v3574 = vpop.f32.mrb[0].mxu0
        %v3575 = vadd.f32 %v3352, %v3574
        %v3576 = vpop.f32.mrb[0].mxu0
        %3577 = vmatprep.mubr.f32.mxu0 0.0
        %3578 = vmatmul.mubr.f32.gmra.mrb[0].mxu0 %v3102
        %v3579 = vpop.f32.mrb[0].mxu0
        %v3580 = vadd.f32 %v3357, %v3579
        %v3581 = vpop.f32.mrb[0].mxu0
        %3582 = vmatprep.mubr.f32.mxu0 0.0
        %3583 = vmatmul.mubr.f32.gmra.mrb[0].mxu0 %v3103
        %v3584 = vpop.f32.mrb[0].mxu0
        %v3585 = vadd.f32 %v3362, %v3584
        %v3586 = vpop.f32.mrb[0].mxu0
        %3587 = vmatprep.mubr.f32.mxu0 0.0
        %3588 = vmatmul.mubr.f32.gmra.mrb[0].mxu0 %v3104
        %v3589 = vpop.f32.mrb[0].mxu0
        %v3590 = vadd.f32 %v3367, %v3589
        %v3591 = vpop.f32.mrb[0].mxu0
        %3592 = vmatprep.mubr.f32.mxu0 0.0
        %3593 = vmatmul.mubr.f32.gmra.mrb[0].mxu0 %v3105
        %v3594 = vpop.f32.mrb[0].mxu0
        %v3595 = vpop.f32.mrb[0].mxu0
        %3596 = vmatprep.mubr.f32.mxu0 0.0
        %3597 = vmatmul.mubr.f32.gmra.mrb[0].mxu0 %v3106
        %v3598 = vpop.f32.mrb[0].mxu0
        %v3599 = vpop.f32.mrb[0].mxu0
        %3600 = vdwg.mxu0
        %s3601 = scalar_lea.vmem [#allocation8], 384
        %v3602 = vld [vmem:[%s3601] sm:$0xff]
        %v3603 = vld [vmem:[%s3601 + $0x8] sm:$0xff]
        %v3604 = vld [vmem:[%s3601 + $0x10] sm:$0xff]
        %v3605 = vld [vmem:[%s3601 + $0x18] sm:$0xff]
        %v3606 = vld [vmem:[%s3601 + $0x20] sm:$0xff]
        %v3607 = vld [vmem:[%s3601 + $0x28] sm:$0xff]
        %v3608 = vld [vmem:[%s3601 + $0x30] sm:$0xff]
        %v3609 = vld [vmem:[%s3601 + $0x38] sm:$0xff]
        %v3610 = vld [vmem:[%s3601 + $0x40] sm:$0xff]
        %v3611 = vld [vmem:[%s3601 + $0x48] sm:$0xff]
        %v3612 = vld [vmem:[%s3601 + $0x50] sm:$0xff]
        %v3613 = vld [vmem:[%s3601 + $0x58] sm:$0xff]
        %v3614 = vld [vmem:[%s3601 + $0x60] sm:$0xff]
        %v3615 = vld [vmem:[%s3601 + $0x68] sm:$0xff]
        %v3616 = vld [vmem:[%s3601 + $0x70] sm:$0xff]
        %v3617 = vld [vmem:[%s3601 + $0x78] sm:$0xff]
        %v3618 = vld [vmem:[%s3601 + $0x80] sm:$0xff]
        %v3619 = vld [vmem:[%s3601 + $0x88] sm:$0xff]
        %v3620 = vld [vmem:[%s3601 + $0x90] sm:$0xff]
        %v3621 = vld [vmem:[%s3601 + $0x98] sm:$0xff]
        %v3622 = vld [vmem:[%s3601 + $0xa0] sm:$0xff]
        %v3623 = vld [vmem:[%s3601 + $0xa8] sm:$0xff]
        %v3624 = vld [vmem:[%s3601 + $0xb0] sm:$0xff]
        %v3625 = vld [vmem:[%s3601 + $0xb8] sm:$0xff]
        %v3626 = vld [vmem:[%s3601 + $0xc0] sm:$0xff]
        %v3627 = vld [vmem:[%s3601 + $0xc8] sm:$0xff]
        %v3628 = vld [vmem:[%s3601 + $0xd0] sm:$0xff]
        %v3629 = vld [vmem:[%s3601 + $0xd8] sm:$0xff]
        %v3630 = vld [vmem:[%s3601 + $0xe0] sm:$0xff]
        %v3631 = vld [vmem:[%s3601 + $0xe8] sm:$0xff]
        %v3632 = vld [vmem:[%s3601 + $0xf0] sm:$0xff]
        %v3633 = vld [vmem:[%s3601 + $0xf8] sm:$0xff]
        %v3634 = vld [vmem:[%s3601 + $0x100] sm:$0xff]
        %v3635 = vld [vmem:[%s3601 + $0x108] sm:$0xff]
        %v3636 = vld [vmem:[%s3601 + $0x110] sm:$0xff]
        %v3637 = vld [vmem:[%s3601 + $0x118] sm:$0xff]
        %v3638 = vld [vmem:[%s3601 + $0x120] sm:$0xff]
        %v3639 = vld [vmem:[%s3601 + $0x128] sm:$0xff]
        %v3640 = vld [vmem:[%s3601 + $0x130] sm:$0xff]
        %v3641 = vld [vmem:[%s3601 + $0x138] sm:$0xff]
        %v3642 = vld [vmem:[%s3601 + $0x140] sm:$0xff]
        %v3643 = vld [vmem:[%s3601 + $0x148] sm:$0xff]
        %v3644 = vld [vmem:[%s3601 + $0x150] sm:$0xff]
        %v3645 = vld [vmem:[%s3601 + $0x158] sm:$0xff]
        %v3646 = vld [vmem:[%s3601 + $0x160] sm:$0xff]
        %v3647 = vld [vmem:[%s3601 + $0x168] sm:$0xff]
        %v3648 = vld [vmem:[%s3601 + $0x170] sm:$0xff]
        %v3649 = vld [vmem:[%s3601 + $0x178] sm:$0xff]
        %s3650 = scalar_lea.vmem [#allocation8], 768
        %v3651 = vld [vmem:[%s3650] sm:$0xff]
        %v3652 = vld [vmem:[%s3650 + $0x8] sm:$0xff]
        %v3653 = vld [vmem:[%s3650 + $0x10] sm:$0xff]
        %v3654 = vld [vmem:[%s3650 + $0x18] sm:$0xff]
        %v3655 = vld [vmem:[%s3650 + $0x20] sm:$0xff]
        %v3656 = vld [vmem:[%s3650 + $0x28] sm:$0xff]
        %v3657 = vld [vmem:[%s3650 + $0x30] sm:$0xff]
        %v3658 = vld [vmem:[%s3650 + $0x38] sm:$0xff]
        %v3659 = vld [vmem:[%s3650 + $0x40] sm:$0xff]
        %v3660 = vld [vmem:[%s3650 + $0x48] sm:$0xff]
        %v3661 = vld [vmem:[%s3650 + $0x50] sm:$0xff]
        %v3662 = vld [vmem:[%s3650 + $0x58] sm:$0xff]
        %v3663 = vld [vmem:[%s3650 + $0x60] sm:$0xff]
        %v3664 = vld [vmem:[%s3650 + $0x68] sm:$0xff]
        %v3665 = vld [vmem:[%s3650 + $0x70] sm:$0xff]
        %v3666 = vld [vmem:[%s3650 + $0x78] sm:$0xff]
        %v3667 = vld [vmem:[%s3650 + $0x80] sm:$0xff]
        %v3668 = vld [vmem:[%s3650 + $0x88] sm:$0xff]
        %v3669 = vld [vmem:[%s3650 + $0x90] sm:$0xff]
        %v3670 = vld [vmem:[%s3650 + $0x98] sm:$0xff]
        %v3671 = vld [vmem:[%s3650 + $0xa0] sm:$0xff]
        %v3672 = vld [vmem:[%s3650 + $0xa8] sm:$0xff]
        %v3673 = vld [vmem:[%s3650 + $0xb0] sm:$0xff]
        %v3674 = vld [vmem:[%s3650 + $0xb8] sm:$0xff]
        %v3675 = vld [vmem:[%s3650 + $0xc0] sm:$0xff]
        %v3676 = vld [vmem:[%s3650 + $0xc8] sm:$0xff]
        %v3677 = vld [vmem:[%s3650 + $0xd0] sm:$0xff]
        %v3678 = vld [vmem:[%s3650 + $0xd8] sm:$0xff]
        %v3679 = vld [vmem:[%s3650 + $0xe0] sm:$0xff]
        %v3680 = vld [vmem:[%s3650 + $0xe8] sm:$0xff]
        %v3681 = vld [vmem:[%s3650 + $0xf0] sm:$0xff]
        %v3682 = vld [vmem:[%s3650 + $0xf8] sm:$0xff]
        %v3683 = vld [vmem:[%s3650 + $0x100] sm:$0xff]
        %v3684 = vld [vmem:[%s3650 + $0x108] sm:$0xff]
        %v3685 = vld [vmem:[%s3650 + $0x110] sm:$0xff]
        %v3686 = vld [vmem:[%s3650 + $0x118] sm:$0xff]
        %v3687 = vld [vmem:[%s3650 + $0x120] sm:$0xff]
        %v3688 = vld [vmem:[%s3650 + $0x128] sm:$0xff]
        %v3689 = vld [vmem:[%s3650 + $0x130] sm:$0xff]
        %v3690 = vld [vmem:[%s3650 + $0x138] sm:$0xff]
        %v3691 = vld [vmem:[%s3650 + $0x140] sm:$0xff]
        %v3692 = vld [vmem:[%s3650 + $0x148] sm:$0xff]
        %v3693 = vld [vmem:[%s3650 + $0x150] sm:$0xff]
        %v3694 = vld [vmem:[%s3650 + $0x158] sm:$0xff]
        %v3695 = vld [vmem:[%s3650 + $0x160] sm:$0xff]
        %v3696 = vld [vmem:[%s3650 + $0x168] sm:$0xff]
        %v3697 = vld [vmem:[%s3650 + $0x170] sm:$0xff]
        %v3698 = vld [vmem:[%s3650 + $0x178] sm:$0xff]
        %3699 = vmatprep.subr.mxu0 0.0
        %3700 = vmatpush1.msra.mxu0 %v3651
        %3701 = vmatprep.subr.mxu0 0.0
        %3702 = vmatpush1.msra.mxu0 %v3652
        %3703 = vmatprep.subr.mxu0 0.0
        %3704 = vmatpush1.msra.mxu0 %v3653
        %3705 = vmatprep.subr.mxu0 0.0
        %3706 = vmatpush1.msra.mxu0 %v3654
        %3707 = vmatprep.subr.mxu0 0.0
        %3708 = vmatpush1.msra.mxu0 %v3655
        %3709 = vmatprep.subr.mxu0 0.0
        %3710 = vmatpush1.msra.mxu0 %v3656
        %3711 = vmatprep.subr.mxu0 0.0
        %3712 = vmatpush1.msra.mxu0 %v3657
        %3713 = vmatprep.subr.mxu0 0.0
        %3714 = vmatpush1.msra.mxu0 %v3658
        %3715 = vmatprep.subr.mxu0 0.0
        %3716 = vmatpush1.msra.mxu0 %v3659
        %3717 = vmatprep.subr.mxu0 0.0
        %3718 = vmatpush1.msra.mxu0 %v3660
        %3719 = vmatprep.subr.mxu0 0.0
        %3720 = vmatpush1.msra.mxu0 %v3661
        %3721 = vmatprep.subr.mxu0 0.0
        %3722 = vmatpush1.msra.mxu0 %v3662
        %3723 = vmatprep.subr.mxu0 0.0
        %3724 = vmatpush1.msra.mxu0 %v3663
        %3725 = vmatprep.subr.mxu0 0.0
        %3726 = vmatpush1.msra.mxu0 %v3664
        %3727 = vmatprep.subr.mxu0 0.0
        %3728 = vmatpush1.msra.mxu0 %v3665
        %3729 = vmatprep.subr.mxu0 0.0
        %3730 = vmatpush1.msra.mxu0 %v3666
        %3731 = vmatprep.subr.mxu0 0.0
        %3732 = vmatpush1.msra.mxu0 %v3667
        %3733 = vmatprep.subr.mxu0 0.0
        %3734 = vmatpush1.msra.mxu0 %v3668
        %3735 = vmatprep.subr.mxu0 0.0
        %3736 = vmatpush1.msra.mxu0 %v3669
        %3737 = vmatprep.subr.mxu0 0.0
        %3738 = vmatpush1.msra.mxu0 %v3670
        %3739 = vmatprep.subr.mxu0 0.0
        %3740 = vmatpush1.msra.mxu0 %v3671
        %3741 = vmatprep.subr.mxu0 0.0
        %3742 = vmatpush1.msra.mxu0 %v3672
        %3743 = vmatprep.subr.mxu0 0.0
        %3744 = vmatpush1.msra.mxu0 %v3673
        %3745 = vmatprep.subr.mxu0 0.0
        %3746 = vmatpush1.msra.mxu0 %v3674
        %3747 = vmatprep.subr.mxu0 0.0
        %3748 = vmatpush1.msra.mxu0 %v3675
        %3749 = vmatprep.subr.mxu0 0.0
        %3750 = vmatpush1.msra.mxu0 %v3676
        %3751 = vmatprep.subr.mxu0 0.0
        %3752 = vmatpush1.msra.mxu0 %v3677
        %3753 = vmatprep.subr.mxu0 0.0
        %3754 = vmatpush1.msra.mxu0 %v3678
        %3755 = vmatprep.subr.mxu0 0.0
        %3756 = vmatpush1.msra.mxu0 %v3679
        %3757 = vmatprep.subr.mxu0 0.0
        %3758 = vmatpush1.msra.mxu0 %v3680
        %3759 = vmatprep.subr.mxu0 0.0
        %3760 = vmatpush1.msra.mxu0 %v3681
        %3761 = vmatprep.subr.mxu0 0.0
        %3762 = vmatpush1.msra.mxu0 %v3682
        %3763 = vmatprep.mubr.f32.mxu0 %v2787
        %3764 = vmatmul.mubr.f32.gmra.mrb[0].mxu0 %v3043
        %v3765 = vpop.f32.mrb[0].mxu0
        %v3766 = vpop.f32.mrb[0].mxu0
        %3767 = vmatprep.mubr.f32.mxu0 %v2788
        %3768 = vmatmul.mubr.f32.gmra.mrb[0].mxu0 %v3044
        %v3769 = vpop.f32.mrb[0].mxu0
        %v3770 = vpop.f32.mrb[0].mxu0
        %3771 = vmatprep.mubr.f32.mxu0 %v2789
        %3772 = vmatmul.mubr.f32.gmra.mrb[0].mxu0 %v3045
        %v3773 = vpop.f32.mrb[0].mxu0
        %v3774 = vadd.f32 0.0, %v3773
        %v3775 = vpop.f32.mrb[0].mxu0
        %3776 = vmatprep.mubr.f32.mxu0 %v2790
        %3777 = vmatmul.mubr.f32.gmra.mrb[0].mxu0 %v3046
        %v3778 = vpop.f32.mrb[0].mxu0
        %v3779 = vadd.f32 0.0, %v3778
        %v3780 = vpop.f32.mrb[0].mxu0
        %3781 = vmatprep.mubr.f32.mxu0 %v2791
        %3782 = vmatmul.mubr.f32.gmra.mrb[0].mxu0 %v3047
        %v3783 = vpop.f32.mrb[0].mxu0
        %v3784 = vadd.f32 0.0, %v3783
        %v3785 = vpop.f32.mrb[0].mxu0
        %3786 = vmatprep.mubr.f32.mxu0 %v2792
        %3787 = vmatmul.mubr.f32.gmra.mrb[0].mxu0 %v3048
        %v3788 = vpop.f32.mrb[0].mxu0
        %v3789 = vadd.f32 0.0, %v3788
        %v3790 = vpop.f32.mrb[0].mxu0
        %3791 = vmatprep.mubr.f32.mxu0 %v2793
        %3792 = vmatmul.mubr.f32.gmra.mrb[0].mxu0 %v3049
        %v3793 = vpop.f32.mrb[0].mxu0
        %v3794 = vadd.f32 0.0, %v3793
        %v3795 = vpop.f32.mrb[0].mxu0
        %3796 = vmatprep.mubr.f32.mxu0 %v2794
        %3797 = vmatmul.mubr.f32.gmra.mrb[0].mxu0 %v3050
        %v3798 = vpop.f32.mrb[0].mxu0
        %v3799 = vadd.f32 0.0, %v3798
        %v3800 = vpop.f32.mrb[0].mxu0
        %3801 = vmatprep.mubr.f32.mxu0 %v2795
        %3802 = vmatmul.mubr.f32.gmra.mrb[0].mxu0 %v3051
        %v3803 = vpop.f32.mrb[0].mxu0
        %v3804 = vadd.f32 0.0, %v3803
        %v3805 = vpop.f32.mrb[0].mxu0
        %3806 = vmatprep.mubr.f32.mxu0 %v2796
        %3807 = vmatmul.mubr.f32.gmra.mrb[0].mxu0 %v3052
        %v3808 = vpop.f32.mrb[0].mxu0
        %v3809 = vadd.f32 0.0, %v3808
        %v3810 = vpop.f32.mrb[0].mxu0
        %3811 = vmatprep.mubr.f32.mxu0 %v2797
        %3812 = vmatmul.mubr.f32.gmra.mrb[0].mxu0 %v3053
        %v3813 = vpop.f32.mrb[0].mxu0
        %v3814 = vadd.f32 0.0, %v3813
        %v3815 = vpop.f32.mrb[0].mxu0
        %3816 = vmatprep.mubr.f32.mxu0 %v2798
        %3817 = vmatmul.mubr.f32.gmra.mrb[0].mxu0 %v3054
        %v3818 = vpop.f32.mrb[0].mxu0
        %v3819 = vadd.f32 0.0, %v3818
        %v3820 = vpop.f32.mrb[0].mxu0
        %3821 = vmatprep.mubr.f32.mxu0 %v2799
        %3822 = vmatmul.mubr.f32.gmra.mrb[0].mxu0 %v3055
        %v3823 = vpop.f32.mrb[0].mxu0
        %v3824 = vadd.f32 0.0, %v3823
        %v3825 = vpop.f32.mrb[0].mxu0
        %3826 = vmatprep.mubr.f32.mxu0 %v2800
        %3827 = vmatmul.mubr.f32.gmra.mrb[0].mxu0 %v3056
        %v3828 = vpop.f32.mrb[0].mxu0
        %v3829 = vadd.f32 0.0, %v3828
        %v3830 = vpop.f32.mrb[0].mxu0
        %3831 = vmatprep.mubr.f32.mxu0 %v2801
        %3832 = vmatmul.mubr.f32.gmra.mrb[0].mxu0 %v3057
        %v3833 = vpop.f32.mrb[0].mxu0
        %v3834 = vadd.f32 0.0, %v3833
        %v3835 = vpop.f32.mrb[0].mxu0
        %3836 = vmatprep.mubr.f32.mxu0 %v2802
        %3837 = vmatmul.mubr.f32.gmra.mrb[0].mxu0 %v3058
        %v3838 = vpop.f32.mrb[0].mxu0
        %v3839 = vadd.f32 0.0, %v3838
        %v3840 = vpop.f32.mrb[0].mxu0
        %3841 = vmatprep.mubr.f32.mxu0 %v2803
        %3842 = vmatmul.mubr.f32.gmra.mrb[0].mxu0 %v3059
        %v3843 = vpop.f32.mrb[0].mxu0
        %v3844 = vadd.f32 0.0, %v3843
        %v3845 = vpop.f32.mrb[0].mxu0
        %3846 = vmatprep.mubr.f32.mxu0 %v2804
        %3847 = vmatmul.mubr.f32.gmra.mrb[0].mxu0 %v3060
        %v3848 = vpop.f32.mrb[0].mxu0
        %v3849 = vadd.f32 0.0, %v3848
        %v3850 = vpop.f32.mrb[0].mxu0
        %3851 = vmatprep.mubr.f32.mxu0 %v2805
        %3852 = vmatmul.mubr.f32.gmra.mrb[0].mxu0 %v3061
        %v3853 = vpop.f32.mrb[0].mxu0
        %v3854 = vadd.f32 0.0, %v3853
        %v3855 = vpop.f32.mrb[0].mxu0
        %3856 = vmatprep.mubr.f32.mxu0 %v2806
        %3857 = vmatmul.mubr.f32.gmra.mrb[0].mxu0 %v3062
        %v3858 = vpop.f32.mrb[0].mxu0
        %v3859 = vadd.f32 0.0, %v3858
        %v3860 = vpop.f32.mrb[0].mxu0
        %3861 = vmatprep.mubr.f32.mxu0 %v2807
        %3862 = vmatmul.mubr.f32.gmra.mrb[0].mxu0 %v3063
        %v3863 = vpop.f32.mrb[0].mxu0
        %v3864 = vadd.f32 0.0, %v3863
        %v3865 = vpop.f32.mrb[0].mxu0
        %3866 = vmatprep.mubr.f32.mxu0 %v2808
        %3867 = vmatmul.mubr.f32.gmra.mrb[0].mxu0 %v3064
        %v3868 = vpop.f32.mrb[0].mxu0
        %v3869 = vadd.f32 0.0, %v3868
        %v3870 = vpop.f32.mrb[0].mxu0
        %3871 = vmatprep.mubr.f32.mxu0 %v2809
        %3872 = vmatmul.mubr.f32.gmra.mrb[0].mxu0 %v3065
        %v3873 = vpop.f32.mrb[0].mxu0
        %v3874 = vadd.f32 0.0, %v3873
        %v3875 = vpop.f32.mrb[0].mxu0
        %3876 = vmatprep.mubr.f32.mxu0 %v2810
        %3877 = vmatmul.mubr.f32.gmra.mrb[0].mxu0 %v3066
        %v3878 = vpop.f32.mrb[0].mxu0
        %v3879 = vadd.f32 0.0, %v3878
        %v3880 = vpop.f32.mrb[0].mxu0
        %3881 = vmatprep.mubr.f32.mxu0 %v2811
        %3882 = vmatmul.mubr.f32.gmra.mrb[0].mxu0 %v3067
        %v3883 = vpop.f32.mrb[0].mxu0
        %v3884 = vadd.f32 0.0, %v3883
        %v3885 = vpop.f32.mrb[0].mxu0
        %3886 = vmatprep.mubr.f32.mxu0 %v2812
        %3887 = vmatmul.mubr.f32.gmra.mrb[0].mxu0 %v3068
        %v3888 = vpop.f32.mrb[0].mxu0
        %v3889 = vadd.f32 0.0, %v3888
        %v3890 = vpop.f32.mrb[0].mxu0
        %3891 = vmatprep.mubr.f32.mxu0 %v2813
        %3892 = vmatmul.mubr.f32.gmra.mrb[0].mxu0 %v3069
        %v3893 = vpop.f32.mrb[0].mxu0
        %v3894 = vadd.f32 0.0, %v3893
        %v3895 = vpop.f32.mrb[0].mxu0
        %3896 = vmatprep.mubr.f32.mxu0 %v2814
        %3897 = vmatmul.mubr.f32.gmra.mrb[0].mxu0 %v3070
        %v3898 = vpop.f32.mrb[0].mxu0
        %v3899 = vadd.f32 0.0, %v3898
        %v3900 = vpop.f32.mrb[0].mxu0
        %3901 = vmatprep.mubr.f32.mxu0 %v2815
        %3902 = vmatmul.mubr.f32.gmra.mrb[0].mxu0 %v3071
        %v3903 = vpop.f32.mrb[0].mxu0
        %v3904 = vadd.f32 0.0, %v3903
        %v3905 = vpop.f32.mrb[0].mxu0
        %3906 = vmatprep.mubr.f32.mxu0 %v2816
        %3907 = vmatmul.mubr.f32.gmra.mrb[0].mxu0 %v3072
        %v3908 = vpop.f32.mrb[0].mxu0
        %v3909 = vadd.f32 0.0, %v3908
        %v3910 = vpop.f32.mrb[0].mxu0
        %3911 = vmatprep.mubr.f32.mxu0 %v2817
        %3912 = vmatmul.mubr.f32.gmra.mrb[0].mxu0 %v3073
        %v3913 = vpop.f32.mrb[0].mxu0
        %v3914 = vadd.f32 0.0, %v3913
        %v3915 = vpop.f32.mrb[0].mxu0
        %3916 = vmatprep.mubr.f32.mxu0 %v2818
        %3917 = vmatmul.mubr.f32.gmra.mrb[0].mxu0 %v3074
        %v3918 = vpop.f32.mrb[0].mxu0
        %v3919 = vadd.f32 0.0, %v3918
        %v3920 = vpop.f32.mrb[0].mxu0
        %3921 = vdwg.mxu0
        %3922 = vmatprep.subr.mxu0 0.0
        %3923 = vmatpush1.msra.mxu0 %v3683
        %3924 = vmatprep.subr.mxu0 0.0
        %3925 = vmatpush1.msra.mxu0 %v3684
        %3926 = vmatprep.subr.mxu0 0.0
        %3927 = vmatpush1.msra.mxu0 %v3685
        %3928 = vmatprep.subr.mxu0 0.0
        %3929 = vmatpush1.msra.mxu0 %v3686
        %3930 = vmatprep.subr.mxu0 0.0
        %3931 = vmatpush1.msra.mxu0 %v3687
        %3932 = vmatprep.subr.mxu0 0.0
        %3933 = vmatpush1.msra.mxu0 %v3688
        %3934 = vmatprep.subr.mxu0 0.0
        %3935 = vmatpush1.msra.mxu0 %v3689
        %3936 = vmatprep.subr.mxu0 0.0
        %3937 = vmatpush1.msra.mxu0 %v3690
        %3938 = vmatprep.subr.mxu0 0.0
        %3939 = vmatpush1.msra.mxu0 %v3691
        %3940 = vmatprep.subr.mxu0 0.0
        %3941 = vmatpush1.msra.mxu0 %v3692
        %3942 = vmatprep.subr.mxu0 0.0
        %3943 = vmatpush1.msra.mxu0 %v3693
        %3944 = vmatprep.subr.mxu0 0.0
        %3945 = vmatpush1.msra.mxu0 %v3694
        %3946 = vmatprep.subr.mxu0 0.0
        %3947 = vmatpush1.msra.mxu0 %v3695
        %3948 = vmatprep.subr.mxu0 0.0
        %3949 = vmatpush1.msra.mxu0 %v3696
        %3950 = vmatprep.subr.mxu0 0.0
        %3951 = vmatpush1.msra.mxu0 %v3697
        %3952 = vmatprep.subr.mxu0 0.0
        %3953 = vmatpush1.msra.mxu0 %v3698
        %3954 = vmatprep.subr.mxu0 0.0
        %3955 = vmatpush1.msra.mxu0 0.0
        %3956 = vmatprep.subr.mxu0 0.0
        %3957 = vmatpush1.msra.mxu0 0.0
        %3958 = vmatprep.subr.mxu0 0.0
        %3959 = vmatpush1.msra.mxu0 0.0
        %3960 = vmatprep.subr.mxu0 0.0
        %3961 = vmatpush1.msra.mxu0 0.0
        %3962 = vmatprep.subr.mxu0 0.0
        %3963 = vmatpush1.msra.mxu0 0.0
        %3964 = vmatprep.subr.mxu0 0.0
        %3965 = vmatpush1.msra.mxu0 0.0
        %3966 = vmatprep.subr.mxu0 0.0
        %3967 = vmatpush1.msra.mxu0 0.0
        %3968 = vmatprep.subr.mxu0 0.0
        %3969 = vmatpush1.msra.mxu0 0.0
        %3970 = vmatprep.subr.mxu0 0.0
        %3971 = vmatpush1.msra.mxu0 0.0
        %3972 = vmatprep.subr.mxu0 0.0
        %3973 = vmatpush1.msra.mxu0 0.0
        %3974 = vmatprep.subr.mxu0 0.0
        %3975 = vmatpush1.msra.mxu0 0.0
        %3976 = vmatprep.subr.mxu0 0.0
        %3977 = vmatpush1.msra.mxu0 0.0
        %3978 = vmatprep.subr.mxu0 0.0
        %3979 = vmatpush1.msra.mxu0 0.0
        %3980 = vmatprep.subr.mxu0 0.0
        %3981 = vmatpush1.msra.mxu0 0.0
        %3982 = vmatprep.subr.mxu0 0.0
        %3983 = vmatpush1.msra.mxu0 0.0
        %3984 = vmatprep.subr.mxu0 0.0
        %3985 = vmatpush1.msra.mxu0 0.0
        %3986 = vmatprep.mubr.f32.mxu0 0.0
        %3987 = vmatmul.mubr.f32.gmra.mrb[0].mxu0 %v3075
        %v3988 = vpop.f32.mrb[0].mxu0
        %v3989 = vpop.f32.mrb[0].mxu0
        %3990 = vmatprep.mubr.f32.mxu0 0.0
        %3991 = vmatmul.mubr.f32.gmra.mrb[0].mxu0 %v3076
        %v3992 = vpop.f32.mrb[0].mxu0
        %v3993 = vpop.f32.mrb[0].mxu0
        %3994 = vmatprep.mubr.f32.mxu0 0.0
        %3995 = vmatmul.mubr.f32.gmra.mrb[0].mxu0 %v3077
        %v3996 = vpop.f32.mrb[0].mxu0
        %v3997 = vadd.f32 %v3774, %v3996
        %v3998 = vpop.f32.mrb[0].mxu0
        %3999 = vmatprep.mubr.f32.mxu0 0.0
        %4000 = vmatmul.mubr.f32.gmra.mrb[0].mxu0 %v3078
        %v4001 = vpop.f32.mrb[0].mxu0
        %v4002 = vadd.f32 %v3779, %v4001
        %v4003 = vpop.f32.mrb[0].mxu0
        %4004 = vmatprep.mubr.f32.mxu0 0.0
        %4005 = vmatmul.mubr.f32.gmra.mrb[0].mxu0 %v3079
        %v4006 = vpop.f32.mrb[0].mxu0
        %v4007 = vadd.f32 %v3784, %v4006
        %v4008 = vpop.f32.mrb[0].mxu0
        %4009 = vmatprep.mubr.f32.mxu0 0.0
        %4010 = vmatmul.mubr.f32.gmra.mrb[0].mxu0 %v3080
        %v4011 = vpop.f32.mrb[0].mxu0
        %v4012 = vadd.f32 %v3789, %v4011
        %v4013 = vpop.f32.mrb[0].mxu0
        %4014 = vmatprep.mubr.f32.mxu0 0.0
        %4015 = vmatmul.mubr.f32.gmra.mrb[0].mxu0 %v3081
        %v4016 = vpop.f32.mrb[0].mxu0
        %v4017 = vadd.f32 %v3794, %v4016
        %v4018 = vpop.f32.mrb[0].mxu0
        %4019 = vmatprep.mubr.f32.mxu0 0.0
        %4020 = vmatmul.mubr.f32.gmra.mrb[0].mxu0 %v3082
        %v4021 = vpop.f32.mrb[0].mxu0
        %v4022 = vadd.f32 %v3799, %v4021
        %v4023 = vpop.f32.mrb[0].mxu0
        %4024 = vmatprep.mubr.f32.mxu0 0.0
        %4025 = vmatmul.mubr.f32.gmra.mrb[0].mxu0 %v3083
        %v4026 = vpop.f32.mrb[0].mxu0
        %v4027 = vadd.f32 %v3804, %v4026
        %v4028 = vpop.f32.mrb[0].mxu0
        %4029 = vmatprep.mubr.f32.mxu0 0.0
        %4030 = vmatmul.mubr.f32.gmra.mrb[0].mxu0 %v3084
        %v4031 = vpop.f32.mrb[0].mxu0
        %v4032 = vadd.f32 %v3809, %v4031
        %v4033 = vpop.f32.mrb[0].mxu0
        %4034 = vmatprep.mubr.f32.mxu0 0.0
        %4035 = vmatmul.mubr.f32.gmra.mrb[0].mxu0 %v3085
        %v4036 = vpop.f32.mrb[0].mxu0
        %v4037 = vadd.f32 %v3814, %v4036
        %v4038 = vpop.f32.mrb[0].mxu0
        %4039 = vmatprep.mubr.f32.mxu0 0.0
        %4040 = vmatmul.mubr.f32.gmra.mrb[0].mxu0 %v3086
        %v4041 = vpop.f32.mrb[0].mxu0
        %v4042 = vadd.f32 %v3819, %v4041
        %v4043 = vpop.f32.mrb[0].mxu0
        %4044 = vmatprep.mubr.f32.mxu0 0.0
        %4045 = vmatmul.mubr.f32.gmra.mrb[0].mxu0 %v3087
        %v4046 = vpop.f32.mrb[0].mxu0
        %v4047 = vadd.f32 %v3824, %v4046
        %v4048 = vpop.f32.mrb[0].mxu0
        %4049 = vmatprep.mubr.f32.mxu0 0.0
        %4050 = vmatmul.mubr.f32.gmra.mrb[0].mxu0 %v3088
        %v4051 = vpop.f32.mrb[0].mxu0
        %v4052 = vadd.f32 %v3829, %v4051
        %v4053 = vpop.f32.mrb[0].mxu0
        %4054 = vmatprep.mubr.f32.mxu0 0.0
        %4055 = vmatmul.mubr.f32.gmra.mrb[0].mxu0 %v3089
        %v4056 = vpop.f32.mrb[0].mxu0
        %v4057 = vadd.f32 %v3834, %v4056
        %v4058 = vpop.f32.mrb[0].mxu0
        %4059 = vmatprep.mubr.f32.mxu0 0.0
        %4060 = vmatmul.mubr.f32.gmra.mrb[0].mxu0 %v3090
        %v4061 = vpop.f32.mrb[0].mxu0
        %v4062 = vadd.f32 %v3839, %v4061
        %v4063 = vpop.f32.mrb[0].mxu0
        %4064 = vmatprep.mubr.f32.mxu0 0.0
        %4065 = vmatmul.mubr.f32.gmra.mrb[0].mxu0 %v3091
        %v4066 = vpop.f32.mrb[0].mxu0
        %v4067 = vadd.f32 %v3844, %v4066
        %v4068 = vpop.f32.mrb[0].mxu0
        %4069 = vmatprep.mubr.f32.mxu0 0.0
        %4070 = vmatmul.mubr.f32.gmra.mrb[0].mxu0 %v3092
        %v4071 = vpop.f32.mrb[0].mxu0
        %v4072 = vadd.f32 %v3849, %v4071
        %v4073 = vpop.f32.mrb[0].mxu0
        %4074 = vmatprep.mubr.f32.mxu0 0.0
        %4075 = vmatmul.mubr.f32.gmra.mrb[0].mxu0 %v3093
        %v4076 = vpop.f32.mrb[0].mxu0
        %v4077 = vadd.f32 %v3854, %v4076
        %v4078 = vpop.f32.mrb[0].mxu0
        %4079 = vmatprep.mubr.f32.mxu0 0.0
        %4080 = vmatmul.mubr.f32.gmra.mrb[0].mxu0 %v3094
        %v4081 = vpop.f32.mrb[0].mxu0
        %v4082 = vadd.f32 %v3859, %v4081
        %v4083 = vpop.f32.mrb[0].mxu0
        %4084 = vmatprep.mubr.f32.mxu0 0.0
        %4085 = vmatmul.mubr.f32.gmra.mrb[0].mxu0 %v3095
        %v4086 = vpop.f32.mrb[0].mxu0
        %v4087 = vadd.f32 %v3864, %v4086
        %v4088 = vpop.f32.mrb[0].mxu0
        %4089 = vmatprep.mubr.f32.mxu0 0.0
        %4090 = vmatmul.mubr.f32.gmra.mrb[0].mxu0 %v3096
        %v4091 = vpop.f32.mrb[0].mxu0
        %v4092 = vadd.f32 %v3869, %v4091
        %v4093 = vpop.f32.mrb[0].mxu0
        %4094 = vmatprep.mubr.f32.mxu0 0.0
        %4095 = vmatmul.mubr.f32.gmra.mrb[0].mxu0 %v3097
        %v4096 = vpop.f32.mrb[0].mxu0
        %v4097 = vadd.f32 %v3874, %v4096
        %v4098 = vpop.f32.mrb[0].mxu0
        %4099 = vmatprep.mubr.f32.mxu0 0.0
        %4100 = vmatmul.mubr.f32.gmra.mrb[0].mxu0 %v3098
        %v4101 = vpop.f32.mrb[0].mxu0
        %v4102 = vadd.f32 %v3879, %v4101
        %v4103 = vpop.f32.mrb[0].mxu0
        %4104 = vmatprep.mubr.f32.mxu0 0.0
        %4105 = vmatmul.mubr.f32.gmra.mrb[0].mxu0 %v3099
        %v4106 = vpop.f32.mrb[0].mxu0
        %v4107 = vadd.f32 %v3884, %v4106
        %v4108 = vpop.f32.mrb[0].mxu0
        %4109 = vmatprep.mubr.f32.mxu0 0.0
        %4110 = vmatmul.mubr.f32.gmra.mrb[0].mxu0 %v3100
        %v4111 = vpop.f32.mrb[0].mxu0
        %v4112 = vadd.f32 %v3889, %v4111
        %v4113 = vpop.f32.mrb[0].mxu0
        %4114 = vmatprep.mubr.f32.mxu0 0.0
        %4115 = vmatmul.mubr.f32.gmra.mrb[0].mxu0 %v3101
        %v4116 = vpop.f32.mrb[0].mxu0
        %v4117 = vadd.f32 %v3894, %v4116
        %v4118 = vpop.f32.mrb[0].mxu0
        %4119 = vmatprep.mubr.f32.mxu0 0.0
        %4120 = vmatmul.mubr.f32.gmra.mrb[0].mxu0 %v3102
        %v4121 = vpop.f32.mrb[0].mxu0
        %v4122 = vadd.f32 %v3899, %v4121
        %v4123 = vpop.f32.mrb[0].mxu0
        %4124 = vmatprep.mubr.f32.mxu0 0.0
        %4125 = vmatmul.mubr.f32.gmra.mrb[0].mxu0 %v3103
        %v4126 = vpop.f32.mrb[0].mxu0
        %v4127 = vadd.f32 %v3904, %v4126
        %v4128 = vpop.f32.mrb[0].mxu0
        %4129 = vmatprep.mubr.f32.mxu0 0.0
        %4130 = vmatmul.mubr.f32.gmra.mrb[0].mxu0 %v3104
        %v4131 = vpop.f32.mrb[0].mxu0
        %v4132 = vadd.f32 %v3909, %v4131
        %v4133 = vpop.f32.mrb[0].mxu0
        %4134 = vmatprep.mubr.f32.mxu0 0.0
        %4135 = vmatmul.mubr.f32.gmra.mrb[0].mxu0 %v3105
        %v4136 = vpop.f32.mrb[0].mxu0
        %v4137 = vadd.f32 %v3914, %v4136
        %v4138 = vpop.f32.mrb[0].mxu0
        %4139 = vmatprep.mubr.f32.mxu0 0.0
        %4140 = vmatmul.mubr.f32.gmra.mrb[0].mxu0 %v3106
        %v4141 = vpop.f32.mrb[0].mxu0
        %v4142 = vadd.f32 %v3919, %v4141
        %v4143 = vpop.f32.mrb[0].mxu0
        %4144 = vdwg.mxu0
        %4145 = vmatprep.subr.mxu0 0.0
        %4146 = vmatpush1.msra.mxu0 %v3602
        %4147 = vmatprep.subr.mxu0 0.0
        %4148 = vmatpush1.msra.mxu0 %v3603
        %4149 = vmatprep.subr.mxu0 0.0
        %4150 = vmatpush1.msra.mxu0 %v3604
        %4151 = vmatprep.subr.mxu0 0.0
        %4152 = vmatpush1.msra.mxu0 %v3605
        %4153 = vmatprep.subr.mxu0 0.0
        %4154 = vmatpush1.msra.mxu0 %v3606
        %4155 = vmatprep.subr.mxu0 0.0
        %4156 = vmatpush1.msra.mxu0 %v3607
        %4157 = vmatprep.subr.mxu0 0.0
        %4158 = vmatpush1.msra.mxu0 %v3608
        %4159 = vmatprep.subr.mxu0 0.0
        %4160 = vmatpush1.msra.mxu0 %v3609
        %4161 = vmatprep.subr.mxu0 0.0
        %4162 = vmatpush1.msra.mxu0 %v3610
        %4163 = vmatprep.subr.mxu0 0.0
        %4164 = vmatpush1.msra.mxu0 %v3611
        %4165 = vmatprep.subr.mxu0 0.0
        %4166 = vmatpush1.msra.mxu0 %v3612
        %4167 = vmatprep.subr.mxu0 0.0
        %4168 = vmatpush1.msra.mxu0 %v3613
        %4169 = vmatprep.subr.mxu0 0.0
        %4170 = vmatpush1.msra.mxu0 %v3614
        %4171 = vmatprep.subr.mxu0 0.0
        %4172 = vmatpush1.msra.mxu0 %v3615
        %4173 = vmatprep.subr.mxu0 0.0
        %4174 = vmatpush1.msra.mxu0 %v3616
        %4175 = vmatprep.subr.mxu0 0.0
        %4176 = vmatpush1.msra.mxu0 %v3617
        %4177 = vmatprep.subr.mxu0 0.0
        %4178 = vmatpush1.msra.mxu0 %v3618
        %4179 = vmatprep.subr.mxu0 0.0
        %4180 = vmatpush1.msra.mxu0 %v3619
        %4181 = vmatprep.subr.mxu0 0.0
        %4182 = vmatpush1.msra.mxu0 %v3620
        %4183 = vmatprep.subr.mxu0 0.0
        %4184 = vmatpush1.msra.mxu0 %v3621
        %4185 = vmatprep.subr.mxu0 0.0
        %4186 = vmatpush1.msra.mxu0 %v3622
        %4187 = vmatprep.subr.mxu0 0.0
        %4188 = vmatpush1.msra.mxu0 %v3623
        %4189 = vmatprep.subr.mxu0 0.0
        %4190 = vmatpush1.msra.mxu0 %v3624
        %4191 = vmatprep.subr.mxu0 0.0
        %4192 = vmatpush1.msra.mxu0 %v3625
        %4193 = vmatprep.subr.mxu0 0.0
        %4194 = vmatpush1.msra.mxu0 %v3626
        %4195 = vmatprep.subr.mxu0 0.0
        %4196 = vmatpush1.msra.mxu0 %v3627
        %4197 = vmatprep.subr.mxu0 0.0
        %4198 = vmatpush1.msra.mxu0 %v3628
        %4199 = vmatprep.subr.mxu0 0.0
        %4200 = vmatpush1.msra.mxu0 %v3629
        %4201 = vmatprep.subr.mxu0 0.0
        %4202 = vmatpush1.msra.mxu0 %v3630
        %4203 = vmatprep.subr.mxu0 0.0
        %4204 = vmatpush1.msra.mxu0 %v3631
        %4205 = vmatprep.subr.mxu0 0.0
        %4206 = vmatpush1.msra.mxu0 %v3632
        %4207 = vmatprep.subr.mxu0 0.0
        %4208 = vmatpush1.msra.mxu0 %v3633
        %4209 = vmatprep.mubr.f32.mxu0 %v2787
        %4210 = vmatmul.mubr.f32.gmra.mrb[0].mxu0 %v3043
        %v4211 = vpop.f32.mrb[0].mxu0
        %v4212 = vadd.f32 0.0, %v4211
        %v4213 = vpop.f32.mrb[0].mxu0
        %4214 = vmatprep.mubr.f32.mxu0 %v2788
        %4215 = vmatmul.mubr.f32.gmra.mrb[0].mxu0 %v3044
        %v4216 = vpop.f32.mrb[0].mxu0
        %v4217 = vadd.f32 0.0, %v4216
        %v4218 = vpop.f32.mrb[0].mxu0
        %4219 = vmatprep.mubr.f32.mxu0 %v2789
        %4220 = vmatmul.mubr.f32.gmra.mrb[0].mxu0 %v3045
        %v4221 = vpop.f32.mrb[0].mxu0
        %v4222 = vadd.f32 %v3445, %v4221
        %v4223 = vpop.f32.mrb[0].mxu0
        %4224 = vmatprep.mubr.f32.mxu0 %v2790
        %4225 = vmatmul.mubr.f32.gmra.mrb[0].mxu0 %v3046
        %v4226 = vpop.f32.mrb[0].mxu0
        %v4227 = vadd.f32 %v3450, %v4226
        %v4228 = vpop.f32.mrb[0].mxu0
        %4229 = vmatprep.mubr.f32.mxu0 %v2791
        %4230 = vmatmul.mubr.f32.gmra.mrb[0].mxu0 %v3047
        %v4231 = vpop.f32.mrb[0].mxu0
        %v4232 = vadd.f32 %v3455, %v4231
        %v4233 = vpop.f32.mrb[0].mxu0
        %4234 = vmatprep.mubr.f32.mxu0 %v2792
        %4235 = vmatmul.mubr.f32.gmra.mrb[0].mxu0 %v3048
        %v4236 = vpop.f32.mrb[0].mxu0
        %v4237 = vadd.f32 %v3460, %v4236
        %v4238 = vpop.f32.mrb[0].mxu0
        %4239 = vmatprep.mubr.f32.mxu0 %v2793
        %4240 = vmatmul.mubr.f32.gmra.mrb[0].mxu0 %v3049
        %v4241 = vpop.f32.mrb[0].mxu0
        %v4242 = vadd.f32 %v3465, %v4241
        %v4243 = vpop.f32.mrb[0].mxu0
        %4244 = vmatprep.mubr.f32.mxu0 %v2794
        %4245 = vmatmul.mubr.f32.gmra.mrb[0].mxu0 %v3050
        %v4246 = vpop.f32.mrb[0].mxu0
        %v4247 = vadd.f32 %v3470, %v4246
        %v4248 = vpop.f32.mrb[0].mxu0
        %4249 = vmatprep.mubr.f32.mxu0 %v2795
        %4250 = vmatmul.mubr.f32.gmra.mrb[0].mxu0 %v3051
        %v4251 = vpop.f32.mrb[0].mxu0
        %v4252 = vadd.f32 %v3475, %v4251
        %v4253 = vpop.f32.mrb[0].mxu0
        %4254 = vmatprep.mubr.f32.mxu0 %v2796
        %4255 = vmatmul.mubr.f32.gmra.mrb[0].mxu0 %v3052
        %v4256 = vpop.f32.mrb[0].mxu0
        %v4257 = vadd.f32 %v3480, %v4256
        %v4258 = vpop.f32.mrb[0].mxu0
        %4259 = vmatprep.mubr.f32.mxu0 %v2797
        %4260 = vmatmul.mubr.f32.gmra.mrb[0].mxu0 %v3053
        %v4261 = vpop.f32.mrb[0].mxu0
        %v4262 = vadd.f32 %v3485, %v4261
        %v4263 = vpop.f32.mrb[0].mxu0
        %4264 = vmatprep.mubr.f32.mxu0 %v2798
        %4265 = vmatmul.mubr.f32.gmra.mrb[0].mxu0 %v3054
        %v4266 = vpop.f32.mrb[0].mxu0
        %v4267 = vadd.f32 %v3490, %v4266
        %v4268 = vpop.f32.mrb[0].mxu0
        %4269 = vmatprep.mubr.f32.mxu0 %v2799
        %4270 = vmatmul.mubr.f32.gmra.mrb[0].mxu0 %v3055
        %v4271 = vpop.f32.mrb[0].mxu0
        %v4272 = vadd.f32 %v3495, %v4271
        %v4273 = vpop.f32.mrb[0].mxu0
        %4274 = vmatprep.mubr.f32.mxu0 %v2800
        %4275 = vmatmul.mubr.f32.gmra.mrb[0].mxu0 %v3056
        %v4276 = vpop.f32.mrb[0].mxu0
        %v4277 = vadd.f32 %v3500, %v4276
        %v4278 = vpop.f32.mrb[0].mxu0
        %4279 = vmatprep.mubr.f32.mxu0 %v2801
        %4280 = vmatmul.mubr.f32.gmra.mrb[0].mxu0 %v3057
        %v4281 = vpop.f32.mrb[0].mxu0
        %v4282 = vadd.f32 %v3505, %v4281
        %v4283 = vpop.f32.mrb[0].mxu0
        %4284 = vmatprep.mubr.f32.mxu0 %v2802
        %4285 = vmatmul.mubr.f32.gmra.mrb[0].mxu0 %v3058
        %v4286 = vpop.f32.mrb[0].mxu0
        %v4287 = vadd.f32 %v3510, %v4286
        %v4288 = vpop.f32.mrb[0].mxu0
        %4289 = vmatprep.mubr.f32.mxu0 %v2803
        %4290 = vmatmul.mubr.f32.gmra.mrb[0].mxu0 %v3059
        %v4291 = vpop.f32.mrb[0].mxu0
        %v4292 = vadd.f32 %v3515, %v4291
        %v4293 = vpop.f32.mrb[0].mxu0
        %4294 = vmatprep.mubr.f32.mxu0 %v2804
        %4295 = vmatmul.mubr.f32.gmra.mrb[0].mxu0 %v3060
        %v4296 = vpop.f32.mrb[0].mxu0
        %v4297 = vadd.f32 %v3520, %v4296
        %v4298 = vpop.f32.mrb[0].mxu0
        %4299 = vmatprep.mubr.f32.mxu0 %v2805
        %4300 = vmatmul.mubr.f32.gmra.mrb[0].mxu0 %v3061
        %v4301 = vpop.f32.mrb[0].mxu0
        %v4302 = vadd.f32 %v3525, %v4301
        %v4303 = vpop.f32.mrb[0].mxu0
        %4304 = vmatprep.mubr.f32.mxu0 %v2806
        %4305 = vmatmul.mubr.f32.gmra.mrb[0].mxu0 %v3062
        %v4306 = vpop.f32.mrb[0].mxu0
        %v4307 = vadd.f32 %v3530, %v4306
        %v4308 = vpop.f32.mrb[0].mxu0
        %4309 = vmatprep.mubr.f32.mxu0 %v2807
        %4310 = vmatmul.mubr.f32.gmra.mrb[0].mxu0 %v3063
        %v4311 = vpop.f32.mrb[0].mxu0
        %v4312 = vadd.f32 %v3535, %v4311
        %v4313 = vpop.f32.mrb[0].mxu0
        %4314 = vmatprep.mubr.f32.mxu0 %v2808
        %4315 = vmatmul.mubr.f32.gmra.mrb[0].mxu0 %v3064
        %v4316 = vpop.f32.mrb[0].mxu0
        %v4317 = vadd.f32 %v3540, %v4316
        %v4318 = vpop.f32.mrb[0].mxu0
        %4319 = vmatprep.mubr.f32.mxu0 %v2809
        %4320 = vmatmul.mubr.f32.gmra.mrb[0].mxu0 %v3065
        %v4321 = vpop.f32.mrb[0].mxu0
        %v4322 = vadd.f32 %v3545, %v4321
        %v4323 = vpop.f32.mrb[0].mxu0
        %4324 = vmatprep.mubr.f32.mxu0 %v2810
        %4325 = vmatmul.mubr.f32.gmra.mrb[0].mxu0 %v3066
        %v4326 = vpop.f32.mrb[0].mxu0
        %v4327 = vadd.f32 %v3550, %v4326
        %v4328 = vpop.f32.mrb[0].mxu0
        %4329 = vmatprep.mubr.f32.mxu0 %v2811
        %4330 = vmatmul.mubr.f32.gmra.mrb[0].mxu0 %v3067
        %v4331 = vpop.f32.mrb[0].mxu0
        %v4332 = vadd.f32 %v3555, %v4331
        %v4333 = vpop.f32.mrb[0].mxu0
        %4334 = vmatprep.mubr.f32.mxu0 %v2812
        %4335 = vmatmul.mubr.f32.gmra.mrb[0].mxu0 %v3068
        %v4336 = vpop.f32.mrb[0].mxu0
        %v4337 = vadd.f32 %v3560, %v4336
        %v4338 = vpop.f32.mrb[0].mxu0
        %4339 = vmatprep.mubr.f32.mxu0 %v2813
        %4340 = vmatmul.mubr.f32.gmra.mrb[0].mxu0 %v3069
        %v4341 = vpop.f32.mrb[0].mxu0
        %v4342 = vadd.f32 %v3565, %v4341
        %v4343 = vpop.f32.mrb[0].mxu0
        %4344 = vmatprep.mubr.f32.mxu0 %v2814
        %4345 = vmatmul.mubr.f32.gmra.mrb[0].mxu0 %v3070
        %v4346 = vpop.f32.mrb[0].mxu0
        %v4347 = vadd.f32 %v3570, %v4346
        %v4348 = vpop.f32.mrb[0].mxu0
        %4349 = vmatprep.mubr.f32.mxu0 %v2815
        %4350 = vmatmul.mubr.f32.gmra.mrb[0].mxu0 %v3071
        %v4351 = vpop.f32.mrb[0].mxu0
        %v4352 = vadd.f32 %v3575, %v4351
        %v4353 = vpop.f32.mrb[0].mxu0
        %4354 = vmatprep.mubr.f32.mxu0 %v2816
        %4355 = vmatmul.mubr.f32.gmra.mrb[0].mxu0 %v3072
        %v4356 = vpop.f32.mrb[0].mxu0
        %v4357 = vadd.f32 %v3580, %v4356
        %v4358 = vpop.f32.mrb[0].mxu0
        %4359 = vmatprep.mubr.f32.mxu0 %v2817
        %4360 = vmatmul.mubr.f32.gmra.mrb[0].mxu0 %v3073
        %v4361 = vpop.f32.mrb[0].mxu0
        %v4362 = vadd.f32 %v3585, %v4361
        %v4363 = vpop.f32.mrb[0].mxu0
        %4364 = vmatprep.mubr.f32.mxu0 %v2818
        %4365 = vmatmul.mubr.f32.gmra.mrb[0].mxu0 %v3074
        %v4366 = vpop.f32.mrb[0].mxu0
        %v4367 = vadd.f32 %v3590, %v4366
        %v4368 = vpop.f32.mrb[0].mxu0
        %4369 = vdwg.mxu0
        %4370 = vmatprep.subr.mxu0 0.0
        %4371 = vmatpush1.msra.mxu0 %v3634
        %4372 = vmatprep.subr.mxu0 0.0
        %4373 = vmatpush1.msra.mxu0 %v3635
        %4374 = vmatprep.subr.mxu0 0.0
        %4375 = vmatpush1.msra.mxu0 %v3636
        %4376 = vmatprep.subr.mxu0 0.0
        %4377 = vmatpush1.msra.mxu0 %v3637
        %4378 = vmatprep.subr.mxu0 0.0
        %4379 = vmatpush1.msra.mxu0 %v3638
        %4380 = vmatprep.subr.mxu0 0.0
        %4381 = vmatpush1.msra.mxu0 %v3639
        %4382 = vmatprep.subr.mxu0 0.0
        %4383 = vmatpush1.msra.mxu0 %v3640
        %4384 = vmatprep.subr.mxu0 0.0
        %4385 = vmatpush1.msra.mxu0 %v3641
        %4386 = vmatprep.subr.mxu0 0.0
        %4387 = vmatpush1.msra.mxu0 %v3642
        %4388 = vmatprep.subr.mxu0 0.0
        %4389 = vmatpush1.msra.mxu0 %v3643
        %4390 = vmatprep.subr.mxu0 0.0
        %4391 = vmatpush1.msra.mxu0 %v3644
        %4392 = vmatprep.subr.mxu0 0.0
        %4393 = vmatpush1.msra.mxu0 %v3645
        %4394 = vmatprep.subr.mxu0 0.0
        %4395 = vmatpush1.msra.mxu0 %v3646
        %4396 = vmatprep.subr.mxu0 0.0
        %4397 = vmatpush1.msra.mxu0 %v3647
        %4398 = vmatprep.subr.mxu0 0.0
        %4399 = vmatpush1.msra.mxu0 %v3648
        %4400 = vmatprep.subr.mxu0 0.0
        %4401 = vmatpush1.msra.mxu0 %v3649
        %4402 = vmatprep.subr.mxu0 0.0
        %4403 = vmatpush1.msra.mxu0 0.0
        %4404 = vmatprep.subr.mxu0 0.0
        %4405 = vmatpush1.msra.mxu0 0.0
        %4406 = vmatprep.subr.mxu0 0.0
        %4407 = vmatpush1.msra.mxu0 0.0
        %4408 = vmatprep.subr.mxu0 0.0
        %4409 = vmatpush1.msra.mxu0 0.0
        %4410 = vmatprep.subr.mxu0 0.0
        %4411 = vmatpush1.msra.mxu0 0.0
        %4412 = vmatprep.subr.mxu0 0.0
        %4413 = vmatpush1.msra.mxu0 0.0
        %4414 = vmatprep.subr.mxu0 0.0
        %4415 = vmatpush1.msra.mxu0 0.0
        %4416 = vmatprep.subr.mxu0 0.0
        %4417 = vmatpush1.msra.mxu0 0.0
        %4418 = vmatprep.subr.mxu0 0.0
        %4419 = vmatpush1.msra.mxu0 0.0
        %4420 = vmatprep.subr.mxu0 0.0
        %4421 = vmatpush1.msra.mxu0 0.0
        %4422 = vmatprep.subr.mxu0 0.0
        %4423 = vmatpush1.msra.mxu0 0.0
        %4424 = vmatprep.subr.mxu0 0.0
        %4425 = vmatpush1.msra.mxu0 0.0
        %4426 = vmatprep.subr.mxu0 0.0
        %4427 = vmatpush1.msra.mxu0 0.0
        %4428 = vmatprep.subr.mxu0 0.0
        %4429 = vmatpush1.msra.mxu0 0.0
        %4430 = vmatprep.subr.mxu0 0.0
        %4431 = vmatpush1.msra.mxu0 0.0
        %4432 = vmatprep.subr.mxu0 0.0
        %4433 = vmatpush1.msra.mxu0 0.0
        %4434 = vmatprep.mubr.f32.mxu0 0.0
        %4435 = vmatmul.mubr.f32.gmra.mrb[0].mxu0 %v3075
        %v4436 = vpop.f32.mrb[0].mxu0
        %v4437 = vadd.f32 %v4212, %v4436
        %v4438 = vpop.f32.mrb[0].mxu0
        %4439 = vmatprep.mubr.f32.mxu0 0.0
        %4440 = vmatmul.mubr.f32.gmra.mrb[0].mxu0 %v3076
        %v4441 = vpop.f32.mrb[0].mxu0
        %v4442 = vadd.f32 %v4217, %v4441
        %v4443 = vpop.f32.mrb[0].mxu0
        %4444 = vmatprep.mubr.f32.mxu0 0.0
        %4445 = vmatmul.mubr.f32.gmra.mrb[0].mxu0 %v3077
        %v4446 = vpop.f32.mrb[0].mxu0
        %v4447 = vadd.f32 %v4222, %v4446
        %v4448 = vpop.f32.mrb[0].mxu0
        %4449 = vmatprep.mubr.f32.mxu0 0.0
        %4450 = vmatmul.mubr.f32.gmra.mrb[0].mxu0 %v3078
        %v4451 = vpop.f32.mrb[0].mxu0
        %v4452 = vadd.f32 %v4227, %v4451
        %v4453 = vpop.f32.mrb[0].mxu0
        %4454 = vmatprep.mubr.f32.mxu0 0.0
        %4455 = vmatmul.mubr.f32.gmra.mrb[0].mxu0 %v3079
        %v4456 = vpop.f32.mrb[0].mxu0
        %v4457 = vadd.f32 %v4232, %v4456
        %v4458 = vpop.f32.mrb[0].mxu0
        %4459 = vmatprep.mubr.f32.mxu0 0.0
        %4460 = vmatmul.mubr.f32.gmra.mrb[0].mxu0 %v3080
        %v4461 = vpop.f32.mrb[0].mxu0
        %v4462 = vadd.f32 %v4237, %v4461
        %v4463 = vpop.f32.mrb[0].mxu0
        %4464 = vmatprep.mubr.f32.mxu0 0.0
        %4465 = vmatmul.mubr.f32.gmra.mrb[0].mxu0 %v3081
        %v4466 = vpop.f32.mrb[0].mxu0
        %v4467 = vadd.f32 %v4242, %v4466
        %v4468 = vpop.f32.mrb[0].mxu0
        %4469 = vmatprep.mubr.f32.mxu0 0.0
        %4470 = vmatmul.mubr.f32.gmra.mrb[0].mxu0 %v3082
        %v4471 = vpop.f32.mrb[0].mxu0
        %v4472 = vadd.f32 %v4247, %v4471
        %v4473 = vpop.f32.mrb[0].mxu0
        %4474 = vmatprep.mubr.f32.mxu0 0.0
        %4475 = vmatmul.mubr.f32.gmra.mrb[0].mxu0 %v3083
        %v4476 = vpop.f32.mrb[0].mxu0
        %v4477 = vadd.f32 %v4252, %v4476
        %v4478 = vpop.f32.mrb[0].mxu0
        %4479 = vmatprep.mubr.f32.mxu0 0.0
        %4480 = vmatmul.mubr.f32.gmra.mrb[0].mxu0 %v3084
        %v4481 = vpop.f32.mrb[0].mxu0
        %v4482 = vadd.f32 %v4257, %v4481
        %v4483 = vpop.f32.mrb[0].mxu0
        %4484 = vmatprep.mubr.f32.mxu0 0.0
        %4485 = vmatmul.mubr.f32.gmra.mrb[0].mxu0 %v3085
        %v4486 = vpop.f32.mrb[0].mxu0
        %v4487 = vadd.f32 %v4262, %v4486
        %v4488 = vpop.f32.mrb[0].mxu0
        %4489 = vmatprep.mubr.f32.mxu0 0.0
        %4490 = vmatmul.mubr.f32.gmra.mrb[0].mxu0 %v3086
        %v4491 = vpop.f32.mrb[0].mxu0
        %v4492 = vadd.f32 %v4267, %v4491
        %v4493 = vpop.f32.mrb[0].mxu0
        %4494 = vmatprep.mubr.f32.mxu0 0.0
        %4495 = vmatmul.mubr.f32.gmra.mrb[0].mxu0 %v3087
        %v4496 = vpop.f32.mrb[0].mxu0
        %v4497 = vadd.f32 %v4272, %v4496
        %v4498 = vpop.f32.mrb[0].mxu0
        %4499 = vmatprep.mubr.f32.mxu0 0.0
        %4500 = vmatmul.mubr.f32.gmra.mrb[0].mxu0 %v3088
        %v4501 = vpop.f32.mrb[0].mxu0
        %v4502 = vadd.f32 %v4277, %v4501
        %v4503 = vpop.f32.mrb[0].mxu0
        %4504 = vmatprep.mubr.f32.mxu0 0.0
        %4505 = vmatmul.mubr.f32.gmra.mrb[0].mxu0 %v3089
        %v4506 = vpop.f32.mrb[0].mxu0
        %v4507 = vadd.f32 %v4282, %v4506
        %v4508 = vpop.f32.mrb[0].mxu0
        %4509 = vmatprep.mubr.f32.mxu0 0.0
        %4510 = vmatmul.mubr.f32.gmra.mrb[0].mxu0 %v3090
        %v4511 = vpop.f32.mrb[0].mxu0
        %v4512 = vadd.f32 %v4287, %v4511
        %v4513 = vpop.f32.mrb[0].mxu0
        %4514 = vmatprep.mubr.f32.mxu0 0.0
        %4515 = vmatmul.mubr.f32.gmra.mrb[0].mxu0 %v3091
        %v4516 = vpop.f32.mrb[0].mxu0
        %v4517 = vadd.f32 %v4292, %v4516
        %v4518 = vpop.f32.mrb[0].mxu0
        %4519 = vmatprep.mubr.f32.mxu0 0.0
        %4520 = vmatmul.mubr.f32.gmra.mrb[0].mxu0 %v3092
        %v4521 = vpop.f32.mrb[0].mxu0
        %v4522 = vadd.f32 %v4297, %v4521
        %v4523 = vpop.f32.mrb[0].mxu0
        %4524 = vmatprep.mubr.f32.mxu0 0.0
        %4525 = vmatmul.mubr.f32.gmra.mrb[0].mxu0 %v3093
        %v4526 = vpop.f32.mrb[0].mxu0
        %v4527 = vadd.f32 %v4302, %v4526
        %v4528 = vpop.f32.mrb[0].mxu0
        %4529 = vmatprep.mubr.f32.mxu0 0.0
        %4530 = vmatmul.mubr.f32.gmra.mrb[0].mxu0 %v3094
        %v4531 = vpop.f32.mrb[0].mxu0
        %v4532 = vadd.f32 %v4307, %v4531
        %v4533 = vpop.f32.mrb[0].mxu0
        %4534 = vmatprep.mubr.f32.mxu0 0.0
        %4535 = vmatmul.mubr.f32.gmra.mrb[0].mxu0 %v3095
        %v4536 = vpop.f32.mrb[0].mxu0
        %v4537 = vadd.f32 %v4312, %v4536
        %v4538 = vpop.f32.mrb[0].mxu0
        %4539 = vmatprep.mubr.f32.mxu0 0.0
        %4540 = vmatmul.mubr.f32.gmra.mrb[0].mxu0 %v3096
        %v4541 = vpop.f32.mrb[0].mxu0
        %v4542 = vadd.f32 %v4317, %v4541
        %v4543 = vpop.f32.mrb[0].mxu0
        %4544 = vmatprep.mubr.f32.mxu0 0.0
        %4545 = vmatmul.mubr.f32.gmra.mrb[0].mxu0 %v3097
        %v4546 = vpop.f32.mrb[0].mxu0
        %v4547 = vadd.f32 %v4322, %v4546
        %v4548 = vpop.f32.mrb[0].mxu0
        %4549 = vmatprep.mubr.f32.mxu0 0.0
        %4550 = vmatmul.mubr.f32.gmra.mrb[0].mxu0 %v3098
        %v4551 = vpop.f32.mrb[0].mxu0
        %v4552 = vadd.f32 %v4327, %v4551
        %v4553 = vpop.f32.mrb[0].mxu0
        %4554 = vmatprep.mubr.f32.mxu0 0.0
        %4555 = vmatmul.mubr.f32.gmra.mrb[0].mxu0 %v3099
        %v4556 = vpop.f32.mrb[0].mxu0
        %v4557 = vadd.f32 %v4332, %v4556
        %v4558 = vpop.f32.mrb[0].mxu0
        %4559 = vmatprep.mubr.f32.mxu0 0.0
        %4560 = vmatmul.mubr.f32.gmra.mrb[0].mxu0 %v3100
        %v4561 = vpop.f32.mrb[0].mxu0
        %v4562 = vadd.f32 %v4337, %v4561
        %v4563 = vpop.f32.mrb[0].mxu0
        %4564 = vmatprep.mubr.f32.mxu0 0.0
        %4565 = vmatmul.mubr.f32.gmra.mrb[0].mxu0 %v3101
        %v4566 = vpop.f32.mrb[0].mxu0
        %v4567 = vadd.f32 %v4342, %v4566
        %v4568 = vpop.f32.mrb[0].mxu0
        %4569 = vmatprep.mubr.f32.mxu0 0.0
        %4570 = vmatmul.mubr.f32.gmra.mrb[0].mxu0 %v3102
        %v4571 = vpop.f32.mrb[0].mxu0
        %v4572 = vadd.f32 %v4347, %v4571
        %v4573 = vpop.f32.mrb[0].mxu0
        %4574 = vmatprep.mubr.f32.mxu0 0.0
        %4575 = vmatmul.mubr.f32.gmra.mrb[0].mxu0 %v3103
        %v4576 = vpop.f32.mrb[0].mxu0
        %v4577 = vadd.f32 %v4352, %v4576
        %v4578 = vpop.f32.mrb[0].mxu0
        %4579 = vmatprep.mubr.f32.mxu0 0.0
        %4580 = vmatmul.mubr.f32.gmra.mrb[0].mxu0 %v3104
        %v4581 = vpop.f32.mrb[0].mxu0
        %v4582 = vadd.f32 %v4357, %v4581
        %v4583 = vpop.f32.mrb[0].mxu0
        %4584 = vmatprep.mubr.f32.mxu0 0.0
        %4585 = vmatmul.mubr.f32.gmra.mrb[0].mxu0 %v3105
        %v4586 = vpop.f32.mrb[0].mxu0
        %v4587 = vadd.f32 %v4362, %v4586
        %v4588 = vpop.f32.mrb[0].mxu0
        %4589 = vmatprep.mubr.f32.mxu0 0.0
        %4590 = vmatmul.mubr.f32.gmra.mrb[0].mxu0 %v3106
        %v4591 = vpop.f32.mrb[0].mxu0
        %v4592 = vadd.f32 %v4367, %v4591
        %v4593 = vpop.f32.mrb[0].mxu0
        %4594 = vdwg.mxu0
        %v4595 = vadd.f32 %v4437, %v3997
        %v4596 = vadd.f32 %v4442, %v4002
        %v4597 = vadd.f32 %v4447, %v4007
        %v4598 = vadd.f32 %v4452, %v4012
        %v4599 = vadd.f32 %v4457, %v4017
        %v4600 = vadd.f32 %v4462, %v4022
        %v4601 = vadd.f32 %v4467, %v4027
        %v4602 = vadd.f32 %v4472, %v4032
        %v4603 = vadd.f32 %v4477, %v4037
        %v4604 = vadd.f32 %v4482, %v4042
        %v4605 = vadd.f32 %v4487, %v4047
        %v4606 = vadd.f32 %v4492, %v4052
        %v4607 = vadd.f32 %v4497, %v4057
        %v4608 = vadd.f32 %v4502, %v4062
        %v4609 = vadd.f32 %v4507, %v4067
        %v4610 = vadd.f32 %v4512, %v4072
        %v4611 = vadd.f32 %v4517, %v4077
        %v4612 = vadd.f32 %v4522, %v4082
        %v4613 = vadd.f32 %v4527, %v4087
        %v4614 = vadd.f32 %v4532, %v4092
        %v4615 = vadd.f32 %v4537, %v4097
        %v4616 = vadd.f32 %v4542, %v4102
        %v4617 = vadd.f32 %v4547, %v4107
        %v4618 = vadd.f32 %v4552, %v4112
        %v4619 = vadd.f32 %v4557, %v4117
        %v4620 = vadd.f32 %v4562, %v4122
        %v4621 = vadd.f32 %v4567, %v4127
        %v4622 = vadd.f32 %v4572, %v4132
        %v4623 = vadd.f32 %v4577, %v4137
        %v4624 = vadd.f32 %v4582, %v4142
        %v4625 = vadd.f32 %v4587, 0.0
        %v4626 = vadd.f32 %v4592, 0.0
        %v4627 = vld [vmem:[#allocation10] sm:$0x1]
        %v4629 = vlaneseq
        %v4630 = vshrl.u32 %v4629, 7
        %v4631 = vsub.s32 0, %v4630
        %v4632 = vrot.slane %v4627, %v4631
        %v4634 = vadd.f32 %v4595, %v4632
        %v4635 = vadd.f32 %v4596, %v4632
        %v4636 = vadd.f32 %v4597, %v4632
        %v4637 = vadd.f32 %v4598, %v4632
        %v4638 = vadd.f32 %v4599, %v4632
        %v4639 = vadd.f32 %v4600, %v4632
        %v4640 = vadd.f32 %v4601, %v4632
        %v4641 = vadd.f32 %v4602, %v4632
        %v4642 = vadd.f32 %v4603, %v4632
        %v4643 = vadd.f32 %v4604, %v4632
        %v4644 = vadd.f32 %v4605, %v4632
        %v4645 = vadd.f32 %v4606, %v4632
        %v4646 = vadd.f32 %v4607, %v4632
        %v4647 = vadd.f32 %v4608, %v4632
        %v4648 = vadd.f32 %v4609, %v4632
        %v4649 = vadd.f32 %v4610, %v4632
        %v4650 = vadd.f32 %v4611, %v4632
        %v4651 = vadd.f32 %v4612, %v4632
        %v4652 = vadd.f32 %v4613, %v4632
        %v4653 = vadd.f32 %v4614, %v4632
        %v4654 = vadd.f32 %v4615, %v4632
        %v4655 = vadd.f32 %v4616, %v4632
        %v4656 = vadd.f32 %v4617, %v4632
        %v4657 = vadd.f32 %v4618, %v4632
        %v4658 = vadd.f32 %v4619, %v4632
        %v4659 = vadd.f32 %v4620, %v4632
        %v4660 = vadd.f32 %v4621, %v4632
        %v4661 = vadd.f32 %v4622, %v4632
        %v4662 = vadd.f32 %v4623, %v4632
        %v4663 = vadd.f32 %v4624, %v4632
        %v4664 = vadd.f32 %v4625, %v4632
        %v4665 = vadd.f32 %v4626, %v4632
        %v4666 = vadd.f32 %v297, %v4634
        %v4667 = vadd.f32 %v298, %v4635
        %v4668 = vadd.f32 %v299, %v4636
        %v4669 = vadd.f32 %v300, %v4637
        %v4670 = vadd.f32 %v301, %v4638
        %v4671 = vadd.f32 %v302, %v4639
        %v4672 = vadd.f32 %v303, %v4640
        %v4673 = vadd.f32 %v304, %v4641
        %v4674 = vadd.f32 %v305, %v4642
        %v4675 = vadd.f32 %v306, %v4643
        %v4676 = vadd.f32 %v307, %v4644
        %v4677 = vadd.f32 %v308, %v4645
        %v4678 = vadd.f32 %v309, %v4646
        %v4679 = vadd.f32 %v310, %v4647
        %v4680 = vadd.f32 %v311, %v4648
        %v4681 = vadd.f32 %v312, %v4649
        %v4682 = vadd.f32 %v313, %v4650
        %v4683 = vadd.f32 %v314, %v4651
        %v4684 = vadd.f32 %v315, %v4652
        %v4685 = vadd.f32 %v316, %v4653
        %v4686 = vadd.f32 %v317, %v4654
        %v4687 = vadd.f32 %v318, %v4655
        %v4688 = vadd.f32 %v319, %v4656
        %v4689 = vadd.f32 %v320, %v4657
        %v4690 = vadd.f32 %v321, %v4658
        %v4691 = vadd.f32 %v322, %v4659
        %v4692 = vadd.f32 %v323, %v4660
        %v4693 = vadd.f32 %v324, %v4661
        %v4694 = vadd.f32 %v325, %v4662
        %v4695 = vadd.f32 %v326, %v4663
        %v4696 = vadd.f32 %v327, %v4664
        %v4697 = vadd.f32 %v328, %v4665
        %4698 = vst [vmem:[%s296] sm:$0xff] %v4666
        %4699 = vst [vmem:[%s296 + $0x8] sm:$0xff] %v4667
        %4700 = vst [vmem:[%s296 + $0x10] sm:$0xff] %v4668
        %4701 = vst [vmem:[%s296 + $0x18] sm:$0xff] %v4669
        %4702 = vst [vmem:[%s296 + $0x20] sm:$0xff] %v4670
        %4703 = vst [vmem:[%s296 + $0x28] sm:$0xff] %v4671
        %4704 = vst [vmem:[%s296 + $0x30] sm:$0xff] %v4672
        %4705 = vst [vmem:[%s296 + $0x38] sm:$0xff] %v4673
        %4706 = vst [vmem:[%s296 + $0x40] sm:$0xff] %v4674
        %4707 = vst [vmem:[%s296 + $0x48] sm:$0xff] %v4675
        %4708 = vst [vmem:[%s296 + $0x50] sm:$0xff] %v4676
        %4709 = vst [vmem:[%s296 + $0x58] sm:$0xff] %v4677
        %4710 = vst [vmem:[%s296 + $0x60] sm:$0xff] %v4678
        %4711 = vst [vmem:[%s296 + $0x68] sm:$0xff] %v4679
        %4712 = vst [vmem:[%s296 + $0x70] sm:$0xff] %v4680
        %4713 = vst [vmem:[%s296 + $0x78] sm:$0xff] %v4681
        %4714 = vst [vmem:[%s296 + $0x80] sm:$0xff] %v4682
        %4715 = vst [vmem:[%s296 + $0x88] sm:$0xff] %v4683
        %4716 = vst [vmem:[%s296 + $0x90] sm:$0xff] %v4684
        %4717 = vst [vmem:[%s296 + $0x98] sm:$0xff] %v4685
        %4718 = vst [vmem:[%s296 + $0xa0] sm:$0xff] %v4686
        %4719 = vst [vmem:[%s296 + $0xa8] sm:$0xff] %v4687
        %4720 = vst [vmem:[%s296 + $0xb0] sm:$0xff] %v4688
        %4721 = vst [vmem:[%s296 + $0xb8] sm:$0xff] %v4689
        %4722 = vst [vmem:[%s296 + $0xc0] sm:$0xff] %v4690
        %4723 = vst [vmem:[%s296 + $0xc8] sm:$0xff] %v4691
        %4724 = vst [vmem:[%s296 + $0xd0] sm:$0xff] %v4692
        %4725 = vst [vmem:[%s296 + $0xd8] sm:$0xff] %v4693
        %4726 = vst [vmem:[%s296 + $0xe0] sm:$0xff] %v4694
        %4727 = vst [vmem:[%s296 + $0xe8] sm:$0xff] %v4695
        %4728 = vst [vmem:[%s296 + $0xf0] sm:$0xff] %v4696
        %4729 = vst [vmem:[%s296 + $0xf8] sm:$0xff] %v4697
        %s4730 = sand.u32 %s142, 1
        %s4731 = scalar_lea.sflag [#allocation4], %s4730
        %s4732 = sand.u32 %s142, 1
        %s4733 = smul.addr %s4732, 256
        %s4734 = scalar_lea.vmem [#allocation11], %s4733
        // Predicated region
        $region61: #{tpu_custom_call.1} parent=39 // pred_check
          %p4735 = pneg %p152
        $region62: #{tpu_custom_call.1} parent=39 // pred_check_branch
          %4737 = sbr.rel (%p4735) target = $region64
        $region63: #{tpu_custom_call.1} parent=39 // pred_region
          %s4739 = ssub.s32 4096, 4096
          %4740 = vsyncadd %s4731, %s4739
          %s4741 = smul.addr %s24, 32
          %s4742 = smul.addr %s4741, 128
          %s4743 = scalar_lea.hbm %s5, %s4742
          %s4744 = sshll.u32 %s4734, 4
          %s4745 = int_to_ptr.vmem [resolvable:$true] %s4744
          %4750 = dma.vmem_to_hbm [thread:$0]  %s4745, 4096, %s4743, %s4731, 128, 128, 8
        $region64: #{tpu_custom_call.1} parent=39 // pred_fallthru
          _
      $region40: #{tpu_custom_call.1} parent=5 // pred_fallthru
        _
      %p4751 = scmp.le.s32.totalorder 2, %s19
      // Predicated region
      $region65: #{tpu_custom_call.1} parent=5 // pred_check
        %p4752 = pneg %p4751
      $region66: #{tpu_custom_call.1} parent=5 // pred_check_branch
        %4754 = sbr.rel (%p4752) target = $region68
      $region67: #{tpu_custom_call.1} parent=5 // pred_region
        %s4755 = ssub.s32 %s19, 2
        // Predicated region
        $region69: #{tpu_custom_call.1} parent=67 // pred_check
          %p4756 = pneg %p158
        $region70: #{tpu_custom_call.1} parent=67 // pred_check_branch
          %4758 = sbr.rel (%p4756) target = $region72
        $region71: #{tpu_custom_call.1} parent=67 // pred_region
          %s4759 = sand.u32 %s143, 1
          %s4760 = scalar_lea.sflag [#allocation4], %s4759
          %s4761 = sand.u32 %s143, 1
          %s4762 = smul.addr %s4761, 256
          %s4763 = scalar_lea.vmem [#allocation11], %s4762
          %4764 = dma.done %s4760, 4096
        $region72: #{tpu_custom_call.1} parent=67 // pred_fallthru
          _
      $region68: #{tpu_custom_call.1} parent=5 // pred_fallthru
        _
    $region6: #{tpu_custom_call.1} parent=1 // loop_footer
      %s23 = sadd.s32 1, %s19
    $region7: #{tpu_custom_call.1} parent=1 // loop_footer_branch
      %18 = sbr.rel target = $region3
    $region8: #{tpu_custom_call.1} parent=1 // loop_exit
      _
    %4765 = vsyncpa [#allocation3], 1
    %s4766 = scalar_lea.sflag [#allocation3], 1
    %4767 = vsyncpa %s4766, 1
    %4768 = vsyncpa [#allocation6], 1
    %4769 = vsyncpa [#allocation9], 1
    %4770 = vsyncpa [#allocation4], 1
    %s4771 = scalar_lea.sflag [#allocation4], 1
    %4772 = vsyncpa %s4771, 1

</llo_original>
